<compile_context>
chip_gen: v6e
topology: v6e:2x2x1
jax: 0.10.0
libtpu: 0.0.40
codegen_flags: <defaults>
</compile_context>

<pallas_src>
import functools

import jax
import jax.numpy as jnp
from jax.experimental import pallas as pl
from jax.experimental.pallas import tpu as pltpu

_BN_EPS = 1e-5
_LANE = 128


# ---------------------------------------------------------------------------
# Helpers
# ---------------------------------------------------------------------------
def _round_up(c, m=_LANE):
    return max(m, ((c + m - 1) // m) * m)


def _pick_tile(m, target=512):
    """Largest row tile <= target that divides m and is sublane aligned."""
    for t in range(min(target, m), 0, -1):
        if m % t == 0 and (t % 8 == 0 or t == m):
            return t
    return m


def _compiler_params(single_buffer_bytes):
    """Generation-aware VMEM limit derived from the actual tile working set."""
    cap = 96 * 1024 * 1024                       # v5e / v6e (128 MiB physical)
    try:
        cap = int(pltpu.get_tpu_info().vmem_capacity_bytes) * 3 // 4   # 48 MiB on v7x
    except Exception:
        pass
    limit = int(min(max(2 * int(single_buffer_bytes) + (16 << 20), 32 << 20), cap))
    return pltpu.CompilerParams(dimension_semantics=("parallel",),
                                vmem_limit_bytes=limit)


def _pad2d(w, rows, cols):
    return jnp.pad(w, ((0, rows - w.shape[0]),
                       (0, cols - w.shape[1]))).astype(jnp.bfloat16)


def _scale_shift(stats, rows_per_tile, gamma, beta, cpad):
    """Pool per-tile (mean, M2) partials into exact BN scale/shift (f32)."""
    g = jnp.pad(gamma.astype(jnp.float32), (0, cpad - gamma.shape[0]))
    b = jnp.pad(beta.astype(jnp.float32), (0, cpad - beta.shape[0]))
    means, m2s = stats[:, 0, :], stats[:, 1, :]
    mean = jnp.mean(means, axis=0)
    ssd = jnp.sum(m2s, axis=0) + rows_per_tile * jnp.sum(
        jnp.square(means - mean), axis=0)
    var = ssd / (rows_per_tile * stats.shape[0])
    scale = g * jax.lax.rsqrt(var + _BN_EPS)
    shift = b - mean * scale
    return scale.reshape(1, cpad), shift.reshape(1, cpad)


# ---------------------------------------------------------------------------
# In-kernel helper: per-tile BN partials (tile mean, sum((x - tile_mean)^2))
# ---------------------------------------------------------------------------
def _write_tile_stats(stats_ref, acc):
    mean = jnp.mean(acc, axis=0, keepdims=True)
    m2 = jnp.sum(jnp.square(acc - mean), axis=0, keepdims=True)
    stats_ref[0, 0:1, :] = mean
    stats_ref[0, 1:2, :] = m2


# ---------------------------------------------------------------------------
# Kernels
# ---------------------------------------------------------------------------
def _conv1_kernel(*refs, hw, has_ds):
    """conv1 (1x1) [+ shortcut 1x1 conv] for one batch element + BN partials."""
    if has_ds:
        x_ref, w1_ref, wsc_ref, o1_ref, s1_ref, osc_ref, ssc_ref = refs
    else:
        x_ref, w1_ref, o1_ref, s1_ref = refs
    x = x_ref[0]                                           # (ss*hw, CP) bf16
    acc1 = jnp.dot(x, w1_ref[...], preferred_element_type=jnp.float32)
    o1_ref[0] = acc1.astype(o1_ref.dtype)
    _write_tile_stats(s1_ref, acc1)
    if has_ds:
        # parity-(0,0) plane == x[:, ::s, ::s, :] -> shares the x read
        accs = jnp.dot(x[0:hw, :], wsc_ref[...],
                       preferred_element_type=jnp.float32)
        osc_ref[0] = accs.astype(osc_ref.dtype)
        _write_tile_stats(ssc_ref, accs)


def _conv2_kernel(h1_ref, sc1_ref, sh1_ref, w2_ref, o2_ref, s2_ref, h1p_ref,
                  *, stride, ho, wo):
    """bn1+relu apply, scatter into zero-halo scratch, 3x3 strided conv."""
    s = stride
    hw = ho * wo
    pp = h1p_ref.shape[-1]
    sc1 = sc1_ref[...]
    sh1 = sh1_ref[...]

    # bn1 + relu applied per parity plane, scattered into the padded,
    # stride-deinterleaved VMEM scratch.  Only the unwritten halo rows/cols
    # are zeroed (no full-scratch memset).
    for py in range(s):
        for px in range(s):
            src = py * s + px
            dst = ((py + 1) % s) * s + ((px + 1) % s)
            ry, rx = (py + 1) // s, (px + 1) // s
            v = h1_ref[0, src * hw:(src + 1) * hw, :].astype(jnp.float32)
            v = jnp.maximum(v * sc1 + sh1, 0.0).astype(h1p_ref.dtype)
            h1p_ref[dst:dst + 1, ry:ry + ho, rx:rx + wo, :] = (
                v.reshape(1, ho, wo, pp))
            if ry > 0:
                h1p_ref[dst:dst + 1, 0:ry, :, :] = jnp.zeros(
                    (1, ry, wo + 2, pp), h1p_ref.dtype)
            if ry < 2:
                h1p_ref[dst:dst + 1, ry + ho:ho + 2, :, :] = jnp.zeros(
                    (1, 2 - ry, wo + 2, pp), h1p_ref.dtype)
            if rx > 0:
                h1p_ref[dst:dst + 1, :, 0:rx, :] = jnp.zeros(
                    (1, ho + 2, rx, pp), h1p_ref.dtype)
            if rx < 2:
                h1p_ref[dst:dst + 1, :, rx + wo:wo + 2, :] = jnp.zeros(
                    (1, ho + 2, 2 - rx, pp), h1p_ref.dtype)
    # TODO(synk): the +/-1 column offsets are sublane-unaligned; a
    #             pltpu.roll-based dx shift (XLU) would avoid the masked
    #             stores/loads this causes on v5e/v6e.

    # conv2 (3x3, stride, pad=1): one MXU matmul per dy with the three dx
    # taps concatenated along the contraction dim (K = 3*PP): 3 matmuls and
    # 2 accumulator adds instead of 9 + 8.
    acc2 = None
    for dy in range(3):
        taps = []
        for dx in range(3):
            plane = (dy % s) * s + (dx % s)
            t = h1p_ref[plane:plane + 1,
                        dy // s:dy // s + ho,
                        dx // s:dx // s + wo, :]
            taps.append(t.reshape(hw, pp))
        cat = jnp.concatenate(taps, axis=-1)               # (hw, 3*PP) bf16
        d = jnp.dot(cat, w2_ref[dy], preferred_element_type=jnp.float32)
        acc2 = d if acc2 is None else acc2 + d
    o2_ref[0] = acc2.astype(o2_ref.dtype)
    _write_tile_stats(s2_ref, acc2)


def _conv3_kernel(h2_ref, sc2_ref, sh2_ref, w3_ref, o3_ref, s3_ref):
    """bn2+relu apply, conv3 (1x1), BN3 partial stats (row-tiled)."""
    a2 = jnp.maximum(
        h2_ref[...].astype(jnp.float32) * sc2_ref[...] + sh2_ref[...], 0.0)
    acc3 = jnp.dot(a2.astype(jnp.bfloat16), w3_ref[...],
                   preferred_element_type=jnp.float32)
    o3_ref[...] = acc3.astype(o3_ref.dtype)
    _write_tile_stats(s3_ref, acc3)


def _finalize_kernel(h3_ref, res_ref, sc3_ref, sh3_ref, o_ref):
    """Identity shortcut: bn3 apply + f32 residual + relu."""
    out = h3_ref[...].astype(jnp.float32) * sc3_ref[...] + sh3_ref[...]
    o_ref[...] = jnp.maximum(out + res_ref[...], 0.0)


def _finalize_ds_kernel(h3_ref, hsc_ref, sc3_ref, sh3_ref, scs_ref, shs_ref,
                        o_ref):
    """Downsample shortcut: bn3 apply + bnsc apply + residual + relu."""
    out = h3_ref[...].astype(jnp.float32) * sc3_ref[...] + sh3_ref[...]
    res = hsc_ref[...].astype(jnp.float32) * scs_ref[...] + shs_ref[...]
    o_ref[...] = jnp.maximum(out + res, 0.0)


# ---------------------------------------------------------------------------
# Wrapper
# ---------------------------------------------------------------------------
def bottleneck_forward(x_nchw, params, stride):
    expansion = 4
    s = int(stride)
    N, Cin, H, W = x_nchw.shape
    planes = params["w1"].shape[0]
    C4 = expansion * planes
    assert H % s == 0 and W % s == 0, "spatial dims must be divisible by stride"
    Ho, Wo = H // s, W // s
    hw, ss = Ho * Wo, s * s
    M1, M2 = N * ss * hw, N * hw
    has_ds = (s != 1) or (Cin != C4)
    CP, PP, C4P = _round_up(Cin), _round_up(planes), _round_up(C4)

    # ---- XLA-side layout prep (bf16 FIRST: halves the HBM prep traffic) ----
    # x_de[n, (py*s+px)*hw + h2*Wo + w2, c] = x[n, c, s*h2+py, s*w2+px]
    xb = jnp.transpose(x_nchw.astype(jnp.bfloat16), (0, 2, 3, 1))
    x_de = xb.reshape(N, Ho, s, Wo, s, Cin).transpose(0, 2, 4, 1, 3, 5)
    x_de = jnp.pad(x_de.reshape(N, ss * hw, Cin),
                   ((0, 0), (0, 0), (0, CP - Cin)))

    # ---- weights -> lane-dense bf16 matmul layout (zero pad -> exact) ------
    w1 = _pad2d(params["w1"][:, :, 0, 0].T, CP, PP)                 # (CP, PP)
    w2 = jnp.transpose(params["w2"], (2, 3, 1, 0))                  # (3,3,I,O)
    w2 = jnp.pad(w2, ((0, 0), (0, 0), (0, PP - planes), (0, PP - planes)))
    w2 = w2.reshape(3, 3 * PP, PP).astype(jnp.bfloat16)             # dx-concat K
    w3 = _pad2d(params["w3"][:, :, 0, 0].T, PP, C4P)                # (PP, C4P)

    # ---------------- call A: conv1 (1x1) [+ shortcut conv] + stats ---------
    in_specs_a = [pl.BlockSpec((1, ss * hw, CP), lambda n: (n, 0, 0)),
                  pl.BlockSpec((CP, PP), lambda n: (0, 0))]
    out_shape_a = [jax.ShapeDtypeStruct((N, ss * hw, PP), jnp.bfloat16),
                   jax.ShapeDtypeStruct((N, 2, PP), jnp.float32)]
    out_specs_a = [pl.BlockSpec((1, ss * hw, PP), lambda n: (n, 0, 0)),
                   pl.BlockSpec((1, 2, PP), lambda n: (n, 0, 0))]
    operands_a = [x_de, w1]
    flops_a = 2 * M1 * CP * PP
    bytes_a = 2 * (M1 * CP + M1 * PP + CP * PP)
    blk_a = ss * hw * (2 * CP + 6 * PP) + 2 * CP * PP
    if has_ds:
        wsc = _pad2d(params["wsc"][:, :, 0, 0].T, CP, C4P)
        in_specs_a.append(pl.BlockSpec((CP, C4P), lambda n: (0, 0)))
        operands_a.append(wsc)
        out_shape_a += [jax.ShapeDtypeStruct((N, hw, C4P), jnp.bfloat16),
                        jax.ShapeDtypeStruct((N, 2, C4P), jnp.float32)]
        out_specs_a += [pl.BlockSpec((1, hw, C4P), lambda n: (n, 0, 0)),
                        pl.BlockSpec((1, 2, C4P), lambda n: (n, 0, 0))]
        flops_a += 2 * M2 * CP * C4P
        bytes_a += 2 * (M2 * C4P + CP * C4P)
        blk_a += hw * 6 * C4P + 2 * CP * C4P
    outs_a = pl.pallas_call(
        functools.partial(_conv1_kernel, hw=hw, has_ds=has_ds),
        grid=(N,),
        in_specs=in_specs_a,
        out_specs=tuple(out_specs_a),
        out_shape=tuple(out_shape_a),
        compiler_params=_compiler_params(blk_a),
        cost_estimate=pl.CostEstimate(flops=int(flops_a), transcendentals=0,
                                      bytes_accessed=int(bytes_a)),
    )(*operands_a)
    if has_ds:
        h1_raw, stats1, hsc_raw, statsS = outs_a
        scaleS, shiftS = _scale_shift(statsS, hw, params["gsc"],
                                      params["bsc"], C4P)
    else:
        h1_raw, stats1 = outs_a
    scale1, shift1 = _scale_shift(stats1, ss * hw, params["g1"],
                                  params["b1"], PP)

    # ---------------- call B: bn1+relu, 3x3 strided conv, bn2 stats ---------
    blk_b = (ss * hw * 2 * PP + ss * (Ho + 2) * (Wo + 2) * 2 * PP
             + hw * 18 * PP + 18 * PP * PP)
    h2_raw, stats2 = pl.pallas_call(
        functools.partial(_conv2_kernel, stride=s, ho=Ho, wo=Wo),
        grid=(N,),
        in_specs=[pl.BlockSpec((1, ss * hw, PP), lambda n: (n, 0, 0)),
                  pl.BlockSpec((1, PP), lambda n: (0, 0)),
                  pl.BlockSpec((1, PP), lambda n: (0, 0)),
                  pl.BlockSpec((3, 3 * PP, PP), lambda n: (0, 0, 0))],
        out_specs=(pl.BlockSpec((1, hw, PP), lambda n: (n, 0, 0)),
                   pl.BlockSpec((1, 2, PP), lambda n: (n, 0, 0))),
        out_shape=(jax.ShapeDtypeStruct((N, hw, PP), jnp.bfloat16),
                   jax.ShapeDtypeStruct((N, 2, PP), jnp.float32)),
        scratch_shapes=[pltpu.VMEM((ss, Ho + 2, Wo + 2, PP), jnp.bfloat16)],
        compiler_params=_compiler_params(blk_b),
        cost_estimate=pl.CostEstimate(
            flops=int(2 * M2 * 9 * PP * PP), transcendentals=0,
            bytes_accessed=int(2 * (M1 * PP + M2 * PP + 9 * PP * PP))),
    )(h1_raw, scale1, shift1, w2)
    scale2, shift2 = _scale_shift(stats2, hw, params["g2"], params["b2"], PP)

    # ---------------- call C: bn2+relu, conv3 (1x1), bn3 stats --------------
    TM = _pick_tile(M2)
    G = M2 // TM
    h2_flat = h2_raw.reshape(M2, PP)
    blk_c = TM * (6 * PP + 6 * C4P) + 2 * PP * C4P
    h3_raw, stats3 = pl.pallas_call(
        _conv3_kernel,
        grid=(G,),
        in_specs=[pl.BlockSpec((TM, PP), lambda i: (i, 0)),
                  pl.BlockSpec((1, PP), lambda i: (0, 0)),
                  pl.BlockSpec((1, PP), lambda i: (0, 0)),
                  pl.BlockSpec((PP, C4P), lambda i: (0, 0))],
        out_specs=(pl.BlockSpec((TM, C4P), lambda i: (i, 0)),
                   pl.BlockSpec((1, 2, C4P), lambda i: (i, 0, 0))),
        out_shape=(jax.ShapeDtypeStruct((M2, C4P), jnp.bfloat16),
                   jax.ShapeDtypeStruct((G, 2, C4P), jnp.float32)),
        compiler_params=_compiler_params(blk_c),
        cost_estimate=pl.CostEstimate(flops=int(2 * M2 * PP * C4P),
                                      transcendentals=0,
                                      bytes_accessed=int(2 * M2 * (PP + C4P))),
    )(h2_flat, scale2, shift2, w3)
    scale3, shift3 = _scale_shift(stats3, TM, params["g3"], params["b3"], C4P)

    # ---------------- call D: bn3 (+bnsc) apply, residual add, relu ---------
    if has_ds:
        kernel_d = _finalize_ds_kernel
        operands_d = (h3_raw, hsc_raw.reshape(M2, C4P),
                      scale3, shift3, scaleS, shiftS)
        in_specs_d = [pl.BlockSpec((TM, C4P), lambda i: (i, 0)),
                      pl.BlockSpec((TM, C4P), lambda i: (i, 0)),
                      pl.BlockSpec((1, C4P), lambda i: (0, 0)),
                      pl.BlockSpec((1, C4P), lambda i: (0, 0)),
                      pl.BlockSpec((1, C4P), lambda i: (0, 0)),
                      pl.BlockSpec((1, C4P), lambda i: (0, 0))]
    else:
        # Identity shortcut: residual taken from the ORIGINAL f32 input so the
        # bf16 activation cast does not bias the residual path.
        x_res = jnp.transpose(x_nchw.astype(jnp.float32), (0, 2, 3, 1))
        x_res = x_res[:, ::s, ::s, :].reshape(M2, Cin)
        x_res = jnp.pad(x_res, ((0, 0), (0, C4P - Cin)))
        kernel_d = _finalize_kernel
        operands_d = (h3_raw, x_res, scale3, shift3)
        in_specs_d = [pl.BlockSpec((TM, C4P), lambda i: (i, 0)),
                      pl.BlockSpec((TM, C4P), lambda i: (i, 0)),
                      pl.BlockSpec((1, C4P), lambda i: (0, 0)),
                      pl.BlockSpec((1, C4P), lambda i: (0, 0))]
    out2d = pl.pallas_call(
        kernel_d,
        grid=(G,),
        in_specs=in_specs_d,
        out_specs=pl.BlockSpec((TM, C4P), lambda i: (i, 0)),
        out_shape=jax.ShapeDtypeStruct((M2, C4P), jnp.float32),
        compiler_params=_compiler_params(14 * TM * C4P),
        cost_estimate=pl.CostEstimate(flops=int(6 * M2 * C4P),
                                      transcendentals=0,
                                      bytes_accessed=int(10 * M2 * C4P)),
    )(*operands_d)

    # Padded channels are exactly zero; at production channel counts C4 == C4P
    # and this slice is a no-op.
    out = out2d[:, :C4].reshape(N, Ho, Wo, C4)
    return jnp.transpose(out, (0, 3, 1, 2))                 # NHWC -> NCHW


# ---------------------------------------------------------------------------
# Pure-JAX reference (mirrors the PyTorch forward) for correctness check
# ---------------------------------------------------------------------------
def _ref_conv(x, w, stride=1, padding=0):
    return jax.lax.conv_general_dilated(
        x, w, (stride, stride), [(padding, padding), (padding, padding)],
        dimension_numbers=("NCHW", "OIHW", "NCHW"))


def _ref_bn(x, g, b):
    mean = jnp.mean(x, axis=(0, 2, 3), keepdims=True)
    var = jnp.mean(jnp.square(x - mean), axis=(0, 2, 3), keepdims=True)
    return ((x - mean) * jax.lax.rsqrt(var + _BN_EPS)
            * g.reshape(1, -1, 1, 1) + b.reshape(1, -1, 1, 1))


def bottleneck_reference(x, params, stride):
    out = jax.nn.relu(_ref_bn(_ref_conv(x, params["w1"]), params["g1"], params["b1"]))
    out = jax.nn.relu(_ref_bn(_ref_conv(out, params["w2"], stride, 1),
                              params["g2"], params["b2"]))
    out = _ref_bn(_ref_conv(out, params["w3"]), params["g3"], params["b3"])
    if stride != 1 or x.shape[1] != params["w3"].shape[0]:
        sc = _ref_bn(_ref_conv(x, params["wsc"], stride),
                     params["gsc"], params["bsc"])
    else:
        sc = x
    return jax.nn.relu(out + sc)


# ---------------------------------------------------------------------------
def _make_params(key, in_planes, planes, stride, expansion=4):
    ks = jax.random.split(key, 12)
    p = {
        "w1": 0.1 * jax.random.normal(ks[0], (planes, in_planes, 1, 1), jnp.float32),
        "g1": 1.0 + 0.1 * jax.random.normal(ks[1], (planes,), jnp.float32),
        "b1": 0.1 * jax.random.normal(ks[2], (planes,), jnp.float32),
        "w2": 0.1 * jax.random.normal(ks[3], (planes, planes, 3, 3), jnp.float32),
        "g2": 1.0 + 0.1 * jax.random.normal(ks[4], (planes,), jnp.float32),
        "b2": 0.1 * jax.random.normal(ks[5], (planes,), jnp.float32),
        "w3": 0.1 * jax.random.normal(ks[6], (expansion * planes, planes, 1, 1), jnp.float32),
        "g3": 1.0 + 0.1 * jax.random.normal(ks[7], (expansion * planes,), jnp.float32),
        "b3": 0.1 * jax.random.normal(ks[8], (expansion * planes,), jnp.float32),
    }
    if stride != 1 or in_planes != expansion * planes:
        p["wsc"] = 0.1 * jax.random.normal(ks[9], (expansion * planes, in_planes, 1, 1), jnp.float32)
        p["gsc"] = 1.0 + 0.1 * jax.random.normal(ks[10], (expansion * planes,), jnp.float32)
        p["bsc"] = 0.1 * jax.random.normal(ks[11], (expansion * planes,), jnp.float32)
    return p


if __name__ == "__main__":
    key = jax.random.PRNGKey(0)

    # Case 1: downsampling bottleneck  (in_planes=8, planes=4, stride=2).
    in_planes, planes, stride, expansion = 8, 4, 2, 4
    N, H, W = 2, 16, 16
    params = _make_params(key, in_planes, planes, stride)
    x = jax.random.normal(jax.random.PRNGKey(42), (N, in_planes, H, W), jnp.float32)

    fwd = jax.jit(functools.partial(bottleneck_forward, stride=stride))
    out = jax.block_until_ready(fwd(x, params))
    ref = jax.block_until_ready(bottleneck_reference(x, params, stride))
    assert out.shape == ref.shape == (N, expansion * planes, H // stride, W // stride)
    assert jnp.allclose(out, ref, rtol=5e-2, atol=5e-2), (
        "downsample mismatch, max abs err = %f" % float(jnp.max(jnp.abs(out - ref))))

    # Case 2: identity-shortcut bottleneck  (in_planes=16, planes=4, stride=1).
    in_planes2, planes2, stride2 = 16, 4, 1
    N2, H2, W2 = 2, 8, 8
    params2 = _make_params(jax.random.PRNGKey(1), in_planes2, planes2, stride2)
    x2 = jax.random.normal(jax.random.PRNGKey(43), (N2, in_planes2, H2, W2), jnp.float32)

    fwd2 = jax.jit(functools.partial(bottleneck_forward, stride=stride2))
    out2 = jax.block_until_ready(fwd2(x2, params2))
    ref2 = jax.block_until_ready(bottleneck_reference(x2, params2, stride2))
    assert out2.shape == ref2.shape == (N2, expansion * planes2, H2, W2)
    assert jnp.allclose(out2, ref2, rtol=5e-2, atol=5e-2), (
        "identity mismatch, max abs err = %f" % float(jnp.max(jnp.abs(out2 - ref2))))

    print("KERNEL_OK")
</pallas_src>

<mosaic_0001>
module attributes {stable_mosaic.version = 11 : i64} {
  func.func @_conv1_kernel(%arg0: i32, %arg1: memref<1x256x128xbf16, #tpu.memory_space<vmem>>, %arg2: memref<128x128xbf16, #tpu.memory_space<vmem>>, %arg3: memref<128x128xbf16, #tpu.memory_space<vmem>>, %arg4: memref<1x256x128xbf16, #tpu.memory_space<vmem>>, %arg5: memref<1x2x128xf32, #tpu.memory_space<vmem>>, %arg6: memref<1x64x128xbf16, #tpu.memory_space<vmem>>, %arg7: memref<1x2x128xf32, #tpu.memory_space<vmem>>) attributes {dimension_semantics = [#tpu.dimension_semantics<parallel>], iteration_bounds = array<i64: 2>, scalar_prefetch = 0 : i64, scratch_operands = 0 : i64, tpu.core_type = #tpu.core_type<tc>, window_params = [{transform_indices = @transform_0, window_bounds = array<i64: 1, 256, 128>}, {pipeline_mode = #tpu.pipeline_mode<synchronous>, transform_indices = @transform_1, window_bounds = array<i64: 128, 128>}, {pipeline_mode = #tpu.pipeline_mode<synchronous>, transform_indices = @transform_2, window_bounds = array<i64: 128, 128>}, {transform_indices = @transform_3, window_bounds = array<i64: 1, 256, 128>}, {transform_indices = @transform_4, window_bounds = array<i64: 1, 2, 128>}, {transform_indices = @transform_5, window_bounds = array<i64: 1, 64, 128>}, {transform_indices = @transform_6, window_bounds = array<i64: 1, 2, 128>}]} {
    %c0 = arith.constant 0 : index
    %c0_0 = arith.constant 0 : index
    %c0_1 = arith.constant 0 : index
    %0 = vector.load %arg1[%c0, %c0_0, %c0_1] : memref<1x256x128xbf16, #tpu.memory_space<vmem>>, vector<1x256x128xbf16>
    %1 = vector.shape_cast %0 : vector<1x256x128xbf16> to vector<256x128xbf16>
    %c0_2 = arith.constant 0 : index
    %c0_3 = arith.constant 0 : index
    %2 = vector.load %arg2[%c0_2, %c0_3] : memref<128x128xbf16, #tpu.memory_space<vmem>>, vector<128x128xbf16>
    %cst = arith.constant dense<0.000000e+00> : vector<256x128xf32>
    %3 = tpu.matmul %1, %2, %cst {dimension_numbers = #tpu.dot_dimension_numbers<[1], [0], [0], [1], [0, 0, 1, 1], [], []>} : vector<256x128xbf16>, vector<128x128xbf16>, vector<256x128xf32> -> vector<256x128xf32>
    %4 = arith.truncf %3 : vector<256x128xf32> to vector<256x128xbf16>
    %c0_4 = arith.constant 0 : index
    %c0_5 = arith.constant 0 : index
    %c0_6 = arith.constant 0 : index
    %5 = vector.load %arg4[%c0_4, %c0_5, %c0_6] : memref<1x256x128xbf16, #tpu.memory_space<vmem>>, vector<1x256x128xbf16>
    %6 = vector.shape_cast %5 : vector<1x256x128xbf16> to vector<256x128xbf16>
    %7 = vector.shape_cast %4 : vector<256x128xbf16> to vector<1x256x128xbf16>
    tpu.vector_store %arg4[%c0_4, %c0_5, %c0_6], %7 {strides = array<i32>} : memref<1x256x128xbf16, #tpu.memory_space<vmem>>, vector<1x256x128xbf16>,
    %cst_7 = arith.constant dense<0.000000e+00> : vector<128xf32>
    %8 = vector.multi_reduction <add>, %3, %cst_7 [0] : vector<256x128xf32> to vector<128xf32>
    %9 = vector.shape_cast %8 : vector<128xf32> to vector<1x128xf32>
    %cst_8 = arith.constant 2.560000e+02 : f32
    %10 = vector.broadcast %cst_8 : f32 to vector<1x128xf32>
    %11 = arith.divf %9, %10 : vector<1x128xf32>
    %12 = vector.broadcast %11 : vector<1x128xf32> to vector<256x128xf32>
    %13 = arith.subf %3, %12 : vector<256x128xf32>
    %14 = arith.mulf %13, %13 : vector<256x128xf32>
    %cst_9 = arith.constant dense<0.000000e+00> : vector<128xf32>
    %15 = vector.multi_reduction <add>, %14, %cst_9 [0] : vector<256x128xf32> to vector<128xf32>
    %16 = vector.shape_cast %15 : vector<128xf32> to vector<1x128xf32>
    %c0_10 = arith.constant 0 : index
    %c0_11 = arith.constant 0 : index
    %c0_12 = arith.constant 0 : index
    %17 = vector.load %arg5[%c0_10, %c0_11, %c0_12] : memref<1x2x128xf32, #tpu.memory_space<vmem>>, vector<1x1x128xf32>
    %18 = vector.shape_cast %17 : vector<1x1x128xf32> to vector<1x128xf32>
    %19 = vector.shape_cast %11 : vector<1x128xf32> to vector<1x1x128xf32>
    tpu.vector_store %arg5[%c0_10, %c0_11, %c0_12], %19 {strides = array<i32>} : memref<1x2x128xf32, #tpu.memory_space<vmem>>, vector<1x1x128xf32>,
    %c0_13 = arith.constant 0 : index
    %c1 = arith.constant 1 : index
    %c0_14 = arith.constant 0 : index
    %20 = vector.load %arg5[%c0_13, %c1, %c0_14] : memref<1x2x128xf32, #tpu.memory_space<vmem>>, vector<1x1x128xf32>
    %21 = vector.shape_cast %20 : vector<1x1x128xf32> to vector<1x128xf32>
    %22 = vector.shape_cast %16 : vector<1x128xf32> to vector<1x1x128xf32>
    tpu.vector_store %arg5[%c0_13, %c1, %c0_14], %22 {strides = array<i32>} : memref<1x2x128xf32, #tpu.memory_space<vmem>>, vector<1x1x128xf32>,
    %23 = vector.extract_strided_slice %1 {offsets = [0, 0], sizes = [64, 128], strides = [1, 1]} : vector<256x128xbf16> to vector<64x128xbf16>
    %c0_15 = arith.constant 0 : index
    %c0_16 = arith.constant 0 : index
    %24 = vector.load %arg3[%c0_15, %c0_16] : memref<128x128xbf16, #tpu.memory_space<vmem>>, vector<128x128xbf16>
    %cst_17 = arith.constant dense<0.000000e+00> : vector<64x128xf32>
    %25 = tpu.matmul %23, %24, %cst_17 {dimension_numbers = #tpu.dot_dimension_numbers<[1], [0], [0], [1], [0, 0, 1, 1], [], []>} : vector<64x128xbf16>, vector<128x128xbf16>, vector<64x128xf32> -> vector<64x128xf32>
    %26 = arith.truncf %25 : vector<64x128xf32> to vector<64x128xbf16>
    %c0_18 = arith.constant 0 : index
    %c0_19 = arith.constant 0 : index
    %c0_20 = arith.constant 0 : index
    %27 = vector.load %arg6[%c0_18, %c0_19, %c0_20] : memref<1x64x128xbf16, #tpu.memory_space<vmem>>, vector<1x64x128xbf16>
    %28 = vector.shape_cast %27 : vector<1x64x128xbf16> to vector<64x128xbf16>
    %29 = vector.shape_cast %26 : vector<64x128xbf16> to vector<1x64x128xbf16>
    tpu.vector_store %arg6[%c0_18, %c0_19, %c0_20], %29 {strides = array<i32>} : memref<1x64x128xbf16, #tpu.memory_space<vmem>>, vector<1x64x128xbf16>,
    %cst_21 = arith.constant dense<0.000000e+00> : vector<128xf32>
    %30 = vector.multi_reduction <add>, %25, %cst_21 [0] : vector<64x128xf32> to vector<128xf32>
    %31 = vector.shape_cast %30 : vector<128xf32> to vector<1x128xf32>
    %cst_22 = arith.constant 6.400000e+01 : f32
    %32 = vector.broadcast %cst_22 : f32 to vector<1x128xf32>
    %33 = arith.divf %31, %32 : vector<1x128xf32>
    %34 = vector.broadcast %33 : vector<1x128xf32> to vector<64x128xf32>
    %35 = arith.subf %25, %34 : vector<64x128xf32>
    %36 = arith.mulf %35, %35 : vector<64x128xf32>
    %cst_23 = arith.constant dense<0.000000e+00> : vector<128xf32>
    %37 = vector.multi_reduction <add>, %36, %cst_23 [0] : vector<64x128xf32> to vector<128xf32>
    %38 = vector.shape_cast %37 : vector<128xf32> to vector<1x128xf32>
    %c0_24 = arith.constant 0 : index
    %c0_25 = arith.constant 0 : index
    %c0_26 = arith.constant 0 : index
    %39 = vector.load %arg7[%c0_24, %c0_25, %c0_26] : memref<1x2x128xf32, #tpu.memory_space<vmem>>, vector<1x1x128xf32>
    %40 = vector.shape_cast %39 : vector<1x1x128xf32> to vector<1x128xf32>
    %41 = vector.shape_cast %33 : vector<1x128xf32> to vector<1x1x128xf32>
    tpu.vector_store %arg7[%c0_24, %c0_25, %c0_26], %41 {strides = array<i32>} : memref<1x2x128xf32, #tpu.memory_space<vmem>>, vector<1x1x128xf32>,
    %c0_27 = arith.constant 0 : index
    %c1_28 = arith.constant 1 : index
    %c0_29 = arith.constant 0 : index
    %42 = vector.load %arg7[%c0_27, %c1_28, %c0_29] : memref<1x2x128xf32, #tpu.memory_space<vmem>>, vector<1x1x128xf32>
    %43 = vector.shape_cast %42 : vector<1x1x128xf32> to vector<1x128xf32>
    %44 = vector.shape_cast %38 : vector<1x128xf32> to vector<1x1x128xf32>
    tpu.vector_store %arg7[%c0_27, %c1_28, %c0_29], %44 {strides = array<i32>} : memref<1x2x128xf32, #tpu.memory_space<vmem>>, vector<1x1x128xf32>,
    return
  }
  func.func @transform_0(%arg0: i32) -> (i32, i32, i32) {
    %c0_i32 = arith.constant 0 : i32
    %c0_i32_0 = arith.constant 0 : i32
    %c0_i32_1 = arith.constant 0 : i32
    return %arg0, %c0_i32, %c0_i32_0 : i32, i32, i32
  }
  func.func @transform_1(%arg0: i32) -> (i32, i32) {
    %c0_i32 = arith.constant 0 : i32
    %c0_i32_0 = arith.constant 0 : i32
    %c0_i32_1 = arith.constant 0 : i32
    return %c0_i32, %c0_i32_0 : i32, i32
  }
  func.func @transform_2(%arg0: i32) -> (i32, i32) {
    %c0_i32 = arith.constant 0 : i32
    %c0_i32_0 = arith.constant 0 : i32
    %c0_i32_1 = arith.constant 0 : i32
    return %c0_i32, %c0_i32_0 : i32, i32
  }
  func.func @transform_3(%arg0: i32) -> (i32, i32, i32) {
    %c0_i32 = arith.constant 0 : i32
    %c0_i32_0 = arith.constant 0 : i32
    %c0_i32_1 = arith.constant 0 : i32
    return %arg0, %c0_i32, %c0_i32_0 : i32, i32, i32
  }
  func.func @transform_4(%arg0: i32) -> (i32, i32, i32) {
    %c0_i32 = arith.constant 0 : i32
    %c0_i32_0 = arith.constant 0 : i32
    %c0_i32_1 = arith.constant 0 : i32
    return %arg0, %c0_i32, %c0_i32_0 : i32, i32, i32
  }
  func.func @transform_5(%arg0: i32) -> (i32, i32, i32) {
    %c0_i32 = arith.constant 0 : i32
    %c0_i32_0 = arith.constant 0 : i32
    %c0_i32_1 = arith.constant 0 : i32
    return %arg0, %c0_i32, %c0_i32_0 : i32, i32, i32
  }
  func.func @transform_6(%arg0: i32) -> (i32, i32, i32) {
    %c0_i32 = arith.constant 0 : i32
    %c0_i32_0 = arith.constant 0 : i32
    %c0_i32_1 = arith.constant 0 : i32
    return %arg0, %c0_i32, %c0_i32_0 : i32, i32, i32
  }
}

module attributes {stable_mosaic.version = 11 : i64} {
  func.func @_conv2_kernel(%arg0: i32, %arg1: memref<1x256x128xbf16, #tpu.memory_space<vmem>>, %arg2: memref<1x128xf32, #tpu.memory_space<vmem>>, %arg3: memref<1x128xf32, #tpu.memory_space<vmem>>, %arg4: memref<3x384x128xbf16, #tpu.memory_space<vmem>>, %arg5: memref<1x64x128xbf16, #tpu.memory_space<vmem>>, %arg6: memref<1x2x128xf32, #tpu.memory_space<vmem>>, %arg7: memref<4x10x10x128xbf16, #tpu.memory_space<vmem>>) attributes {dimension_semantics = [#tpu.dimension_semantics<parallel>], iteration_bounds = array<i64: 2>, scalar_prefetch = 0 : i64, scratch_operands = 1 : i64, tpu.core_type = #tpu.core_type<tc>, window_params = [{transform_indices = @transform_0, window_bounds = array<i64: 1, 256, 128>}, {pipeline_mode = #tpu.pipeline_mode<synchronous>, transform_indices = @transform_1, window_bounds = array<i64: 1, 128>}, {pipeline_mode = #tpu.pipeline_mode<synchronous>, transform_indices = @transform_2, window_bounds = array<i64: 1, 128>}, {pipeline_mode = #tpu.pipeline_mode<synchronous>, transform_indices = @transform_3, window_bounds = array<i64: 3, 384, 128>}, {transform_indices = @transform_4, window_bounds = array<i64: 1, 64, 128>}, {transform_indices = @transform_5, window_bounds = array<i64: 1, 2, 128>}]} {
    %c0 = arith.constant 0 : index
    %c0_0 = arith.constant 0 : index
    %0 = vector.load %arg2[%c0, %c0_0] : memref<1x128xf32, #tpu.memory_space<vmem>>, vector<1x128xf32>
    %c0_1 = arith.constant 0 : index
    %c0_2 = arith.constant 0 : index
    %1 = vector.load %arg3[%c0_1, %c0_2] : memref<1x128xf32, #tpu.memory_space<vmem>>, vector<1x128xf32>
    %c0_3 = arith.constant 0 : index
    %c0_4 = arith.constant 0 : index
    %c0_5 = arith.constant 0 : index
    %2 = vector.load %arg1[%c0_3, %c0_4, %c0_5] : memref<1x256x128xbf16, #tpu.memory_space<vmem>>, vector<1x64x128xbf16>
    %3 = vector.shape_cast %2 : vector<1x64x128xbf16> to vector<64x128xbf16>
    %4 = arith.extf %3 : vector<64x128xbf16> to vector<64x128xf32>
    %5 = vector.broadcast %0 : vector<1x128xf32> to vector<64x128xf32>
    %6 = arith.mulf %4, %5 : vector<64x128xf32>
    %7 = vector.broadcast %1 : vector<1x128xf32> to vector<64x128xf32>
    %8 = arith.addf %6, %7 : vector<64x128xf32>
    %cst = arith.constant 0.000000e+00 : f32
    %9 = vector.broadcast %cst : f32 to vector<64x128xf32>
    %10 = arith.maximumf %8, %9 : vector<64x128xf32>
    %11 = arith.truncf %10 : vector<64x128xf32> to vector<64x128xbf16>
    %12 = vector.shape_cast %11 : vector<64x128xbf16> to vector<1x8x8x128xbf16>
    %c3 = arith.constant 3 : index
    %c0_6 = arith.constant 0 : index
    %c0_7 = arith.constant 0 : index
    %c0_8 = arith.constant 0 : index
    %13 = vector.load %arg7[%c3, %c0_6, %c0_7, %c0_8] : memref<4x10x10x128xbf16, #tpu.memory_space<vmem>>, vector<1x8x8x128xbf16>
    tpu.vector_store %arg7[%c3, %c0_6, %c0_7, %c0_8], %12 {strides = array<i32>} : memref<4x10x10x128xbf16, #tpu.memory_space<vmem>>, vector<1x8x8x128xbf16>,
    %cst_9 = arith.constant 0.000000e+00 : bf16
    %14 = vector.broadcast %cst_9 : bf16 to vector<1x2x10x128xbf16>
    %c3_10 = arith.constant 3 : index
    %c8 = arith.constant 8 : index
    %c0_11 = arith.constant 0 : index
    %c0_12 = arith.constant 0 : index
    %15 = vector.load %arg7[%c3_10, %c8, %c0_11, %c0_12] : memref<4x10x10x128xbf16, #tpu.memory_space<vmem>>, vector<1x2x10x128xbf16>
    tpu.vector_store %arg7[%c3_10, %c8, %c0_11, %c0_12], %14 {strides = array<i32>} : memref<4x10x10x128xbf16, #tpu.memory_space<vmem>>, vector<1x2x10x128xbf16>,
    %cst_13 = arith.constant 0.000000e+00 : bf16
    %16 = vector.broadcast %cst_13 : bf16 to vector<1x10x2x128xbf16>
    %c3_14 = arith.constant 3 : index
    %c0_15 = arith.constant 0 : index
    %c8_16 = arith.constant 8 : index
    %c0_17 = arith.constant 0 : index
    %17 = vector.load %arg7[%c3_14, %c0_15, %c8_16, %c0_17] : memref<4x10x10x128xbf16, #tpu.memory_space<vmem>>, vector<1x10x2x128xbf16>
    tpu.vector_store %arg7[%c3_14, %c0_15, %c8_16, %c0_17], %16 {strides = array<i32>} : memref<4x10x10x128xbf16, #tpu.memory_space<vmem>>, vector<1x10x2x128xbf16>,
    %c0_18 = arith.constant 0 : index
    %c64 = arith.constant 64 : index
    %c0_19 = arith.constant 0 : index
    %18 = vector.load %arg1[%c0_18, %c64, %c0_19] : memref<1x256x128xbf16, #tpu.memory_space<vmem>>, vector<1x64x128xbf16>
    %19 = vector.shape_cast %18 : vector<1x64x128xbf16> to vector<64x128xbf16>
    %20 = arith.extf %19 : vector<64x128xbf16> to vector<64x128xf32>
    %21 = vector.broadcast %0 : vector<1x128xf32> to vector<64x128xf32>
    %22 = arith.mulf %20, %21 : vector<64x128xf32>
    %23 = vector.broadcast %1 : vector<1x128xf32> to vector<64x128xf32>
    %24 = arith.addf %22, %23 : vector<64x128xf32>
    %cst_20 = arith.constant 0.000000e+00 : f32
    %25 = vector.broadcast %cst_20 : f32 to vector<64x128xf32>
    %26 = arith.maximumf %24, %25 : vector<64x128xf32>
    %27 = arith.truncf %26 : vector<64x128xf32> to vector<64x128xbf16>
    %28 = vector.shape_cast %27 : vector<64x128xbf16> to vector<1x8x8x128xbf16>
    %c2 = arith.constant 2 : index
    %c0_21 = arith.constant 0 : index
    %c1 = arith.constant 1 : index
    %c0_22 = arith.constant 0 : index
    %29 = vector.load %arg7[%c2, %c0_21, %c1, %c0_22] : memref<4x10x10x128xbf16, #tpu.memory_space<vmem>>, vector<1x8x8x128xbf16>
    tpu.vector_store %arg7[%c2, %c0_21, %c1, %c0_22], %28 {strides = array<i32>} : memref<4x10x10x128xbf16, #tpu.memory_space<vmem>>, vector<1x8x8x128xbf16>,
    %cst_23 = arith.constant 0.000000e+00 : bf16
    %30 = vector.broadcast %cst_23 : bf16 to vector<1x2x10x128xbf16>
    %c2_24 = arith.constant 2 : index
    %c8_25 = arith.constant 8 : index
    %c0_26 = arith.constant 0 : index
    %c0_27 = arith.constant 0 : index
    %31 = vector.load %arg7[%c2_24, %c8_25, %c0_26, %c0_27] : memref<4x10x10x128xbf16, #tpu.memory_space<vmem>>, vector<1x2x10x128xbf16>
    tpu.vector_store %arg7[%c2_24, %c8_25, %c0_26, %c0_27], %30 {strides = array<i32>} : memref<4x10x10x128xbf16, #tpu.memory_space<vmem>>, vector<1x2x10x128xbf16>,
    %cst_28 = arith.constant 0.000000e+00 : bf16
    %32 = vector.broadcast %cst_28 : bf16 to vector<1x10x1x128xbf16>
    %c2_29 = arith.constant 2 : index
    %c0_30 = arith.constant 0 : index
    %c0_31 = arith.constant 0 : index
    %c0_32 = arith.constant 0 : index
    %33 = vector.load %arg7[%c2_29, %c0_30, %c0_31, %c0_32] : memref<4x10x10x128xbf16, #tpu.memory_space<vmem>>, vector<1x10x1x128xbf16>
    tpu.vector_store %arg7[%c2_29, %c0_30, %c0_31, %c0_32], %32 {strides = array<i32>} : memref<4x10x10x128xbf16, #tpu.memory_space<vmem>>, vector<1x10x1x128xbf16>,
    %cst_33 = arith.constant 0.000000e+00 : bf16
    %34 = vector.broadcast %cst_33 : bf16 to vector<1x10x1x128xbf16>
    %c2_34 = arith.constant 2 : index
    %c0_35 = arith.constant 0 : index
    %c9 = arith.constant 9 : index
    %c0_36 = arith.constant 0 : index
    %35 = vector.load %arg7[%c2_34, %c0_35, %c9, %c0_36] : memref<4x10x10x128xbf16, #tpu.memory_space<vmem>>, vector<1x10x1x128xbf16>
    tpu.vector_store %arg7[%c2_34, %c0_35, %c9, %c0_36], %34 {strides = array<i32>} : memref<4x10x10x128xbf16, #tpu.memory_space<vmem>>, vector<1x10x1x128xbf16>,
    %c0_37 = arith.constant 0 : index
    %c128 = arith.constant 128 : index
    %c0_38 = arith.constant 0 : index
    %36 = vector.load %arg1[%c0_37, %c128, %c0_38] : memref<1x256x128xbf16, #tpu.memory_space<vmem>>, vector<1x64x128xbf16>
    %37 = vector.shape_cast %36 : vector<1x64x128xbf16> to vector<64x128xbf16>
    %38 = arith.extf %37 : vector<64x128xbf16> to vector<64x128xf32>
    %39 = vector.broadcast %0 : vector<1x128xf32> to vector<64x128xf32>
    %40 = arith.mulf %38, %39 : vector<64x128xf32>
    %41 = vector.broadcast %1 : vector<1x128xf32> to vector<64x128xf32>
    %42 = arith.addf %40, %41 : vector<64x128xf32>
    %cst_39 = arith.constant 0.000000e+00 : f32
    %43 = vector.broadcast %cst_39 : f32 to vector<64x128xf32>
    %44 = arith.maximumf %42, %43 : vector<64x128xf32>
    %45 = arith.truncf %44 : vector<64x128xf32> to vector<64x128xbf16>
    %46 = vector.shape_cast %45 : vector<64x128xbf16> to vector<1x8x8x128xbf16>
    %c1_40 = arith.constant 1 : index
    %c1_41 = arith.constant 1 : index
    %c0_42 = arith.constant 0 : index
    %c0_43 = arith.constant 0 : index
    %47 = vector.load %arg7[%c1_40, %c1_41, %c0_42, %c0_43] : memref<4x10x10x128xbf16, #tpu.memory_space<vmem>>, vector<1x8x8x128xbf16>
    tpu.vector_store %arg7[%c1_40, %c1_41, %c0_42, %c0_43], %46 {strides = array<i32>} : memref<4x10x10x128xbf16, #tpu.memory_space<vmem>>, vector<1x8x8x128xbf16>,
    %cst_44 = arith.constant 0.000000e+00 : bf16
    %48 = vector.broadcast %cst_44 : bf16 to vector<1x1x10x128xbf16>
    %c1_45 = arith.constant 1 : index
    %c0_46 = arith.constant 0 : index
    %c0_47 = arith.constant 0 : index
    %c0_48 = arith.constant 0 : index
    %49 = vector.load %arg7[%c1_45, %c0_46, %c0_47, %c0_48] : memref<4x10x10x128xbf16, #tpu.memory_space<vmem>>, vector<1x1x10x128xbf16>
    tpu.vector_store %arg7[%c1_45, %c0_46, %c0_47, %c0_48], %48 {strides = array<i32>} : memref<4x10x10x128xbf16, #tpu.memory_space<vmem>>, vector<1x1x10x128xbf16>,
    %cst_49 = arith.constant 0.000000e+00 : bf16
    %50 = vector.broadcast %cst_49 : bf16 to vector<1x1x10x128xbf16>
    %c1_50 = arith.constant 1 : index
    %c9_51 = arith.constant 9 : index
    %c0_52 = arith.constant 0 : index
    %c0_53 = arith.constant 0 : index
    %51 = vector.load %arg7[%c1_50, %c9_51, %c0_52, %c0_53] : memref<4x10x10x128xbf16, #tpu.memory_space<vmem>>, vector<1x1x10x128xbf16>
    tpu.vector_store %arg7[%c1_50, %c9_51, %c0_52, %c0_53], %50 {strides = array<i32>} : memref<4x10x10x128xbf16, #tpu.memory_space<vmem>>, vector<1x1x10x128xbf16>,
    %cst_54 = arith.constant 0.000000e+00 : bf16
    %52 = vector.broadcast %cst_54 : bf16 to vector<1x10x2x128xbf16>
    %c1_55 = arith.constant 1 : index
    %c0_56 = arith.constant 0 : index
    %c8_57 = arith.constant 8 : index
    %c0_58 = arith.constant 0 : index
    %53 = vector.load %arg7[%c1_55, %c0_56, %c8_57, %c0_58] : memref<4x10x10x128xbf16, #tpu.memory_space<vmem>>, vector<1x10x2x128xbf16>
    tpu.vector_store %arg7[%c1_55, %c0_56, %c8_57, %c0_58], %52 {strides = array<i32>} : memref<4x10x10x128xbf16, #tpu.memory_space<vmem>>, vector<1x10x2x128xbf16>,
    %c0_59 = arith.constant 0 : index
    %c192 = arith.constant 192 : index
    %c0_60 = arith.constant 0 : index
    %54 = vector.load %arg1[%c0_59, %c192, %c0_60] : memref<1x256x128xbf16, #tpu.memory_space<vmem>>, vector<1x64x128xbf16>
    %55 = vector.shape_cast %54 : vector<1x64x128xbf16> to vector<64x128xbf16>
    %56 = arith.extf %55 : vector<64x128xbf16> to vector<64x128xf32>
    %57 = vector.broadcast %0 : vector<1x128xf32> to vector<64x128xf32>
    %58 = arith.mulf %56, %57 : vector<64x128xf32>
    %59 = vector.broadcast %1 : vector<1x128xf32> to vector<64x128xf32>
    %60 = arith.addf %58, %59 : vector<64x128xf32>
    %cst_61 = arith.constant 0.000000e+00 : f32
    %61 = vector.broadcast %cst_61 : f32 to vector<64x128xf32>
    %62 = arith.maximumf %60, %61 : vector<64x128xf32>
    %63 = arith.truncf %62 : vector<64x128xf32> to vector<64x128xbf16>
    %64 = vector.shape_cast %63 : vector<64x128xbf16> to vector<1x8x8x128xbf16>
    %c0_62 = arith.constant 0 : index
    %c1_63 = arith.constant 1 : index
    %c1_64 = arith.constant 1 : index
    %c0_65 = arith.constant 0 : index
    %65 = vector.load %arg7[%c0_62, %c1_63, %c1_64, %c0_65] : memref<4x10x10x128xbf16, #tpu.memory_space<vmem>>, vector<1x8x8x128xbf16>
    tpu.vector_store %arg7[%c0_62, %c1_63, %c1_64, %c0_65], %64 {strides = array<i32>} : memref<4x10x10x128xbf16, #tpu.memory_space<vmem>>, vector<1x8x8x128xbf16>,
    %cst_66 = arith.constant 0.000000e+00 : bf16
    %66 = vector.broadcast %cst_66 : bf16 to vector<1x1x10x128xbf16>
    %c0_67 = arith.constant 0 : index
    %c0_68 = arith.constant 0 : index
    %c0_69 = arith.constant 0 : index
    %c0_70 = arith.constant 0 : index
    %67 = vector.load %arg7[%c0_67, %c0_68, %c0_69, %c0_70] : memref<4x10x10x128xbf16, #tpu.memory_space<vmem>>, vector<1x1x10x128xbf16>
    tpu.vector_store %arg7[%c0_67, %c0_68, %c0_69, %c0_70], %66 {strides = array<i32>} : memref<4x10x10x128xbf16, #tpu.memory_space<vmem>>, vector<1x1x10x128xbf16>,
    %cst_71 = arith.constant 0.000000e+00 : bf16
    %68 = vector.broadcast %cst_71 : bf16 to vector<1x1x10x128xbf16>
    %c0_72 = arith.constant 0 : index
    %c9_73 = arith.constant 9 : index
    %c0_74 = arith.constant 0 : index
    %c0_75 = arith.constant 0 : index
    %69 = vector.load %arg7[%c0_72, %c9_73, %c0_74, %c0_75] : memref<4x10x10x128xbf16, #tpu.memory_space<vmem>>, vector<1x1x10x128xbf16>
    tpu.vector_store %arg7[%c0_72, %c9_73, %c0_74, %c0_75], %68 {strides = array<i32>} : memref<4x10x10x128xbf16, #tpu.memory_space<vmem>>, vector<1x1x10x128xbf16>,
    %cst_76 = arith.constant 0.000000e+00 : bf16
    %70 = vector.broadcast %cst_76 : bf16 to vector<1x10x1x128xbf16>
    %c0_77 = arith.constant 0 : index
    %c0_78 = arith.constant 0 : index
    %c0_79 = arith.constant 0 : index
    %c0_80 = arith.constant 0 : index
    %71 = vector.load %arg7[%c0_77, %c0_78, %c0_79, %c0_80] : memref<4x10x10x128xbf16, #tpu.memory_space<vmem>>, vector<1x10x1x128xbf16>
    tpu.vector_store %arg7[%c0_77, %c0_78, %c0_79, %c0_80], %70 {strides = array<i32>} : memref<4x10x10x128xbf16, #tpu.memory_space<vmem>>, vector<1x10x1x128xbf16>,
    %cst_81 = arith.constant 0.000000e+00 : bf16
    %72 = vector.broadcast %cst_81 : bf16 to vector<1x10x1x128xbf16>
    %c0_82 = arith.constant 0 : index
    %c0_83 = arith.constant 0 : index
    %c9_84 = arith.constant 9 : index
    %c0_85 = arith.constant 0 : index
    %73 = vector.load %arg7[%c0_82, %c0_83, %c9_84, %c0_85] : memref<4x10x10x128xbf16, #tpu.memory_space<vmem>>, vector<1x10x1x128xbf16>
    tpu.vector_store %arg7[%c0_82, %c0_83, %c9_84, %c0_85], %72 {strides = array<i32>} : memref<4x10x10x128xbf16, #tpu.memory_space<vmem>>, vector<1x10x1x128xbf16>,
    %c0_86 = arith.constant 0 : index
    %c0_87 = arith.constant 0 : index
    %c0_88 = arith.constant 0 : index
    %c0_89 = arith.constant 0 : index
    %74 = vector.load %arg7[%c0_86, %c0_87, %c0_88, %c0_89] : memref<4x10x10x128xbf16, #tpu.memory_space<vmem>>, vector<1x8x8x128xbf16>
    %75 = vector.shape_cast %74 : vector<1x8x8x128xbf16> to vector<64x128xbf16>
    %c1_90 = arith.constant 1 : index
    %c0_91 = arith.constant 0 : index
    %c0_92 = arith.constant 0 : index
    %c0_93 = arith.constant 0 : index
    %76 = vector.load %arg7[%c1_90, %c0_91, %c0_92, %c0_93] : memref<4x10x10x128xbf16, #tpu.memory_space<vmem>>, vector<1x8x8x128xbf16>
    %77 = vector.shape_cast %76 : vector<1x8x8x128xbf16> to vector<64x128xbf16>
    %c0_94 = arith.constant 0 : index
    %c0_95 = arith.constant 0 : index
    %c1_96 = arith.constant 1 : index
    %c0_97 = arith.constant 0 : index
    %78 = vector.load %arg7[%c0_94, %c0_95, %c1_96, %c0_97] : memref<4x10x10x128xbf16, #tpu.memory_space<vmem>>, vector<1x8x8x128xbf16>
    %79 = vector.shape_cast %78 : vector<1x8x8x128xbf16> to vector<64x128xbf16>
    %80 = tpu.concatenate %75, %77, %79 in 1 : vector<64x128xbf16>, vector<64x128xbf16>, vector<64x128xbf16> -> vector<64x384xbf16>
    %c0_98 = arith.constant 0 : index
    %c0_99 = arith.constant 0 : index
    %c0_100 = arith.constant 0 : index
    %81 = vector.load %arg4[%c0_98, %c0_99, %c0_100] : memref<3x384x128xbf16, #tpu.memory_space<vmem>>, vector<1x384x128xbf16>
    %82 = vector.shape_cast %81 : vector<1x384x128xbf16> to vector<384x128xbf16>
    %cst_101 = arith.constant dense<0.000000e+00> : vector<64x128xf32>
    %83 = tpu.matmul %80, %82, %cst_101 {dimension_numbers = #tpu.dot_dimension_numbers<[1], [0], [0], [1], [0, 0, 1, 1], [], []>} : vector<64x384xbf16>, vector<384x128xbf16>, vector<64x128xf32> -> vector<64x128xf32>
    %c2_102 = arith.constant 2 : index
    %c0_103 = arith.constant 0 : index
    %c0_104 = arith.constant 0 : index
    %c0_105 = arith.constant 0 : index
    %84 = vector.load %arg7[%c2_102, %c0_103, %c0_104, %c0_105] : memref<4x10x10x128xbf16, #tpu.memory_space<vmem>>, vector<1x8x8x128xbf16>
    %85 = vector.shape_cast %84 : vector<1x8x8x128xbf16> to vector<64x128xbf16>
    %c3_106 = arith.constant 3 : index
    %c0_107 = arith.constant 0 : index
    %c0_108 = arith.constant 0 : index
    %c0_109 = arith.constant 0 : index
    %86 = vector.load %arg7[%c3_106, %c0_107, %c0_108, %c0_109] : memref<4x10x10x128xbf16, #tpu.memory_space<vmem>>, vector<1x8x8x128xbf16>
    %87 = vector.shape_cast %86 : vector<1x8x8x128xbf16> to vector<64x128xbf16>
    %c2_110 = arith.constant 2 : index
    %c0_111 = arith.constant 0 : index
    %c1_112 = arith.constant 1 : index
    %c0_113 = arith.constant 0 : index
    %88 = vector.load %arg7[%c2_110, %c0_111, %c1_112, %c0_113] : memref<4x10x10x128xbf16, #tpu.memory_space<vmem>>, vector<1x8x8x128xbf16>
    %89 = vector.shape_cast %88 : vector<1x8x8x128xbf16> to vector<64x128xbf16>
    %90 = tpu.concatenate %85, %87, %89 in 1 : vector<64x128xbf16>, vector<64x128xbf16>, vector<64x128xbf16> -> vector<64x384xbf16>
    %c1_114 = arith.constant 1 : index
    %c0_115 = arith.constant 0 : index
    %c0_116 = arith.constant 0 : index
    %91 = vector.load %arg4[%c1_114, %c0_115, %c0_116] : memref<3x384x128xbf16, #tpu.memory_space<vmem>>, vector<1x384x128xbf16>
    %92 = vector.shape_cast %91 : vector<1x384x128xbf16> to vector<384x128xbf16>
    %cst_117 = arith.constant dense<0.000000e+00> : vector<64x128xf32>
    %93 = tpu.matmul %90, %92, %cst_117 {dimension_numbers = #tpu.dot_dimension_numbers<[1], [0], [0], [1], [0, 0, 1, 1], [], []>} : vector<64x384xbf16>, vector<384x128xbf16>, vector<64x128xf32> -> vector<64x128xf32>
    %94 = arith.addf %83, %93 : vector<64x128xf32>
    %c0_118 = arith.constant 0 : index
    %c1_119 = arith.constant 1 : index
    %c0_120 = arith.constant 0 : index
    %c0_121 = arith.constant 0 : index
    %95 = vector.load %arg7[%c0_118, %c1_119, %c0_120, %c0_121] : memref<4x10x10x128xbf16, #tpu.memory_space<vmem>>, vector<1x8x8x128xbf16>
    %96 = vector.shape_cast %95 : vector<1x8x8x128xbf16> to vector<64x128xbf16>
    %c1_122 = arith.constant 1 : index
    %c1_123 = arith.constant 1 : index
    %c0_124 = arith.constant 0 : index
    %c0_125 = arith.constant 0 : index
    %97 = vector.load %arg7[%c1_122, %c1_123, %c0_124, %c0_125] : memref<4x10x10x128xbf16, #tpu.memory_space<vmem>>, vector<1x8x8x128xbf16>
    %98 = vector.shape_cast %97 : vector<1x8x8x128xbf16> to vector<64x128xbf16>
    %c0_126 = arith.constant 0 : index
    %c1_127 = arith.constant 1 : index
    %c1_128 = arith.constant 1 : index
    %c0_129 = arith.constant 0 : index
    %99 = vector.load %arg7[%c0_126, %c1_127, %c1_128, %c0_129] : memref<4x10x10x128xbf16, #tpu.memory_space<vmem>>, vector<1x8x8x128xbf16>
    %100 = vector.shape_cast %99 : vector<1x8x8x128xbf16> to vector<64x128xbf16>
    %101 = tpu.concatenate %96, %98, %100 in 1 : vector<64x128xbf16>, vector<64x128xbf16>, vector<64x128xbf16> -> vector<64x384xbf16>
    %c2_130 = arith.constant 2 : index
    %c0_131 = arith.constant 0 : index
    %c0_132 = arith.constant 0 : index
    %102 = vector.load %arg4[%c2_130, %c0_131, %c0_132] : memref<3x384x128xbf16, #tpu.memory_space<vmem>>, vector<1x384x128xbf16>
    %103 = vector.shape_cast %102 : vector<1x384x128xbf16> to vector<384x128xbf16>
    %cst_133 = arith.constant dense<0.000000e+00> : vector<64x128xf32>
    %104 = tpu.matmul %101, %103, %cst_133 {dimension_numbers = #tpu.dot_dimension_numbers<[1], [0], [0], [1], [0, 0, 1, 1], [], []>} : vector<64x384xbf16>, vector<384x128xbf16>, vector<64x128xf32> -> vector<64x128xf32>
    %105 = arith.addf %94, %104 : vector<64x128xf32>
    %106 = arith.truncf %105 : vector<64x128xf32> to vector<64x128xbf16>
    %c0_134 = arith.constant 0 : index
    %c0_135 = arith.constant 0 : index
    %c0_136 = arith.constant 0 : index
    %107 = vector.load %arg5[%c0_134, %c0_135, %c0_136] : memref<1x64x128xbf16, #tpu.memory_space<vmem>>, vector<1x64x128xbf16>
    %108 = vector.shape_cast %107 : vector<1x64x128xbf16> to vector<64x128xbf16>
    %109 = vector.shape_cast %106 : vector<64x128xbf16> to vector<1x64x128xbf16>
    tpu.vector_store %arg5[%c0_134, %c0_135, %c0_136], %109 {strides = array<i32>} : memref<1x64x128xbf16, #tpu.memory_space<vmem>>, vector<1x64x128xbf16>,
    %cst_137 = arith.constant dense<0.000000e+00> : vector<128xf32>
    %110 = vector.multi_reduction <add>, %105, %cst_137 [0] : vector<64x128xf32> to vector<128xf32>
    %111 = vector.shape_cast %110 : vector<128xf32> to vector<1x128xf32>
    %cst_138 = arith.constant 6.400000e+01 : f32
    %112 = vector.broadcast %cst_138 : f32 to vector<1x128xf32>
    %113 = arith.divf %111, %112 : vector<1x128xf32>
    %114 = vector.broadcast %113 : vector<1x128xf32> to vector<64x128xf32>
    %115 = arith.subf %105, %114 : vector<64x128xf32>
    %116 = arith.mulf %115, %115 : vector<64x128xf32>
    %cst_139 = arith.constant dense<0.000000e+00> : vector<128xf32>
    %117 = vector.multi_reduction <add>, %116, %cst_139 [0] : vector<64x128xf32> to vector<128xf32>
    %118 = vector.shape_cast %117 : vector<128xf32> to vector<1x128xf32>
    %c0_140 = arith.constant 0 : index
    %c0_141 = arith.constant 0 : index
    %c0_142 = arith.constant 0 : index
    %119 = vector.load %arg6[%c0_140, %c0_141, %c0_142] : memref<1x2x128xf32, #tpu.memory_space<vmem>>, vector<1x1x128xf32>
    %120 = vector.shape_cast %119 : vector<1x1x128xf32> to vector<1x128xf32>
    %121 = vector.shape_cast %113 : vector<1x128xf32> to vector<1x1x128xf32>
    tpu.vector_store %arg6[%c0_140, %c0_141, %c0_142], %121 {strides = array<i32>} : memref<1x2x128xf32, #tpu.memory_space<vmem>>, vector<1x1x128xf32>,
    %c0_143 = arith.constant 0 : index
    %c1_144 = arith.constant 1 : index
    %c0_145 = arith.constant 0 : index
    %122 = vector.load %arg6[%c0_143, %c1_144, %c0_145] : memref<1x2x128xf32, #tpu.memory_space<vmem>>, vector<1x1x128xf32>
    %123 = vector.shape_cast %122 : vector<1x1x128xf32> to vector<1x128xf32>
    %124 = vector.shape_cast %118 : vector<1x128xf32> to vector<1x1x128xf32>
    tpu.vector_store %arg6[%c0_143, %c1_144, %c0_145], %124 {strides = array<i32>} : memref<1x2x128xf32, #tpu.memory_space<vmem>>, vector<1x1x128xf32>,
    return
  }
  func.func @transform_0(%arg0: i32) -> (i32, i32, i32) {
    %c0_i32 = arith.constant 0 : i32
    %c0_i32_0 = arith.constant 0 : i32
    %c0_i32_1 = arith.constant 0 : i32
    return %arg0, %c0_i32, %c0_i32_0 : i32, i32, i32
  }
  func.func @transform_1(%arg0: i32) -> (i32, i32) {
    %c0_i32 = arith.constant 0 : i32
    %c0_i32_0 = arith.constant 0 : i32
    %c0_i32_1 = arith.constant 0 : i32
    return %c0_i32, %c0_i32_0 : i32, i32
  }
  func.func @transform_2(%arg0: i32) -> (i32, i32) {
    %c0_i32 = arith.constant 0 : i32
    %c0_i32_0 = arith.constant 0 : i32
    %c0_i32_1 = arith.constant 0 : i32
    return %c0_i32, %c0_i32_0 : i32, i32
  }
  func.func @transform_3(%arg0: i32) -> (i32, i32, i32) {
    %c0_i32 = arith.constant 0 : i32
    %c0_i32_0 = arith.constant 0 : i32
    %c0_i32_1 = arith.constant 0 : i32
    %c0_i32_2 = arith.constant 0 : i32
    return %c0_i32, %c0_i32_0, %c0_i32_1 : i32, i32, i32
  }
  func.func @transform_4(%arg0: i32) -> (i32, i32, i32) {
    %c0_i32 = arith.constant 0 : i32
    %c0_i32_0 = arith.constant 0 : i32
    %c0_i32_1 = arith.constant 0 : i32
    return %arg0, %c0_i32, %c0_i32_0 : i32, i32, i32
  }
  func.func @transform_5(%arg0: i32) -> (i32, i32, i32) {
    %c0_i32 = arith.constant 0 : i32
    %c0_i32_0 = arith.constant 0 : i32
    %c0_i32_1 = arith.constant 0 : i32
    return %arg0, %c0_i32, %c0_i32_0 : i32, i32, i32
  }
}

module attributes {stable_mosaic.version = 11 : i64} {
  func.func @_conv3_kernel(%arg0: i32, %arg1: memref<128x128xbf16, #tpu.memory_space<vmem>>, %arg2: memref<1x128xf32, #tpu.memory_space<vmem>>, %arg3: memref<1x128xf32, #tpu.memory_space<vmem>>, %arg4: memref<128x128xbf16, #tpu.memory_space<vmem>>, %arg5: memref<128x128xbf16, #tpu.memory_space<vmem>>, %arg6: memref<1x2x128xf32, #tpu.memory_space<vmem>>) attributes {dimension_semantics = [#tpu.dimension_semantics<parallel>], iteration_bounds = array<i64: 1>, scalar_prefetch = 0 : i64, scratch_operands = 0 : i64, tpu.core_type = #tpu.core_type<tc>, window_params = [{transform_indices = @transform_0, window_bounds = array<i64: 128, 128>}, {pipeline_mode = #tpu.pipeline_mode<synchronous>, transform_indices = @transform_1, window_bounds = array<i64: 1, 128>}, {pipeline_mode = #tpu.pipeline_mode<synchronous>, transform_indices = @transform_2, window_bounds = array<i64: 1, 128>}, {pipeline_mode = #tpu.pipeline_mode<synchronous>, transform_indices = @transform_3, window_bounds = array<i64: 128, 128>}, {transform_indices = @transform_4, window_bounds = array<i64: 128, 128>}, {transform_indices = @transform_5, window_bounds = array<i64: 1, 2, 128>}]} {
    %c0 = arith.constant 0 : index
    %c0_0 = arith.constant 0 : index
    %0 = vector.load %arg1[%c0, %c0_0] : memref<128x128xbf16, #tpu.memory_space<vmem>>, vector<128x128xbf16>
    %1 = arith.extf %0 : vector<128x128xbf16> to vector<128x128xf32>
    %c0_1 = arith.constant 0 : index
    %c0_2 = arith.constant 0 : index
    %2 = vector.load %arg2[%c0_1, %c0_2] : memref<1x128xf32, #tpu.memory_space<vmem>>, vector<1x128xf32>
    %3 = vector.broadcast %2 : vector<1x128xf32> to vector<128x128xf32>
    %4 = arith.mulf %1, %3 : vector<128x128xf32>
    %c0_3 = arith.constant 0 : index
    %c0_4 = arith.constant 0 : index
    %5 = vector.load %arg3[%c0_3, %c0_4] : memref<1x128xf32, #tpu.memory_space<vmem>>, vector<1x128xf32>
    %6 = vector.broadcast %5 : vector<1x128xf32> to vector<128x128xf32>
    %7 = arith.addf %4, %6 : vector<128x128xf32>
    %cst = arith.constant 0.000000e+00 : f32
    %8 = vector.broadcast %cst : f32 to vector<128x128xf32>
    %9 = arith.maximumf %7, %8 : vector<128x128xf32>
    %10 = arith.truncf %9 : vector<128x128xf32> to vector<128x128xbf16>
    %c0_5 = arith.constant 0 : index
    %c0_6 = arith.constant 0 : index
    %11 = vector.load %arg4[%c0_5, %c0_6] : memref<128x128xbf16, #tpu.memory_space<vmem>>, vector<128x128xbf16>
    %cst_7 = arith.constant dense<0.000000e+00> : vector<128x128xf32>
    %12 = tpu.matmul %10, %11, %cst_7 {dimension_numbers = #tpu.dot_dimension_numbers<[1], [0], [0], [1], [0, 0, 1, 1], [], []>} : vector<128x128xbf16>, vector<128x128xbf16>, vector<128x128xf32> -> vector<128x128xf32>
    %13 = arith.truncf %12 : vector<128x128xf32> to vector<128x128xbf16>
    %c0_8 = arith.constant 0 : index
    %c0_9 = arith.constant 0 : index
    %14 = vector.load %arg5[%c0_8, %c0_9] : memref<128x128xbf16, #tpu.memory_space<vmem>>, vector<128x128xbf16>
    tpu.vector_store %arg5[%c0_8, %c0_9], %13 {strides = array<i32>} : memref<128x128xbf16, #tpu.memory_space<vmem>>, vector<128x128xbf16>,
    %cst_10 = arith.constant dense<0.000000e+00> : vector<128xf32>
    %15 = vector.multi_reduction <add>, %12, %cst_10 [0] : vector<128x128xf32> to vector<128xf32>
    %16 = vector.shape_cast %15 : vector<128xf32> to vector<1x128xf32>
    %cst_11 = arith.constant 1.280000e+02 : f32
    %17 = vector.broadcast %cst_11 : f32 to vector<1x128xf32>
    %18 = arith.divf %16, %17 : vector<1x128xf32>
    %19 = vector.broadcast %18 : vector<1x128xf32> to vector<128x128xf32>
    %20 = arith.subf %12, %19 : vector<128x128xf32>
    %21 = arith.mulf %20, %20 : vector<128x128xf32>
    %cst_12 = arith.constant dense<0.000000e+00> : vector<128xf32>
    %22 = vector.multi_reduction <add>, %21, %cst_12 [0] : vector<128x128xf32> to vector<128xf32>
    %23 = vector.shape_cast %22 : vector<128xf32> to vector<1x128xf32>
    %c0_13 = arith.constant 0 : index
    %c0_14 = arith.constant 0 : index
    %c0_15 = arith.constant 0 : index
    %24 = vector.load %arg6[%c0_13, %c0_14, %c0_15] : memref<1x2x128xf32, #tpu.memory_space<vmem>>, vector<1x1x128xf32>
    %25 = vector.shape_cast %24 : vector<1x1x128xf32> to vector<1x128xf32>
    %26 = vector.shape_cast %18 : vector<1x128xf32> to vector<1x1x128xf32>
    tpu.vector_store %arg6[%c0_13, %c0_14, %c0_15], %26 {strides = array<i32>} : memref<1x2x128xf32, #tpu.memory_space<vmem>>, vector<1x1x128xf32>,
    %c0_16 = arith.constant 0 : index
    %c1 = arith.constant 1 : index
    %c0_17 = arith.constant 0 : index
    %27 = vector.load %arg6[%c0_16, %c1, %c0_17] : memref<1x2x128xf32, #tpu.memory_space<vmem>>, vector<1x1x128xf32>
    %28 = vector.shape_cast %27 : vector<1x1x128xf32> to vector<1x128xf32>
    %29 = vector.shape_cast %23 : vector<1x128xf32> to vector<1x1x128xf32>
    tpu.vector_store %arg6[%c0_16, %c1, %c0_17], %29 {strides = array<i32>} : memref<1x2x128xf32, #tpu.memory_space<vmem>>, vector<1x1x128xf32>,
    return
  }
  func.func @transform_0(%arg0: i32) -> (i32, i32) {
    %c0_i32 = arith.constant 0 : i32
    %c0_i32_0 = arith.constant 0 : i32
    return %arg0, %c0_i32 : i32, i32
  }
  func.func @transform_1(%arg0: i32) -> (i32, i32) {
    %c0_i32 = arith.constant 0 : i32
    %c0_i32_0 = arith.constant 0 : i32
    %c0_i32_1 = arith.constant 0 : i32
    return %c0_i32, %c0_i32_0 : i32, i32
  }
  func.func @transform_2(%arg0: i32) -> (i32, i32) {
    %c0_i32 = arith.constant 0 : i32
    %c0_i32_0 = arith.constant 0 : i32
    %c0_i32_1 = arith.constant 0 : i32
    return %c0_i32, %c0_i32_0 : i32, i32
  }
  func.func @transform_3(%arg0: i32) -> (i32, i32) {
    %c0_i32 = arith.constant 0 : i32
    %c0_i32_0 = arith.constant 0 : i32
    %c0_i32_1 = arith.constant 0 : i32
    return %c0_i32, %c0_i32_0 : i32, i32
  }
  func.func @transform_4(%arg0: i32) -> (i32, i32) {
    %c0_i32 = arith.constant 0 : i32
    %c0_i32_0 = arith.constant 0 : i32
    return %arg0, %c0_i32 : i32, i32
  }
  func.func @transform_5(%arg0: i32) -> (i32, i32, i32) {
    %c0_i32 = arith.constant 0 : i32
    %c0_i32_0 = arith.constant 0 : i32
    %c0_i32_1 = arith.constant 0 : i32
    return %arg0, %c0_i32, %c0_i32_0 : i32, i32, i32
  }
}

module attributes {stable_mosaic.version = 11 : i64} {
  func.func @_finalize_ds_kernel(%arg0: i32, %arg1: memref<128x128xbf16, #tpu.memory_space<vmem>>, %arg2: memref<128x128xbf16, #tpu.memory_space<vmem>>, %arg3: memref<1x128xf32, #tpu.memory_space<vmem>>, %arg4: memref<1x128xf32, #tpu.memory_space<vmem>>, %arg5: memref<1x128xf32, #tpu.memory_space<vmem>>, %arg6: memref<1x128xf32, #tpu.memory_space<vmem>>, %arg7: memref<128x128xf32, #tpu.memory_space<vmem>>) attributes {dimension_semantics = [#tpu.dimension_semantics<parallel>], iteration_bounds = array<i64: 1>, scalar_prefetch = 0 : i64, scratch_operands = 0 : i64, tpu.core_type = #tpu.core_type<tc>, window_params = [{transform_indices = @transform_0, window_bounds = array<i64: 128, 128>}, {transform_indices = @transform_1, window_bounds = array<i64: 128, 128>}, {pipeline_mode = #tpu.pipeline_mode<synchronous>, transform_indices = @transform_2, window_bounds = array<i64: 1, 128>}, {pipeline_mode = #tpu.pipeline_mode<synchronous>, transform_indices = @transform_3, window_bounds = array<i64: 1, 128>}, {pipeline_mode = #tpu.pipeline_mode<synchronous>, transform_indices = @transform_4, window_bounds = array<i64: 1, 128>}, {pipeline_mode = #tpu.pipeline_mode<synchronous>, transform_indices = @transform_5, window_bounds = array<i64: 1, 128>}, {transform_indices = @transform_6, window_bounds = array<i64: 128, 128>}]} {
    %c0 = arith.constant 0 : index
    %c0_0 = arith.constant 0 : index
    %0 = vector.load %arg1[%c0, %c0_0] : memref<128x128xbf16, #tpu.memory_space<vmem>>, vector<128x128xbf16>
    %1 = arith.extf %0 : vector<128x128xbf16> to vector<128x128xf32>
    %c0_1 = arith.constant 0 : index
    %c0_2 = arith.constant 0 : index
    %2 = vector.load %arg3[%c0_1, %c0_2] : memref<1x128xf32, #tpu.memory_space<vmem>>, vector<1x128xf32>
    %3 = vector.broadcast %2 : vector<1x128xf32> to vector<128x128xf32>
    %4 = arith.mulf %1, %3 : vector<128x128xf32>
    %c0_3 = arith.constant 0 : index
    %c0_4 = arith.constant 0 : index
    %5 = vector.load %arg4[%c0_3, %c0_4] : memref<1x128xf32, #tpu.memory_space<vmem>>, vector<1x128xf32>
    %6 = vector.broadcast %5 : vector<1x128xf32> to vector<128x128xf32>
    %7 = arith.addf %4, %6 : vector<128x128xf32>
    %c0_5 = arith.constant 0 : index
    %c0_6 = arith.constant 0 : index
    %8 = vector.load %arg2[%c0_5, %c0_6] : memref<128x128xbf16, #tpu.memory_space<vmem>>, vector<128x128xbf16>
    %9 = arith.extf %8 : vector<128x128xbf16> to vector<128x128xf32>
    %c0_7 = arith.constant 0 : index
    %c0_8 = arith.constant 0 : index
    %10 = vector.load %arg5[%c0_7, %c0_8] : memref<1x128xf32, #tpu.memory_space<vmem>>, vector<1x128xf32>
    %11 = vector.broadcast %10 : vector<1x128xf32> to vector<128x128xf32>
    %12 = arith.mulf %9, %11 : vector<128x128xf32>
    %c0_9 = arith.constant 0 : index
    %c0_10 = arith.constant 0 : index
    %13 = vector.load %arg6[%c0_9, %c0_10] : memref<1x128xf32, #tpu.memory_space<vmem>>, vector<1x128xf32>
    %14 = vector.broadcast %13 : vector<1x128xf32> to vector<128x128xf32>
    %15 = arith.addf %12, %14 : vector<128x128xf32>
    %16 = arith.addf %7, %15 : vector<128x128xf32>
    %cst = arith.constant 0.000000e+00 : f32
    %17 = vector.broadcast %cst : f32 to vector<128x128xf32>
    %18 = arith.maximumf %16, %17 : vector<128x128xf32>
    %c0_11 = arith.constant 0 : index
    %c0_12 = arith.constant 0 : index
    %19 = vector.load %arg7[%c0_11, %c0_12] : memref<128x128xf32, #tpu.memory_space<vmem>>, vector<128x128xf32>
    tpu.vector_store %arg7[%c0_11, %c0_12], %18 {strides = array<i32>} : memref<128x128xf32, #tpu.memory_space<vmem>>, vector<128x128xf32>,
    return
  }
  func.func @transform_0(%arg0: i32) -> (i32, i32) {
    %c0_i32 = arith.constant 0 : i32
    %c0_i32_0 = arith.constant 0 : i32
    return %arg0, %c0_i32 : i32, i32
  }
  func.func @transform_1(%arg0: i32) -> (i32, i32) {
    %c0_i32 = arith.constant 0 : i32
    %c0_i32_0 = arith.constant 0 : i32
    return %arg0, %c0_i32 : i32, i32
  }
  func.func @transform_2(%arg0: i32) -> (i32, i32) {
    %c0_i32 = arith.constant 0 : i32
    %c0_i32_0 = arith.constant 0 : i32
    %c0_i32_1 = arith.constant 0 : i32
    return %c0_i32, %c0_i32_0 : i32, i32
  }
  func.func @transform_3(%arg0: i32) -> (i32, i32) {
    %c0_i32 = arith.constant 0 : i32
    %c0_i32_0 = arith.constant 0 : i32
    %c0_i32_1 = arith.constant 0 : i32
    return %c0_i32, %c0_i32_0 : i32, i32
  }
  func.func @transform_4(%arg0: i32) -> (i32, i32) {
    %c0_i32 = arith.constant 0 : i32
    %c0_i32_0 = arith.constant 0 : i32
    %c0_i32_1 = arith.constant 0 : i32
    return %c0_i32, %c0_i32_0 : i32, i32
  }
  func.func @transform_5(%arg0: i32) -> (i32, i32) {
    %c0_i32 = arith.constant 0 : i32
    %c0_i32_0 = arith.constant 0 : i32
    %c0_i32_1 = arith.constant 0 : i32
    return %c0_i32, %c0_i32_0 : i32, i32
  }
  func.func @transform_6(%arg0: i32) -> (i32, i32) {
    %c0_i32 = arith.constant 0 : i32
    %c0_i32_0 = arith.constant 0 : i32
    return %arg0, %c0_i32 : i32, i32
  }
}

</mosaic_0001>

<llo_original>
// kernel: bottleneck_forward.7
$region0: #{bottleneck_forward.7}
  #allocation0 [shape = 'u32[]', space=smem, size = 0x4, offset = 0x4, fixed_abs, tag = 'smem constant byte address 0x4 - core index']
  #allocation1 [shape = 'u32[144,128]{1,0:T(1,128)}', space=vmem, size = 0x12000, scoped, tag = 'internal scratch']
  %s0 = inlined_call_operand.vmem [shape: bf16[128,128], index: 0, kind: input, shape index: {}]
  %s1 = inlined_call_operand.vmem [shape: bf16[128,128], index: 1, kind: input, shape index: {}]
  %s2 = inlined_call_operand.vmem [shape: f32[1,128], index: 2, kind: input, shape index: {}]
  %s3 = inlined_call_operand.vmem [shape: f32[1,128], index: 3, kind: input, shape index: {}]
  %s4 = inlined_call_operand.vmem [shape: f32[1,128], index: 4, kind: input, shape index: {}]
  %s5 = inlined_call_operand.vmem [shape: f32[1,128], index: 5, kind: input, shape index: {}]
  %s6 = inlined_call_operand.hbm [shape: f32[128,128], index: 6, kind: output, shape index: {}]
  %s7 = sld [smem:[#allocation0]]
  $region34: #{bottleneck_forward.7} parent=0
    _
  %s9 = ssub.s32 1, %s7
  %s10 = scalar_select 0, %s9, %s7
  $region1: #{bottleneck_forward.7} parent=0
    #allocation2 [shape = 'u8[65536]{0}', space=vmem, size = 0x10000, scoped, tag = 'output window, operand 0, single buffered']
    #allocation3 [shape = 's32[1]{0}', space=sflag, size = 0x4, scoped, tag = 'scoped memory for bottleneck_forward.7']
    %11 = vsyncpa [#allocation3], 0
    // Predicated region
    $region2: #{bottleneck_forward.7} parent=1 // pred_check
      _
    $region3: #{bottleneck_forward.7} parent=1 // pred_check_branch
      %13 = sbr.rel (0) target = $region5
    $region4: #{bottleneck_forward.7} parent=1 // pred_region
      _
    $region5: #{bottleneck_forward.7} parent=1 // pred_fallthru
      _
    // Predicated region
    $region6: #{bottleneck_forward.7} parent=1 // pred_check
      _
    $region7: #{bottleneck_forward.7} parent=1 // pred_check_branch
      %15 = sbr.rel (0) target = $region9
    $region8: #{bottleneck_forward.7} parent=1 // pred_region
      _
    $region9: #{bottleneck_forward.7} parent=1 // pred_fallthru
      _
    // Predicated region
    $region10: #{bottleneck_forward.7} parent=1 // pred_check
      _
    $region11: #{bottleneck_forward.7} parent=1 // pred_check_branch
      %17 = sbr.rel (0) target = $region13
    $region12: #{bottleneck_forward.7} parent=1 // pred_region
      _
    $region13: #{bottleneck_forward.7} parent=1 // pred_fallthru
      _
    // Predicated region
    $region14: #{bottleneck_forward.7} parent=1 // pred_check
      _
    $region15: #{bottleneck_forward.7} parent=1 // pred_check_branch
      %19 = sbr.rel (0) target = $region17
    $region16: #{bottleneck_forward.7} parent=1 // pred_region
      _
    $region17: #{bottleneck_forward.7} parent=1 // pred_fallthru
      _
    // Predicated region
    $region18: #{bottleneck_forward.7} parent=1 // pred_check
      _
    $region19: #{bottleneck_forward.7} parent=1 // pred_check_branch
      %21 = sbr.rel (0) target = $region21
    $region20: #{bottleneck_forward.7} parent=1 // pred_region
      _
    $region21: #{bottleneck_forward.7} parent=1 // pred_fallthru
      _
    // Predicated region
    $region22: #{bottleneck_forward.7} parent=1 // pred_check
      _
    $region23: #{bottleneck_forward.7} parent=1 // pred_check_branch
      %23 = sbr.rel (0) target = $region25
    $region24: #{bottleneck_forward.7} parent=1 // pred_region
      _
    $region25: #{bottleneck_forward.7} parent=1 // pred_fallthru
      _
    %v24 = vld [vmem:[%s0] sm:$0xf]
    %v25 = vld [vmem:[%s0 + $0x4] sm:$0xf]
    %v26 = vld [vmem:[%s0 + $0x8] sm:$0xf]
    %v27 = vld [vmem:[%s0 + $0xc] sm:$0xf]
    %v28 = vld [vmem:[%s0 + $0x10] sm:$0xf]
    %v29 = vld [vmem:[%s0 + $0x14] sm:$0xf]
    %v30 = vld [vmem:[%s0 + $0x18] sm:$0xf]
    %v31 = vld [vmem:[%s0 + $0x1c] sm:$0xf]
    %v32 = vld [vmem:[%s0 + $0x20] sm:$0xf]
    %v33 = vld [vmem:[%s0 + $0x24] sm:$0xf]
    %v34 = vld [vmem:[%s0 + $0x28] sm:$0xf]
    %v35 = vld [vmem:[%s0 + $0x2c] sm:$0xf]
    %v36 = vld [vmem:[%s0 + $0x30] sm:$0xf]
    %v37 = vld [vmem:[%s0 + $0x34] sm:$0xf]
    %v38 = vld [vmem:[%s0 + $0x38] sm:$0xf]
    %v39 = vld [vmem:[%s0 + $0x3c] sm:$0xf]
    %v40 = vunpack.c.l.bf16 %v24
    %v41 = vunpack.c.l.bf16 %v25
    %v42 = vunpack.c.l.bf16 %v26
    %v43 = vunpack.c.l.bf16 %v27
    %v44 = vunpack.c.l.bf16 %v28
    %v45 = vunpack.c.l.bf16 %v29
    %v46 = vunpack.c.l.bf16 %v30
    %v47 = vunpack.c.l.bf16 %v31
    %v48 = vunpack.c.l.bf16 %v32
    %v49 = vunpack.c.l.bf16 %v33
    %v50 = vunpack.c.l.bf16 %v34
    %v51 = vunpack.c.l.bf16 %v35
    %v52 = vunpack.c.l.bf16 %v36
    %v53 = vunpack.c.l.bf16 %v37
    %v54 = vunpack.c.l.bf16 %v38
    %v55 = vunpack.c.l.bf16 %v39
    %v56 = vld [vmem:[%s2] sm:$0x1]
    %v58 = vlaneseq
    %v59 = vshrl.u32 %v58, 7
    %v60 = vsub.s32 0, %v59
    %v61 = vrot.slane %v56, %v60
    %v63 = vmul.f32 %v40, %v61
    %v64 = vmul.f32 %v41, %v61
    %v65 = vmul.f32 %v42, %v61
    %v66 = vmul.f32 %v43, %v61
    %v67 = vmul.f32 %v44, %v61
    %v68 = vmul.f32 %v45, %v61
    %v69 = vmul.f32 %v46, %v61
    %v70 = vmul.f32 %v47, %v61
    %v71 = vmul.f32 %v48, %v61
    %v72 = vmul.f32 %v49, %v61
    %v73 = vmul.f32 %v50, %v61
    %v74 = vmul.f32 %v51, %v61
    %v75 = vmul.f32 %v52, %v61
    %v76 = vmul.f32 %v53, %v61
    %v77 = vmul.f32 %v54, %v61
    %v78 = vmul.f32 %v55, %v61
    %v79 = vld [vmem:[%s3] sm:$0x1]
    %v81 = vlaneseq
    %v82 = vshrl.u32 %v81, 7
    %v83 = vsub.s32 0, %v82
    %v84 = vrot.slane %v79, %v83
    %v86 = vadd.f32 %v63, %v84
    %v87 = vadd.f32 %v64, %v84
    %v88 = vadd.f32 %v65, %v84
    %v89 = vadd.f32 %v66, %v84
    %v90 = vadd.f32 %v67, %v84
    %v91 = vadd.f32 %v68, %v84
    %v92 = vadd.f32 %v69, %v84
    %v93 = vadd.f32 %v70, %v84
    %v94 = vadd.f32 %v71, %v84
    %v95 = vadd.f32 %v72, %v84
    %v96 = vadd.f32 %v73, %v84
    %v97 = vadd.f32 %v74, %v84
    %v98 = vadd.f32 %v75, %v84
    %v99 = vadd.f32 %v76, %v84
    %v100 = vadd.f32 %v77, %v84
    %v101 = vadd.f32 %v78, %v84
    %v102 = vld [vmem:[%s1] sm:$0xf]
    %v103 = vld [vmem:[%s1 + $0x4] sm:$0xf]
    %v104 = vld [vmem:[%s1 + $0x8] sm:$0xf]
    %v105 = vld [vmem:[%s1 + $0xc] sm:$0xf]
    %v106 = vld [vmem:[%s1 + $0x10] sm:$0xf]
    %v107 = vld [vmem:[%s1 + $0x14] sm:$0xf]
    %v108 = vld [vmem:[%s1 + $0x18] sm:$0xf]
    %v109 = vld [vmem:[%s1 + $0x1c] sm:$0xf]
    %v110 = vld [vmem:[%s1 + $0x20] sm:$0xf]
    %v111 = vld [vmem:[%s1 + $0x24] sm:$0xf]
    %v112 = vld [vmem:[%s1 + $0x28] sm:$0xf]
    %v113 = vld [vmem:[%s1 + $0x2c] sm:$0xf]
    %v114 = vld [vmem:[%s1 + $0x30] sm:$0xf]
    %v115 = vld [vmem:[%s1 + $0x34] sm:$0xf]
    %v116 = vld [vmem:[%s1 + $0x38] sm:$0xf]
    %v117 = vld [vmem:[%s1 + $0x3c] sm:$0xf]
    %v118 = vunpack.c.l.bf16 %v102
    %v119 = vunpack.c.l.bf16 %v103
    %v120 = vunpack.c.l.bf16 %v104
    %v121 = vunpack.c.l.bf16 %v105
    %v122 = vunpack.c.l.bf16 %v106
    %v123 = vunpack.c.l.bf16 %v107
    %v124 = vunpack.c.l.bf16 %v108
    %v125 = vunpack.c.l.bf16 %v109
    %v126 = vunpack.c.l.bf16 %v110
    %v127 = vunpack.c.l.bf16 %v111
    %v128 = vunpack.c.l.bf16 %v112
    %v129 = vunpack.c.l.bf16 %v113
    %v130 = vunpack.c.l.bf16 %v114
    %v131 = vunpack.c.l.bf16 %v115
    %v132 = vunpack.c.l.bf16 %v116
    %v133 = vunpack.c.l.bf16 %v117
    %v134 = vld [vmem:[%s4] sm:$0x1]
    %v136 = vlaneseq
    %v137 = vshrl.u32 %v136, 7
    %v138 = vsub.s32 0, %v137
    %v139 = vrot.slane %v134, %v138
    %v141 = vmul.f32 %v118, %v139
    %v142 = vmul.f32 %v119, %v139
    %v143 = vmul.f32 %v120, %v139
    %v144 = vmul.f32 %v121, %v139
    %v145 = vmul.f32 %v122, %v139
    %v146 = vmul.f32 %v123, %v139
    %v147 = vmul.f32 %v124, %v139
    %v148 = vmul.f32 %v125, %v139
    %v149 = vmul.f32 %v126, %v139
    %v150 = vmul.f32 %v127, %v139
    %v151 = vmul.f32 %v128, %v139
    %v152 = vmul.f32 %v129, %v139
    %v153 = vmul.f32 %v130, %v139
    %v154 = vmul.f32 %v131, %v139
    %v155 = vmul.f32 %v132, %v139
    %v156 = vmul.f32 %v133, %v139
    %v157 = vld [vmem:[%s5] sm:$0x1]
    %v159 = vlaneseq
    %v160 = vshrl.u32 %v159, 7
    %v161 = vsub.s32 0, %v160
    %v162 = vrot.slane %v157, %v161
    %v164 = vadd.f32 %v141, %v162
    %v165 = vadd.f32 %v142, %v162
    %v166 = vadd.f32 %v143, %v162
    %v167 = vadd.f32 %v144, %v162
    %v168 = vadd.f32 %v145, %v162
    %v169 = vadd.f32 %v146, %v162
    %v170 = vadd.f32 %v147, %v162
    %v171 = vadd.f32 %v148, %v162
    %v172 = vadd.f32 %v149, %v162
    %v173 = vadd.f32 %v150, %v162
    %v174 = vadd.f32 %v151, %v162
    %v175 = vadd.f32 %v152, %v162
    %v176 = vadd.f32 %v153, %v162
    %v177 = vadd.f32 %v154, %v162
    %v178 = vadd.f32 %v155, %v162
    %v179 = vadd.f32 %v156, %v162
    %v180 = vadd.f32 %v86, %v164
    %v181 = vadd.f32 %v87, %v165
    %v182 = vadd.f32 %v88, %v166
    %v183 = vadd.f32 %v89, %v167
    %v184 = vadd.f32 %v90, %v168
    %v185 = vadd.f32 %v91, %v169
    %v186 = vadd.f32 %v92, %v170
    %v187 = vadd.f32 %v93, %v171
    %v188 = vadd.f32 %v94, %v172
    %v189 = vadd.f32 %v95, %v173
    %v190 = vadd.f32 %v96, %v174
    %v191 = vadd.f32 %v97, %v175
    %v192 = vadd.f32 %v98, %v176
    %v193 = vadd.f32 %v99, %v177
    %v194 = vadd.f32 %v100, %v178
    %v195 = vadd.f32 %v101, %v179
    %v196 = vmax.f32 %v180, 0.0
    %v197 = vmax.f32 %v181, 0.0
    %v198 = vmax.f32 %v182, 0.0
    %v199 = vmax.f32 %v183, 0.0
    %v200 = vmax.f32 %v184, 0.0
    %v201 = vmax.f32 %v185, 0.0
    %v202 = vmax.f32 %v186, 0.0
    %v203 = vmax.f32 %v187, 0.0
    %v204 = vmax.f32 %v188, 0.0
    %v205 = vmax.f32 %v189, 0.0
    %v206 = vmax.f32 %v190, 0.0
    %v207 = vmax.f32 %v191, 0.0
    %v208 = vmax.f32 %v192, 0.0
    %v209 = vmax.f32 %v193, 0.0
    %v210 = vmax.f32 %v194, 0.0
    %v211 = vmax.f32 %v195, 0.0
    %212 = vst [vmem:[#allocation2] sm:$0xff] %v196
    %213 = vst [vmem:[#allocation2 + $0x8] sm:$0xff] %v197
    %214 = vst [vmem:[#allocation2 + $0x10] sm:$0xff] %v198
    %215 = vst [vmem:[#allocation2 + $0x18] sm:$0xff] %v199
    %216 = vst [vmem:[#allocation2 + $0x20] sm:$0xff] %v200
    %217 = vst [vmem:[#allocation2 + $0x28] sm:$0xff] %v201
    %218 = vst [vmem:[#allocation2 + $0x30] sm:$0xff] %v202
    %219 = vst [vmem:[#allocation2 + $0x38] sm:$0xff] %v203
    %220 = vst [vmem:[#allocation2 + $0x40] sm:$0xff] %v204
    %221 = vst [vmem:[#allocation2 + $0x48] sm:$0xff] %v205
    %222 = vst [vmem:[#allocation2 + $0x50] sm:$0xff] %v206
    %223 = vst [vmem:[#allocation2 + $0x58] sm:$0xff] %v207
    %224 = vst [vmem:[#allocation2 + $0x60] sm:$0xff] %v208
    %225 = vst [vmem:[#allocation2 + $0x68] sm:$0xff] %v209
    %226 = vst [vmem:[#allocation2 + $0x70] sm:$0xff] %v210
    %227 = vst [vmem:[#allocation2 + $0x78] sm:$0xff] %v211
    // Predicated region
    $region26: #{bottleneck_forward.7} parent=1 // pred_check
      _
    $region27: #{bottleneck_forward.7} parent=1 // pred_check_branch
      %229 = sbr.rel (0) target = $region29
    $region28: #{bottleneck_forward.7} parent=1 // pred_region
      %s231 = ssub.s32 2048, 2048
      %232 = vsyncadd [#allocation3], %s231
      %s233 = sshll.u32 [#allocation2], 4
      %s234 = int_to_ptr.vmem [resolvable:$true] %s233
      %239 = dma.vmem_to_hbm [thread:$0]  %s234, 2048, %s6, [#allocation3], 128, 128, 8
    $region29: #{bottleneck_forward.7} parent=1 // pred_fallthru
      _
    // Predicated region
    $region30: #{bottleneck_forward.7} parent=1 // pred_check
      _
    $region31: #{bottleneck_forward.7} parent=1 // pred_check_branch
      %241 = sbr.rel (0) target = $region33
    $region32: #{bottleneck_forward.7} parent=1 // pred_region
      %242 = dma.done [#allocation3], 2048
    $region33: #{bottleneck_forward.7} parent=1 // pred_fallthru
      _
    %243 = vsyncpa [#allocation3], 1

// kernel: bottleneck_forward.6
$region0: #{bottleneck_forward.6}
  #allocation0 [shape = 'u32[]', space=smem, size = 0x4, offset = 0x4, fixed_abs, tag = 'smem constant byte address 0x4 - core index']
  #allocation1 [shape = 'u32[144,128]{1,0:T(1,128)}', space=vmem, size = 0x12000, scoped, tag = 'internal scratch']
  %s0 = inlined_call_operand.vmem [shape: bf16[128,128], index: 0, kind: input, shape index: {}]
  %s1 = inlined_call_operand.vmem [shape: f32[1,128], index: 1, kind: input, shape index: {}]
  %s2 = inlined_call_operand.vmem [shape: f32[1,128], index: 2, kind: input, shape index: {}]
  %s3 = inlined_call_operand.vmem [shape: bf16[128,128], index: 3, kind: input, shape index: {}]
  %s4 = inlined_call_operand.vmem [shape: bf16[128,128], index: 4, kind: output, shape index: {0}]
  %s5 = inlined_call_operand.vmem [shape: f32[1,2,128], index: 5, kind: output, shape index: {1}]
  %6 = xla_tuple %s4, %s5
  %s7 = sld [smem:[#allocation0]]
  $region34: #{bottleneck_forward.6} parent=0
    _
  %s9 = ssub.s32 1, %s7
  %s10 = scalar_select 0, %s9, %s7
  // Predicated region
  $region2: #{bottleneck_forward.6} parent=0 // pred_check
    _
  $region3: #{bottleneck_forward.6} parent=0 // pred_check_branch
    %12 = sbr.rel (0) target = $region5
  $region4: #{bottleneck_forward.6} parent=0 // pred_region
    _
  $region5: #{bottleneck_forward.6} parent=0 // pred_fallthru
    _
  // Predicated region
  $region6: #{bottleneck_forward.6} parent=0 // pred_check
    _
  $region7: #{bottleneck_forward.6} parent=0 // pred_check_branch
    %14 = sbr.rel (0) target = $region9
  $region8: #{bottleneck_forward.6} parent=0 // pred_region
    _
  $region9: #{bottleneck_forward.6} parent=0 // pred_fallthru
    _
  // Predicated region
  $region10: #{bottleneck_forward.6} parent=0 // pred_check
    _
  $region11: #{bottleneck_forward.6} parent=0 // pred_check_branch
    %16 = sbr.rel (0) target = $region13
  $region12: #{bottleneck_forward.6} parent=0 // pred_region
    _
  $region13: #{bottleneck_forward.6} parent=0 // pred_fallthru
    _
  // Predicated region
  $region14: #{bottleneck_forward.6} parent=0 // pred_check
    _
  $region15: #{bottleneck_forward.6} parent=0 // pred_check_branch
    %18 = sbr.rel (0) target = $region17
  $region16: #{bottleneck_forward.6} parent=0 // pred_region
    _
  $region17: #{bottleneck_forward.6} parent=0 // pred_fallthru
    _
  %v20 = vld [vmem:[%s0] sm:$0xf]
  %v21 = vld [vmem:[%s0 + $0x4] sm:$0xf]
  %v22 = vld [vmem:[%s0 + $0x8] sm:$0xf]
  %v23 = vld [vmem:[%s0 + $0xc] sm:$0xf]
  %v24 = vld [vmem:[%s0 + $0x10] sm:$0xf]
  %v25 = vld [vmem:[%s0 + $0x14] sm:$0xf]
  %v26 = vld [vmem:[%s0 + $0x18] sm:$0xf]
  %v27 = vld [vmem:[%s0 + $0x1c] sm:$0xf]
  %v28 = vld [vmem:[%s0 + $0x20] sm:$0xf]
  %v29 = vld [vmem:[%s0 + $0x24] sm:$0xf]
  %v30 = vld [vmem:[%s0 + $0x28] sm:$0xf]
  %v31 = vld [vmem:[%s0 + $0x2c] sm:$0xf]
  %v32 = vld [vmem:[%s0 + $0x30] sm:$0xf]
  %v33 = vld [vmem:[%s0 + $0x34] sm:$0xf]
  %v34 = vld [vmem:[%s0 + $0x38] sm:$0xf]
  %v35 = vld [vmem:[%s0 + $0x3c] sm:$0xf]
  %v36 = vunpack.c.l.bf16 %v20
  %v37 = vunpack.c.l.bf16 %v21
  %v38 = vunpack.c.l.bf16 %v22
  %v39 = vunpack.c.l.bf16 %v23
  %v40 = vunpack.c.l.bf16 %v24
  %v41 = vunpack.c.l.bf16 %v25
  %v42 = vunpack.c.l.bf16 %v26
  %v43 = vunpack.c.l.bf16 %v27
  %v44 = vunpack.c.l.bf16 %v28
  %v45 = vunpack.c.l.bf16 %v29
  %v46 = vunpack.c.l.bf16 %v30
  %v47 = vunpack.c.l.bf16 %v31
  %v48 = vunpack.c.l.bf16 %v32
  %v49 = vunpack.c.l.bf16 %v33
  %v50 = vunpack.c.l.bf16 %v34
  %v51 = vunpack.c.l.bf16 %v35
  %v52 = vld [vmem:[%s1] sm:$0x1]
  %v54 = vlaneseq
  %v55 = vshrl.u32 %v54, 7
  %v56 = vsub.s32 0, %v55
  %v57 = vrot.slane %v52, %v56
  %v59 = vmul.f32 %v36, %v57
  %v60 = vmul.f32 %v37, %v57
  %v61 = vmul.f32 %v38, %v57
  %v62 = vmul.f32 %v39, %v57
  %v63 = vmul.f32 %v40, %v57
  %v64 = vmul.f32 %v41, %v57
  %v65 = vmul.f32 %v42, %v57
  %v66 = vmul.f32 %v43, %v57
  %v67 = vmul.f32 %v44, %v57
  %v68 = vmul.f32 %v45, %v57
  %v69 = vmul.f32 %v46, %v57
  %v70 = vmul.f32 %v47, %v57
  %v71 = vmul.f32 %v48, %v57
  %v72 = vmul.f32 %v49, %v57
  %v73 = vmul.f32 %v50, %v57
  %v74 = vmul.f32 %v51, %v57
  %v75 = vld [vmem:[%s2] sm:$0x1]
  %v77 = vlaneseq
  %v78 = vshrl.u32 %v77, 7
  %v79 = vsub.s32 0, %v78
  %v80 = vrot.slane %v75, %v79
  %v82 = vadd.f32 %v59, %v80
  %v83 = vadd.f32 %v60, %v80
  %v84 = vadd.f32 %v61, %v80
  %v85 = vadd.f32 %v62, %v80
  %v86 = vadd.f32 %v63, %v80
  %v87 = vadd.f32 %v64, %v80
  %v88 = vadd.f32 %v65, %v80
  %v89 = vadd.f32 %v66, %v80
  %v90 = vadd.f32 %v67, %v80
  %v91 = vadd.f32 %v68, %v80
  %v92 = vadd.f32 %v69, %v80
  %v93 = vadd.f32 %v70, %v80
  %v94 = vadd.f32 %v71, %v80
  %v95 = vadd.f32 %v72, %v80
  %v96 = vadd.f32 %v73, %v80
  %v97 = vadd.f32 %v74, %v80
  %v98 = vmax.f32 %v82, 0.0
  %v99 = vmax.f32 %v83, 0.0
  %v100 = vmax.f32 %v84, 0.0
  %v101 = vmax.f32 %v85, 0.0
  %v102 = vmax.f32 %v86, 0.0
  %v103 = vmax.f32 %v87, 0.0
  %v104 = vmax.f32 %v88, 0.0
  %v105 = vmax.f32 %v89, 0.0
  %v106 = vmax.f32 %v90, 0.0
  %v107 = vmax.f32 %v91, 0.0
  %v108 = vmax.f32 %v92, 0.0
  %v109 = vmax.f32 %v93, 0.0
  %v110 = vmax.f32 %v94, 0.0
  %v111 = vmax.f32 %v95, 0.0
  %v112 = vmax.f32 %v96, 0.0
  %v113 = vmax.f32 %v97, 0.0
  %v114 = vpack.c.bf16 %v99, %v98
  %v115 = vpack.c.bf16 %v101, %v100
  %v116 = vpack.c.bf16 %v103, %v102
  %v117 = vpack.c.bf16 %v105, %v104
  %v118 = vpack.c.bf16 %v107, %v106
  %v119 = vpack.c.bf16 %v109, %v108
  %v120 = vpack.c.bf16 %v111, %v110
  %v121 = vpack.c.bf16 %v113, %v112
  %v122 = vld [vmem:[%s3] sm:$0xf]
  %v123 = vld [vmem:[%s3 + $0x4] sm:$0xf]
  %v124 = vld [vmem:[%s3 + $0x8] sm:$0xf]
  %v125 = vld [vmem:[%s3 + $0xc] sm:$0xf]
  %v126 = vld [vmem:[%s3 + $0x10] sm:$0xf]
  %v127 = vld [vmem:[%s3 + $0x14] sm:$0xf]
  %v128 = vld [vmem:[%s3 + $0x18] sm:$0xf]
  %v129 = vld [vmem:[%s3 + $0x1c] sm:$0xf]
  %v130 = vld [vmem:[%s3 + $0x20] sm:$0xf]
  %v131 = vld [vmem:[%s3 + $0x24] sm:$0xf]
  %v132 = vld [vmem:[%s3 + $0x28] sm:$0xf]
  %v133 = vld [vmem:[%s3 + $0x2c] sm:$0xf]
  %v134 = vld [vmem:[%s3 + $0x30] sm:$0xf]
  %v135 = vld [vmem:[%s3 + $0x34] sm:$0xf]
  %v136 = vld [vmem:[%s3 + $0x38] sm:$0xf]
  %v137 = vld [vmem:[%s3 + $0x3c] sm:$0xf]
  %v154 = vunpack.c.l.b16 %v122
  %v155 = vunpack.c.l.b16 %v123
  %v156 = vunpack.c.l.b16 %v124
  %v157 = vunpack.c.l.b16 %v125
  %v158 = vunpack.c.l.b16 %v126
  %v159 = vunpack.c.l.b16 %v127
  %v160 = vunpack.c.l.b16 %v128
  %v161 = vunpack.c.l.b16 %v129
  %v162 = vunpack.c.l.b16 %v130
  %v163 = vunpack.c.l.b16 %v131
  %v164 = vunpack.c.l.b16 %v132
  %v165 = vunpack.c.l.b16 %v133
  %v166 = vunpack.c.l.b16 %v134
  %v167 = vunpack.c.l.b16 %v135
  %v168 = vunpack.c.l.b16 %v136
  %v169 = vunpack.c.l.b16 %v137
  %v170 = vpack.c.b16 %v155, %v154
  %v171 = vpack.c.b16 %v157, %v156
  %v172 = vpack.c.b16 %v159, %v158
  %v173 = vpack.c.b16 %v161, %v160
  %v174 = vpack.c.b16 %v163, %v162
  %v175 = vpack.c.b16 %v165, %v164
  %v176 = vpack.c.b16 %v167, %v166
  %v177 = vpack.c.b16 %v169, %v168
  %186 = vmatprep.subr.bf16.mxu0 0
  %187 = vmatpush1.bf16.msra.mxu0 %v177
  %188 = vmatprep.subr.bf16.mxu0 0
  %189 = vmatpush1.bf16.msra.mxu0 %v176
  %190 = vmatprep.subr.bf16.mxu0 0
  %191 = vmatpush1.bf16.msra.mxu0 %v175
  %192 = vmatprep.subr.bf16.mxu0 0
  %193 = vmatpush1.bf16.msra.mxu0 %v174
  %194 = vmatprep.subr.bf16.mxu0 0
  %195 = vmatpush1.bf16.msra.mxu0 %v173
  %196 = vmatprep.subr.bf16.mxu0 0
  %197 = vmatpush1.bf16.msra.mxu0 %v172
  %198 = vmatprep.subr.bf16.mxu0 0
  %199 = vmatpush1.bf16.msra.mxu0 %v171
  %200 = vmatprep.subr.bf16.mxu0 0
  %201 = vmatpush1.bf16.msra.mxu0 %v170
  %202 = vmatprep.subr.bf16.mxu0 0
  %203 = vmatpush2.bf16.msra.mxu0 0
  %204 = vmatprep.subr.bf16.mxu0 0
  %205 = vmatpush2.bf16.msra.mxu0 0
  %206 = vmatprep.subr.bf16.mxu0 0
  %207 = vmatpush2.bf16.msra.mxu0 0
  %208 = vmatprep.subr.bf16.mxu0 0
  %209 = vmatpush2.bf16.msra.mxu0 0
  %210 = vmatprep.subr.bf16.mxu0 0
  %211 = vmatpush2.bf16.msra.mxu0 0
  %212 = vmatprep.subr.bf16.mxu0 0
  %213 = vmatpush2.bf16.msra.mxu0 0
  %214 = vmatprep.subr.bf16.mxu0 0
  %215 = vmatpush2.bf16.msra.mxu0 0
  %216 = vmatprep.subr.bf16.mxu0 0
  %217 = vmatpush2.bf16.msra.mxu0 0
  %218 = vmatprep.mubr.bf16.mxu0 0
  %219 = vmatmul.mubr.bf16.gmra.mxu0 %v114
  %v220 = vpop.f32.mrf.mxu0
  %v221 = vadd.f32 0.0, %v220
  %v222 = vpop.f32.mrf.mxu0
  %v223 = vpop.f32.mrf.mxu0
  %v224 = vadd.f32 0.0, %v223
  %v225 = vpop.f32.mrf.mxu0
  %226 = vmatprep.mubr.bf16.mxu0 0
  %227 = vmatmul.mubr.bf16.gmra.mxu0 %v115
  %v228 = vpop.f32.mrf.mxu0
  %v229 = vadd.f32 0.0, %v228
  %v230 = vpop.f32.mrf.mxu0
  %v231 = vpop.f32.mrf.mxu0
  %v232 = vadd.f32 0.0, %v231
  %v233 = vpop.f32.mrf.mxu0
  %234 = vmatprep.mubr.bf16.mxu0 0
  %235 = vmatmul.mubr.bf16.gmra.mxu0 %v116
  %v236 = vpop.f32.mrf.mxu0
  %v237 = vadd.f32 0.0, %v236
  %v238 = vpop.f32.mrf.mxu0
  %v239 = vpop.f32.mrf.mxu0
  %v240 = vadd.f32 0.0, %v239
  %v241 = vpop.f32.mrf.mxu0
  %242 = vmatprep.mubr.bf16.mxu0 0
  %243 = vmatmul.mubr.bf16.gmra.mxu0 %v117
  %v244 = vpop.f32.mrf.mxu0
  %v245 = vadd.f32 0.0, %v244
  %v246 = vpop.f32.mrf.mxu0
  %v247 = vpop.f32.mrf.mxu0
  %v248 = vadd.f32 0.0, %v247
  %v249 = vpop.f32.mrf.mxu0
  %250 = vmatprep.mubr.bf16.mxu0 0
  %251 = vmatmul.mubr.bf16.gmra.mxu0 %v118
  %v252 = vpop.f32.mrf.mxu0
  %v253 = vadd.f32 0.0, %v252
  %v254 = vpop.f32.mrf.mxu0
  %v255 = vpop.f32.mrf.mxu0
  %v256 = vadd.f32 0.0, %v255
  %v257 = vpop.f32.mrf.mxu0
  %258 = vmatprep.mubr.bf16.mxu0 0
  %259 = vmatmul.mubr.bf16.gmra.mxu0 %v119
  %v260 = vpop.f32.mrf.mxu0
  %v261 = vadd.f32 0.0, %v260
  %v262 = vpop.f32.mrf.mxu0
  %v263 = vpop.f32.mrf.mxu0
  %v264 = vadd.f32 0.0, %v263
  %v265 = vpop.f32.mrf.mxu0
  %266 = vmatprep.mubr.bf16.mxu0 0
  %267 = vmatmul.mubr.bf16.gmra.mxu0 %v120
  %v268 = vpop.f32.mrf.mxu0
  %v269 = vadd.f32 0.0, %v268
  %v270 = vpop.f32.mrf.mxu0
  %v271 = vpop.f32.mrf.mxu0
  %v272 = vadd.f32 0.0, %v271
  %v273 = vpop.f32.mrf.mxu0
  %274 = vmatprep.mubr.bf16.mxu0 0
  %275 = vmatmul.mubr.bf16.gmra.mxu0 %v121
  %v276 = vpop.f32.mrf.mxu0
  %v277 = vadd.f32 0.0, %v276
  %v278 = vpop.f32.mrf.mxu0
  %v279 = vpop.f32.mrf.mxu0
  %v280 = vadd.f32 0.0, %v279
  %v281 = vpop.f32.mrf.mxu0
  %282 = vdwg.mxu0
  %v283 = vpack.c.bf16 %v224, %v221
  %v284 = vpack.c.bf16 %v232, %v229
  %v285 = vpack.c.bf16 %v240, %v237
  %v286 = vpack.c.bf16 %v248, %v245
  %v287 = vpack.c.bf16 %v256, %v253
  %v288 = vpack.c.bf16 %v264, %v261
  %v289 = vpack.c.bf16 %v272, %v269
  %v290 = vpack.c.bf16 %v280, %v277
  %v299 = vunpack.c.l.b16 %v283
  %v300 = vunpack.c.h.b16 %v283
  %v301 = vunpack.c.l.b16 %v284
  %v302 = vunpack.c.h.b16 %v284
  %v303 = vunpack.c.l.b16 %v285
  %v304 = vunpack.c.h.b16 %v285
  %v305 = vunpack.c.l.b16 %v286
  %v306 = vunpack.c.h.b16 %v286
  %v307 = vunpack.c.l.b16 %v287
  %v308 = vunpack.c.h.b16 %v287
  %v309 = vunpack.c.l.b16 %v288
  %v310 = vunpack.c.h.b16 %v288
  %v311 = vunpack.c.l.b16 %v289
  %v312 = vunpack.c.h.b16 %v289
  %v313 = vunpack.c.l.b16 %v290
  %v314 = vunpack.c.h.b16 %v290
  %v315 = vpack.c.b16 %v299, %v299
  %v316 = vpack.c.b16 %v300, %v300
  %v317 = vpack.c.b16 %v301, %v301
  %v318 = vpack.c.b16 %v302, %v302
  %v319 = vpack.c.b16 %v303, %v303
  %v320 = vpack.c.b16 %v304, %v304
  %v321 = vpack.c.b16 %v305, %v305
  %v322 = vpack.c.b16 %v306, %v306
  %v323 = vpack.c.b16 %v307, %v307
  %v324 = vpack.c.b16 %v308, %v308
  %v325 = vpack.c.b16 %v309, %v309
  %v326 = vpack.c.b16 %v310, %v310
  %v327 = vpack.c.b16 %v311, %v311
  %v328 = vpack.c.b16 %v312, %v312
  %v329 = vpack.c.b16 %v313, %v313
  %v330 = vpack.c.b16 %v314, %v314
  %347 = vst [vmem:[%s4] sm:$0xf] %v315
  %348 = vst [vmem:[%s4 + $0x4] sm:$0xf] %v316
  %349 = vst [vmem:[%s4 + $0x8] sm:$0xf] %v317
  %350 = vst [vmem:[%s4 + $0xc] sm:$0xf] %v318
  %351 = vst [vmem:[%s4 + $0x10] sm:$0xf] %v319
  %352 = vst [vmem:[%s4 + $0x14] sm:$0xf] %v320
  %353 = vst [vmem:[%s4 + $0x18] sm:$0xf] %v321
  %354 = vst [vmem:[%s4 + $0x1c] sm:$0xf] %v322
  %355 = vst [vmem:[%s4 + $0x20] sm:$0xf] %v323
  %356 = vst [vmem:[%s4 + $0x24] sm:$0xf] %v324
  %357 = vst [vmem:[%s4 + $0x28] sm:$0xf] %v325
  %358 = vst [vmem:[%s4 + $0x2c] sm:$0xf] %v326
  %359 = vst [vmem:[%s4 + $0x30] sm:$0xf] %v327
  %360 = vst [vmem:[%s4 + $0x34] sm:$0xf] %v328
  %361 = vst [vmem:[%s4 + $0x38] sm:$0xf] %v329
  %362 = vst [vmem:[%s4 + $0x3c] sm:$0xf] %v330
  %v363 = vadd.f32 %v221, %v224
  %v364 = vadd.f32 %v363, %v229
  %v365 = vadd.f32 %v364, %v232
  %v366 = vadd.f32 %v365, %v237
  %v367 = vadd.f32 %v366, %v240
  %v368 = vadd.f32 %v367, %v245
  %v369 = vadd.f32 %v368, %v248
  %v370 = vadd.f32 %v369, %v253
  %v371 = vadd.f32 %v370, %v256
  %v372 = vadd.f32 %v371, %v261
  %v373 = vadd.f32 %v372, %v264
  %v374 = vadd.f32 %v373, %v269
  %v375 = vadd.f32 %v374, %v272
  %v376 = vadd.f32 %v375, %v277
  %v377 = vadd.f32 %v376, %v280
  %v378 = vrot.slane %v377, 4
  %v379 = vadd.f32 %v377, %v378
  %v380 = vrot.slane %v379, 2
  %v381 = vadd.f32 %v379, %v380
  %v382 = vrot.slane %v381, 1
  %v383 = vadd.f32 %v381, %v382
  %v384 = vrcp.pop 128.0
  %v385 = vmul.f32 %v383, %v384
  %v386 = vsub.f32 %v221, %v385
  %v387 = vsub.f32 %v224, %v385
  %v388 = vsub.f32 %v229, %v385
  %v389 = vsub.f32 %v232, %v385
  %v390 = vsub.f32 %v237, %v385
  %v391 = vsub.f32 %v240, %v385
  %v392 = vsub.f32 %v245, %v385
  %v393 = vsub.f32 %v248, %v385
  %v394 = vsub.f32 %v253, %v385
  %v395 = vsub.f32 %v256, %v385
  %v396 = vsub.f32 %v261, %v385
  %v397 = vsub.f32 %v264, %v385
  %v398 = vsub.f32 %v269, %v385
  %v399 = vsub.f32 %v272, %v385
  %v400 = vsub.f32 %v277, %v385
  %v401 = vsub.f32 %v280, %v385
  %v402 = vmul.f32 %v386, %v386
  %v403 = vmul.f32 %v387, %v387
  %v404 = vmul.f32 %v388, %v388
  %v405 = vmul.f32 %v389, %v389
  %v406 = vmul.f32 %v390, %v390
  %v407 = vmul.f32 %v391, %v391
  %v408 = vmul.f32 %v392, %v392
  %v409 = vmul.f32 %v393, %v393
  %v410 = vmul.f32 %v394, %v394
  %v411 = vmul.f32 %v395, %v395
  %v412 = vmul.f32 %v396, %v396
  %v413 = vmul.f32 %v397, %v397
  %v414 = vmul.f32 %v398, %v398
  %v415 = vmul.f32 %v399, %v399
  %v416 = vmul.f32 %v400, %v400
  %v417 = vmul.f32 %v401, %v401
  %v418 = vadd.f32 %v402, %v403
  %v419 = vadd.f32 %v418, %v404
  %v420 = vadd.f32 %v419, %v405
  %v421 = vadd.f32 %v420, %v406
  %v422 = vadd.f32 %v421, %v407
  %v423 = vadd.f32 %v422, %v408
  %v424 = vadd.f32 %v423, %v409
  %v425 = vadd.f32 %v424, %v410
  %v426 = vadd.f32 %v425, %v411
  %v427 = vadd.f32 %v426, %v412
  %v428 = vadd.f32 %v427, %v413
  %v429 = vadd.f32 %v428, %v414
  %v430 = vadd.f32 %v429, %v415
  %v431 = vadd.f32 %v430, %v416
  %v432 = vadd.f32 %v431, %v417
  %v433 = vrot.slane %v432, 4
  %v434 = vadd.f32 %v432, %v433
  %v435 = vrot.slane %v434, 2
  %v436 = vadd.f32 %v434, %v435
  %v437 = vrot.slane %v436, 1
  %v438 = vadd.f32 %v436, %v437
  %439 = vst [vmem:[%s5] sm:$0x1] %v385
  %440 = vst [vmem:[%s5 + $0x1] sm:$0x1] %v438
  // Predicated region
  $region18: #{bottleneck_forward.6} parent=0 // pred_check
    _
  $region19: #{bottleneck_forward.6} parent=0 // pred_check_branch
    %442 = sbr.rel (0) target = $region21
  $region20: #{bottleneck_forward.6} parent=0 // pred_region
    _
  $region21: #{bottleneck_forward.6} parent=0 // pred_fallthru
    _
  // Predicated region
  $region22: #{bottleneck_forward.6} parent=0 // pred_check
    _
  $region23: #{bottleneck_forward.6} parent=0 // pred_check_branch
    %444 = sbr.rel (0) target = $region25
  $region24: #{bottleneck_forward.6} parent=0 // pred_region
    _
  $region25: #{bottleneck_forward.6} parent=0 // pred_fallthru
    _
  // Predicated region
  $region26: #{bottleneck_forward.6} parent=0 // pred_check
    _
  $region27: #{bottleneck_forward.6} parent=0 // pred_check_branch
    %446 = sbr.rel (0) target = $region29
  $region28: #{bottleneck_forward.6} parent=0 // pred_region
    _
  $region29: #{bottleneck_forward.6} parent=0 // pred_fallthru
    _
  // Predicated region
  $region30: #{bottleneck_forward.6} parent=0 // pred_check
    _
  $region31: #{bottleneck_forward.6} parent=0 // pred_check_branch
    %448 = sbr.rel (0) target = $region33
  $region32: #{bottleneck_forward.6} parent=0 // pred_region
    _
  $region33: #{bottleneck_forward.6} parent=0 // pred_fallthru
    _

// kernel: bottleneck_forward.4
$region0: #{bottleneck_forward.4}
  #allocation0 [shape = 'u32[]', space=smem, size = 0x4, offset = 0x4, fixed_abs, tag = 'smem constant byte address 0x4 - core index']
  #allocation1 [shape = 'u32[144,128]{1,0:T(1,128)}', space=vmem, size = 0x12000, scoped, tag = 'internal scratch']
  %s0 = inlined_call_operand.vmem [shape: bf16[2,256,128], index: 0, kind: input, shape index: {}]
  %s1 = inlined_call_operand.vmem [shape: bf16[128,128], index: 1, kind: input, shape index: {}]
  %s2 = inlined_call_operand.vmem [shape: bf16[128,128], index: 2, kind: input, shape index: {}]
  %s3 = inlined_call_operand.vmem [shape: bf16[2,256,128], index: 3, kind: output, shape index: {0}]
  %s4 = inlined_call_operand.vmem [shape: f32[2,2,128], index: 4, kind: output, shape index: {1}]
  %s5 = inlined_call_operand.vmem [shape: bf16[2,64,128], index: 5, kind: output, shape index: {2}]
  %s6 = inlined_call_operand.vmem [shape: f32[2,2,128], index: 6, kind: output, shape index: {3}]
  %7 = xla_tuple %s3, %s4, %s5, %s6
  %s8 = sld [smem:[#allocation0]]
  $region69: #{bottleneck_forward.4} parent=0
    _
  %s10 = ssub.s32 1, %s8
  %s11 = scalar_select 0, %s10, %s8
  loop: start=0, step=1, limit=4
  $region2: #{bottleneck_forward.4} parent=0 // loop_pre_header
    _
  $region3: #{bottleneck_forward.4} parent=0 // loop_header
    %s13 = sphi 0, %s17
    %p14 = scmp.ge.s32.totalorder %s13, 4
    %s23 = sphi 0, %s25
    %s26 = sphi 0, %s23
    %s27 = sphi 0, %s26
    %s43 = sphi 0, %s27
    %s47 = sphi 0, %s47
    %s49 = sphi 0, %s47
    %s50 = sphi 0, %s49
    %s64 = sphi 0, %s50
    %s68 = sphi 0, %s68
    %s70 = sphi 0, %s68
    %s71 = sphi 0, %s70
    %s85 = sphi 0, %s71
    %s91 = sphi 0, %s93
    %s94 = sphi 0, %s91
    %s95 = sphi 0, %s94
    %s111 = sphi 0, %s95
    %s117 = sphi 0, %s119
    %s120 = sphi 0, %s117
    %s121 = sphi 0, %s120
    %s137 = sphi 0, %s121
    %s143 = sphi 0, %s145
    %s146 = sphi 0, %s143
    %s147 = sphi 0, %s146
    %s163 = sphi 0, %s147
    %s169 = sphi 0, %s171
    %s172 = sphi 0, %s169
    %s173 = sphi 0, %s172
    %s189 = sphi 0, %s173
  $region4: #{bottleneck_forward.4} parent=0 // loop_header_branch
    %16 = sbr.rel (%p14) target = $region8
  $region5: #{bottleneck_forward.4} parent=0 // loop_body
    %s18 = ssub.s32 %s13, 1
    %s19 = ssub.s32 %s13, 2
    %s20 = sadd.s32 %s13, 1
    %s21 = ssub.s32 %s13, %s20
    %p22 = scmp.eq.s32.totalorder %s21, 0
    %s24 = sadd.s32 %s23, 1
    %s25 = scalar_select %p22, %s23, %s24
    %p28 = pneg %p22
    %p29 = scmp.eq.s32.totalorder %s13, 1
    %p30 = por %p28, %p29
    %p31 = scmp.ne.s32.totalorder %s23, %s26
    %p32 = scmp.eq.s32.totalorder %s13, 0
    %p33 = por %p31, %p32
    %p34 = scmp.ne.s32.totalorder %s23, %s26
    %p35 = scmp.eq.s32.totalorder %s18, 1
    %p36 = por %p34, %p35
    %p37 = scmp.ne.s32.totalorder %s26, %s27
    %p38 = scmp.eq.s32.totalorder %s18, 0
    %p39 = por %p37, %p38
    %p40 = scmp.ne.s32.totalorder %s26, %s27
    %p41 = scmp.eq.s32.totalorder %s19, 1
    %p42 = por %p40, %p41
    %p44 = scmp.ne.s32.totalorder %s27, %s43
    %p45 = scmp.eq.s32.totalorder %s19, 0
    %p46 = por %p44, %p45
    %s48 = sadd.s32 %s47, 1
    %p51 = scmp.eq.s32.totalorder %s13, 1
    %p52 = scmp.ne.s32.totalorder %s47, %s49
    %p53 = scmp.eq.s32.totalorder %s13, 0
    %p54 = por %p52, %p53
    %p55 = scmp.ne.s32.totalorder %s47, %s49
    %p56 = scmp.eq.s32.totalorder %s18, 1
    %p57 = por %p55, %p56
    %p58 = scmp.ne.s32.totalorder %s49, %s50
    %p59 = scmp.eq.s32.totalorder %s18, 0
    %p60 = por %p58, %p59
    %p61 = scmp.ne.s32.totalorder %s49, %s50
    %p62 = scmp.eq.s32.totalorder %s19, 1
    %p63 = por %p61, %p62
    %p65 = scmp.ne.s32.totalorder %s50, %s64
    %p66 = scmp.eq.s32.totalorder %s19, 0
    %p67 = por %p65, %p66
    %s69 = sadd.s32 %s68, 1
    %p72 = scmp.eq.s32.totalorder %s13, 1
    %p73 = scmp.ne.s32.totalorder %s68, %s70
    %p74 = scmp.eq.s32.totalorder %s13, 0
    %p75 = por %p73, %p74
    %p76 = scmp.ne.s32.totalorder %s68, %s70
    %p77 = scmp.eq.s32.totalorder %s18, 1
    %p78 = por %p76, %p77
    %p79 = scmp.ne.s32.totalorder %s70, %s71
    %p80 = scmp.eq.s32.totalorder %s18, 0
    %p81 = por %p79, %p80
    %p82 = scmp.ne.s32.totalorder %s70, %s71
    %p83 = scmp.eq.s32.totalorder %s19, 1
    %p84 = por %p82, %p83
    %p86 = scmp.ne.s32.totalorder %s71, %s85
    %p87 = scmp.eq.s32.totalorder %s19, 0
    %p88 = por %p86, %p87
    %s89 = ssub.s32 %s13, %s20
    %p90 = scmp.eq.s32.totalorder %s89, 0
    %s92 = sadd.s32 %s91, 1
    %s93 = scalar_select %p90, %s91, %s92
    %p96 = pneg %p90
    %p97 = scmp.eq.s32.totalorder %s13, 1
    %p98 = por %p96, %p97
    %p99 = scmp.ne.s32.totalorder %s91, %s94
    %p100 = scmp.eq.s32.totalorder %s13, 0
    %p101 = por %p99, %p100
    %p102 = scmp.ne.s32.totalorder %s91, %s94
    %p103 = scmp.eq.s32.totalorder %s18, 1
    %p104 = por %p102, %p103
    %p105 = scmp.ne.s32.totalorder %s94, %s95
    %p106 = scmp.eq.s32.totalorder %s18, 0
    %p107 = por %p105, %p106
    %p108 = scmp.ne.s32.totalorder %s94, %s95
    %p109 = scmp.eq.s32.totalorder %s19, 1
    %p110 = por %p108, %p109
    %p112 = scmp.ne.s32.totalorder %s95, %s111
    %p113 = scmp.eq.s32.totalorder %s19, 0
    %p114 = por %p112, %p113
    %s115 = ssub.s32 %s13, %s20
    %p116 = scmp.eq.s32.totalorder %s115, 0
    %s118 = sadd.s32 %s117, 1
    %s119 = scalar_select %p116, %s117, %s118
    %p122 = pneg %p116
    %p123 = scmp.eq.s32.totalorder %s13, 1
    %p124 = por %p122, %p123
    %p125 = scmp.ne.s32.totalorder %s117, %s120
    %p126 = scmp.eq.s32.totalorder %s13, 0
    %p127 = por %p125, %p126
    %p128 = scmp.ne.s32.totalorder %s117, %s120
    %p129 = scmp.eq.s32.totalorder %s18, 1
    %p130 = por %p128, %p129
    %p131 = scmp.ne.s32.totalorder %s120, %s121
    %p132 = scmp.eq.s32.totalorder %s18, 0
    %p133 = por %p131, %p132
    %p134 = scmp.ne.s32.totalorder %s120, %s121
    %p135 = scmp.eq.s32.totalorder %s19, 1
    %p136 = por %p134, %p135
    %p138 = scmp.ne.s32.totalorder %s121, %s137
    %p139 = scmp.eq.s32.totalorder %s19, 0
    %p140 = por %p138, %p139
    %s141 = ssub.s32 %s13, %s20
    %p142 = scmp.eq.s32.totalorder %s141, 0
    %s144 = sadd.s32 %s143, 1
    %s145 = scalar_select %p142, %s143, %s144
    %p148 = pneg %p142
    %p149 = scmp.eq.s32.totalorder %s13, 1
    %p150 = por %p148, %p149
    %p151 = scmp.ne.s32.totalorder %s143, %s146
    %p152 = scmp.eq.s32.totalorder %s13, 0
    %p153 = por %p151, %p152
    %p154 = scmp.ne.s32.totalorder %s143, %s146
    %p155 = scmp.eq.s32.totalorder %s18, 1
    %p156 = por %p154, %p155
    %p157 = scmp.ne.s32.totalorder %s146, %s147
    %p158 = scmp.eq.s32.totalorder %s18, 0
    %p159 = por %p157, %p158
    %p160 = scmp.ne.s32.totalorder %s146, %s147
    %p161 = scmp.eq.s32.totalorder %s19, 1
    %p162 = por %p160, %p161
    %p164 = scmp.ne.s32.totalorder %s147, %s163
    %p165 = scmp.eq.s32.totalorder %s19, 0
    %p166 = por %p164, %p165
    %s167 = ssub.s32 %s13, %s20
    %p168 = scmp.eq.s32.totalorder %s167, 0
    %s170 = sadd.s32 %s169, 1
    %s171 = scalar_select %p168, %s169, %s170
    %p174 = pneg %p168
    %p175 = scmp.eq.s32.totalorder %s13, 1
    %p176 = por %p174, %p175
    %p177 = scmp.ne.s32.totalorder %s169, %s172
    %p178 = scmp.eq.s32.totalorder %s13, 0
    %p179 = por %p177, %p178
    %p180 = scmp.ne.s32.totalorder %s169, %s172
    %p181 = scmp.eq.s32.totalorder %s18, 1
    %p182 = por %p180, %p181
    %p183 = scmp.ne.s32.totalorder %s172, %s173
    %p184 = scmp.eq.s32.totalorder %s18, 0
    %p185 = por %p183, %p184
    %p186 = scmp.ne.s32.totalorder %s172, %s173
    %p187 = scmp.eq.s32.totalorder %s19, 1
    %p188 = por %p186, %p187
    %p190 = scmp.ne.s32.totalorder %s173, %s189
    %p191 = scmp.eq.s32.totalorder %s19, 0
    %p192 = por %p190, %p191
    %p193 = scmp.le.s32.totalorder 1, %s13
    %p194 = scmp.lt.s32.totalorder %s13, 3
    %p195 = pnand %p193, %p194
    %p196 = pneg %p195
    // Predicated region
    $region9: #{bottleneck_forward.4} parent=5 // pred_check
      _
    $region10: #{bottleneck_forward.4} parent=5 // pred_check_branch
      %198 = sbr.rel (%p195) target = $region12
    $region11: #{bottleneck_forward.4} parent=5 // pred_region
      %s199 = ssub.s32 %s13, 1
      // Predicated region
      $region13: #{bottleneck_forward.4} parent=11 // pred_check
        %p200 = pneg %p60
      $region14: #{bottleneck_forward.4} parent=11 // pred_check_branch
        %202 = sbr.rel (%p200) target = $region16
      $region15: #{bottleneck_forward.4} parent=11 // pred_region
        _
      $region16: #{bottleneck_forward.4} parent=11 // pred_fallthru
        _
      // Predicated region
      $region17: #{bottleneck_forward.4} parent=11 // pred_check
        %p203 = pneg %p81
      $region18: #{bottleneck_forward.4} parent=11 // pred_check_branch
        %205 = sbr.rel (%p203) target = $region20
      $region19: #{bottleneck_forward.4} parent=11 // pred_region
        _
      $region20: #{bottleneck_forward.4} parent=11 // pred_fallthru
        _
    $region12: #{bottleneck_forward.4} parent=5 // pred_fallthru
      _
    %p206 = scmp.lt.s32.totalorder %s13, 2
    // Predicated region
    $region21: #{bottleneck_forward.4} parent=5 // pred_check
      %p207 = pneg %p206
    $region22: #{bottleneck_forward.4} parent=5 // pred_check_branch
      %209 = sbr.rel (%p207) target = $region24
    $region23: #{bottleneck_forward.4} parent=5 // pred_region
      // Predicated region
      $region25: #{bottleneck_forward.4} parent=23 // pred_check
        %p210 = pneg %p33
      $region26: #{bottleneck_forward.4} parent=23 // pred_check_branch
        %212 = sbr.rel (%p210) target = $region28
      $region27: #{bottleneck_forward.4} parent=23 // pred_region
        %p213 = scmp.lt.s32.totalorder %s13, 1
        %s214 = scalar_select %p213, %s13, 1
        %s215 = smul.addr %s214, 32
        %s216 = smul.addr %s215, 4
        %s217 = scalar_lea.vmem %s0, %s216
      $region28: #{bottleneck_forward.4} parent=23 // pred_fallthru
        _
    $region24: #{bottleneck_forward.4} parent=5 // pred_fallthru
      _
    %p218 = scmp.le.s32.totalorder 1, %s13
    %p219 = scmp.lt.s32.totalorder %s13, 3
    %p220 = pnand %p218, %p219
    %p221 = pneg %p220
    // Predicated region
    $region29: #{bottleneck_forward.4} parent=5 // pred_check
      _
    $region30: #{bottleneck_forward.4} parent=5 // pred_check_branch
      %223 = sbr.rel (%p220) target = $region32
    $region31: #{bottleneck_forward.4} parent=5 // pred_region
      %s224 = ssub.s32 %s13, 1
      %p225 = scmp.lt.s32.totalorder %s18, 1
      %s226 = scalar_select %p225, %s18, 1
      %s227 = smul.addr %s226, 32
      %s228 = smul.addr %s227, 4
      %s229 = scalar_lea.vmem %s0, %s228
      %p230 = pneg %p39
      %p231 = pneg %p36
      %p232 = pneg %p60
      %p233 = pneg %p57
      %p234 = pneg %p81
      %p235 = pneg %p78
      %p236 = pneg %p107
      %p237 = pneg %p104
      %p238 = scmp.lt.s32.totalorder %s18, 1
      %s239 = scalar_select %p238, %s18, 1
      %s240 = smul.addr %s239, 32
      %s241 = smul.addr %s240, 4
      %s242 = scalar_lea.vmem %s3, %s241
      %p243 = pneg %p133
      %p244 = pneg %p130
      %p245 = scmp.lt.s32.totalorder %s18, 1
      %s246 = scalar_select %p245, %s18, 1
      %s247 = smul.addr %s246, 2
      %s248 = scalar_lea.vmem %s4, %s247
      %p249 = pneg %p159
      %p250 = pneg %p156
      %p251 = scmp.lt.s32.totalorder %s18, 1
      %s252 = scalar_select %p251, %s18, 1
      %s253 = smul.addr %s252, 8
      %s254 = smul.addr %s253, 4
      %s255 = scalar_lea.vmem %s5, %s254
      %p256 = pneg %p185
      %p257 = pneg %p182
      %p258 = scmp.lt.s32.totalorder %s18, 1
      %s259 = scalar_select %p258, %s18, 1
      %s260 = smul.addr %s259, 2
      %s261 = scalar_lea.vmem %s6, %s260
      %p262 = scmp.lt.s32.totalorder %s18, 1
      %s263 = scalar_select %p262, %s18, 1
      %s264 = smul.addr %s263, 32
      %s265 = smul.addr %s264, 4
      %s266 = scalar_lea.vmem %s0, %s265
      %p267 = scmp.lt.s32.totalorder %s18, 1
      %s268 = scalar_select %p267, %s18, 1
      %s269 = smul.addr %s268, 32
      %s270 = smul.addr %s269, 4
      %s271 = scalar_lea.vmem %s3, %s270
      %p272 = scmp.lt.s32.totalorder %s18, 1
      %s273 = scalar_select %p272, %s18, 1
      %s274 = smul.addr %s273, 2
      %s275 = scalar_lea.vmem %s4, %s274
      %p276 = scmp.lt.s32.totalorder %s18, 1
      %s277 = scalar_select %p276, %s18, 1
      %s278 = smul.addr %s277, 8
      %s279 = smul.addr %s278, 4
      %s280 = scalar_lea.vmem %s5, %s279
      %p281 = scmp.lt.s32.totalorder %s18, 1
      %s282 = scalar_select %p281, %s18, 1
      %s283 = smul.addr %s282, 2
      %s284 = scalar_lea.vmem %s6, %s283
      %v286 = vld [vmem:[%s266] sm:$0xf]
      %v287 = vld [vmem:[%s266 + $0x4] sm:$0xf]
      %v288 = vld [vmem:[%s266 + $0x8] sm:$0xf]
      %v289 = vld [vmem:[%s266 + $0xc] sm:$0xf]
      %v290 = vld [vmem:[%s266 + $0x10] sm:$0xf]
      %v291 = vld [vmem:[%s266 + $0x14] sm:$0xf]
      %v292 = vld [vmem:[%s266 + $0x18] sm:$0xf]
      %v293 = vld [vmem:[%s266 + $0x1c] sm:$0xf]
      %v294 = vld [vmem:[%s266 + $0x20] sm:$0xf]
      %v295 = vld [vmem:[%s266 + $0x24] sm:$0xf]
      %v296 = vld [vmem:[%s266 + $0x28] sm:$0xf]
      %v297 = vld [vmem:[%s266 + $0x2c] sm:$0xf]
      %v298 = vld [vmem:[%s266 + $0x30] sm:$0xf]
      %v299 = vld [vmem:[%s266 + $0x34] sm:$0xf]
      %v300 = vld [vmem:[%s266 + $0x38] sm:$0xf]
      %v301 = vld [vmem:[%s266 + $0x3c] sm:$0xf]
      %v302 = vld [vmem:[%s266 + $0x40] sm:$0xf]
      %v303 = vld [vmem:[%s266 + $0x44] sm:$0xf]
      %v304 = vld [vmem:[%s266 + $0x48] sm:$0xf]
      %v305 = vld [vmem:[%s266 + $0x4c] sm:$0xf]
      %v306 = vld [vmem:[%s266 + $0x50] sm:$0xf]
      %v307 = vld [vmem:[%s266 + $0x54] sm:$0xf]
      %v308 = vld [vmem:[%s266 + $0x58] sm:$0xf]
      %v309 = vld [vmem:[%s266 + $0x5c] sm:$0xf]
      %v310 = vld [vmem:[%s266 + $0x60] sm:$0xf]
      %v311 = vld [vmem:[%s266 + $0x64] sm:$0xf]
      %v312 = vld [vmem:[%s266 + $0x68] sm:$0xf]
      %v313 = vld [vmem:[%s266 + $0x6c] sm:$0xf]
      %v314 = vld [vmem:[%s266 + $0x70] sm:$0xf]
      %v315 = vld [vmem:[%s266 + $0x74] sm:$0xf]
      %v316 = vld [vmem:[%s266 + $0x78] sm:$0xf]
      %v317 = vld [vmem:[%s266 + $0x7c] sm:$0xf]
      %v318 = vld [vmem:[%s1] sm:$0xf]
      %v319 = vld [vmem:[%s1 + $0x4] sm:$0xf]
      %v320 = vld [vmem:[%s1 + $0x8] sm:$0xf]
      %v321 = vld [vmem:[%s1 + $0xc] sm:$0xf]
      %v322 = vld [vmem:[%s1 + $0x10] sm:$0xf]
      %v323 = vld [vmem:[%s1 + $0x14] sm:$0xf]
      %v324 = vld [vmem:[%s1 + $0x18] sm:$0xf]
      %v325 = vld [vmem:[%s1 + $0x1c] sm:$0xf]
      %v326 = vld [vmem:[%s1 + $0x20] sm:$0xf]
      %v327 = vld [vmem:[%s1 + $0x24] sm:$0xf]
      %v328 = vld [vmem:[%s1 + $0x28] sm:$0xf]
      %v329 = vld [vmem:[%s1 + $0x2c] sm:$0xf]
      %v330 = vld [vmem:[%s1 + $0x30] sm:$0xf]
      %v331 = vld [vmem:[%s1 + $0x34] sm:$0xf]
      %v332 = vld [vmem:[%s1 + $0x38] sm:$0xf]
      %v333 = vld [vmem:[%s1 + $0x3c] sm:$0xf]
      %v366 = vunpack.c.l.b16 %v286
      %v367 = vunpack.c.l.b16 %v287
      %v368 = vunpack.c.l.b16 %v288
      %v369 = vunpack.c.l.b16 %v289
      %v370 = vunpack.c.l.b16 %v290
      %v371 = vunpack.c.l.b16 %v291
      %v372 = vunpack.c.l.b16 %v292
      %v373 = vunpack.c.l.b16 %v293
      %v374 = vunpack.c.l.b16 %v294
      %v375 = vunpack.c.l.b16 %v295
      %v376 = vunpack.c.l.b16 %v296
      %v377 = vunpack.c.l.b16 %v297
      %v378 = vunpack.c.l.b16 %v298
      %v379 = vunpack.c.l.b16 %v299
      %v380 = vunpack.c.l.b16 %v300
      %v381 = vunpack.c.l.b16 %v301
      %v382 = vunpack.c.l.b16 %v302
      %v383 = vunpack.c.l.b16 %v303
      %v384 = vunpack.c.l.b16 %v304
      %v385 = vunpack.c.l.b16 %v305
      %v386 = vunpack.c.l.b16 %v306
      %v387 = vunpack.c.l.b16 %v307
      %v388 = vunpack.c.l.b16 %v308
      %v389 = vunpack.c.l.b16 %v309
      %v390 = vunpack.c.l.b16 %v310
      %v391 = vunpack.c.l.b16 %v311
      %v392 = vunpack.c.l.b16 %v312
      %v393 = vunpack.c.l.b16 %v313
      %v394 = vunpack.c.l.b16 %v314
      %v395 = vunpack.c.l.b16 %v315
      %v396 = vunpack.c.l.b16 %v316
      %v397 = vunpack.c.l.b16 %v317
      %v398 = vpack.c.b16 %v367, %v366
      %v399 = vpack.c.b16 %v369, %v368
      %v400 = vpack.c.b16 %v371, %v370
      %v401 = vpack.c.b16 %v373, %v372
      %v402 = vpack.c.b16 %v375, %v374
      %v403 = vpack.c.b16 %v377, %v376
      %v404 = vpack.c.b16 %v379, %v378
      %v405 = vpack.c.b16 %v381, %v380
      %v406 = vpack.c.b16 %v383, %v382
      %v407 = vpack.c.b16 %v385, %v384
      %v408 = vpack.c.b16 %v387, %v386
      %v409 = vpack.c.b16 %v389, %v388
      %v410 = vpack.c.b16 %v391, %v390
      %v411 = vpack.c.b16 %v393, %v392
      %v412 = vpack.c.b16 %v395, %v394
      %v413 = vpack.c.b16 %v397, %v396
      %v446 = vunpack.c.l.b16 %v318
      %v447 = vunpack.c.l.b16 %v319
      %v448 = vunpack.c.l.b16 %v320
      %v449 = vunpack.c.l.b16 %v321
      %v450 = vunpack.c.l.b16 %v322
      %v451 = vunpack.c.l.b16 %v323
      %v452 = vunpack.c.l.b16 %v324
      %v453 = vunpack.c.l.b16 %v325
      %v454 = vunpack.c.l.b16 %v326
      %v455 = vunpack.c.l.b16 %v327
      %v456 = vunpack.c.l.b16 %v328
      %v457 = vunpack.c.l.b16 %v329
      %v458 = vunpack.c.l.b16 %v330
      %v459 = vunpack.c.l.b16 %v331
      %v460 = vunpack.c.l.b16 %v332
      %v461 = vunpack.c.l.b16 %v333
      %v462 = vpack.c.b16 %v447, %v446
      %v463 = vpack.c.b16 %v449, %v448
      %v464 = vpack.c.b16 %v451, %v450
      %v465 = vpack.c.b16 %v453, %v452
      %v466 = vpack.c.b16 %v455, %v454
      %v467 = vpack.c.b16 %v457, %v456
      %v468 = vpack.c.b16 %v459, %v458
      %v469 = vpack.c.b16 %v461, %v460
      %478 = vmatprep.subr.bf16.mxu0 0
      %479 = vmatpush1.bf16.msra.mxu0 %v469
      %480 = vmatprep.subr.bf16.mxu0 0
      %481 = vmatpush1.bf16.msra.mxu0 %v468
      %482 = vmatprep.subr.bf16.mxu0 0
      %483 = vmatpush1.bf16.msra.mxu0 %v467
      %484 = vmatprep.subr.bf16.mxu0 0
      %485 = vmatpush1.bf16.msra.mxu0 %v466
      %486 = vmatprep.subr.bf16.mxu0 0
      %487 = vmatpush1.bf16.msra.mxu0 %v465
      %488 = vmatprep.subr.bf16.mxu0 0
      %489 = vmatpush1.bf16.msra.mxu0 %v464
      %490 = vmatprep.subr.bf16.mxu0 0
      %491 = vmatpush1.bf16.msra.mxu0 %v463
      %492 = vmatprep.subr.bf16.mxu0 0
      %493 = vmatpush1.bf16.msra.mxu0 %v462
      %494 = vmatprep.subr.bf16.mxu0 0
      %495 = vmatpush2.bf16.msra.mxu0 0
      %496 = vmatprep.subr.bf16.mxu0 0
      %497 = vmatpush2.bf16.msra.mxu0 0
      %498 = vmatprep.subr.bf16.mxu0 0
      %499 = vmatpush2.bf16.msra.mxu0 0
      %500 = vmatprep.subr.bf16.mxu0 0
      %501 = vmatpush2.bf16.msra.mxu0 0
      %502 = vmatprep.subr.bf16.mxu0 0
      %503 = vmatpush2.bf16.msra.mxu0 0
      %504 = vmatprep.subr.bf16.mxu0 0
      %505 = vmatpush2.bf16.msra.mxu0 0
      %506 = vmatprep.subr.bf16.mxu0 0
      %507 = vmatpush2.bf16.msra.mxu0 0
      %508 = vmatprep.subr.bf16.mxu0 0
      %509 = vmatpush2.bf16.msra.mxu0 0
      %510 = vmatprep.mubr.bf16.mxu0 0
      %511 = vmatmul.mubr.bf16.gmra.mxu0 %v398
      %v512 = vpop.f32.mrf.mxu0
      %v513 = vadd.f32 0.0, %v512
      %v514 = vpop.f32.mrf.mxu0
      %v515 = vpop.f32.mrf.mxu0
      %v516 = vadd.f32 0.0, %v515
      %v517 = vpop.f32.mrf.mxu0
      %518 = vmatprep.mubr.bf16.mxu0 0
      %519 = vmatmul.mubr.bf16.gmra.mxu0 %v399
      %v520 = vpop.f32.mrf.mxu0
      %v521 = vadd.f32 0.0, %v520
      %v522 = vpop.f32.mrf.mxu0
      %v523 = vpop.f32.mrf.mxu0
      %v524 = vadd.f32 0.0, %v523
      %v525 = vpop.f32.mrf.mxu0
      %526 = vmatprep.mubr.bf16.mxu0 0
      %527 = vmatmul.mubr.bf16.gmra.mxu0 %v400
      %v528 = vpop.f32.mrf.mxu0
      %v529 = vadd.f32 0.0, %v528
      %v530 = vpop.f32.mrf.mxu0
      %v531 = vpop.f32.mrf.mxu0
      %v532 = vadd.f32 0.0, %v531
      %v533 = vpop.f32.mrf.mxu0
      %534 = vmatprep.mubr.bf16.mxu0 0
      %535 = vmatmul.mubr.bf16.gmra.mxu0 %v401
      %v536 = vpop.f32.mrf.mxu0
      %v537 = vadd.f32 0.0, %v536
      %v538 = vpop.f32.mrf.mxu0
      %v539 = vpop.f32.mrf.mxu0
      %v540 = vadd.f32 0.0, %v539
      %v541 = vpop.f32.mrf.mxu0
      %542 = vmatprep.mubr.bf16.mxu0 0
      %543 = vmatmul.mubr.bf16.gmra.mxu0 %v402
      %v544 = vpop.f32.mrf.mxu0
      %v545 = vadd.f32 0.0, %v544
      %v546 = vpop.f32.mrf.mxu0
      %v547 = vpop.f32.mrf.mxu0
      %v548 = vadd.f32 0.0, %v547
      %v549 = vpop.f32.mrf.mxu0
      %550 = vmatprep.mubr.bf16.mxu0 0
      %551 = vmatmul.mubr.bf16.gmra.mxu0 %v403
      %v552 = vpop.f32.mrf.mxu0
      %v553 = vadd.f32 0.0, %v552
      %v554 = vpop.f32.mrf.mxu0
      %v555 = vpop.f32.mrf.mxu0
      %v556 = vadd.f32 0.0, %v555
      %v557 = vpop.f32.mrf.mxu0
      %558 = vmatprep.mubr.bf16.mxu0 0
      %559 = vmatmul.mubr.bf16.gmra.mxu0 %v404
      %v560 = vpop.f32.mrf.mxu0
      %v561 = vadd.f32 0.0, %v560
      %v562 = vpop.f32.mrf.mxu0
      %v563 = vpop.f32.mrf.mxu0
      %v564 = vadd.f32 0.0, %v563
      %v565 = vpop.f32.mrf.mxu0
      %566 = vmatprep.mubr.bf16.mxu0 0
      %567 = vmatmul.mubr.bf16.gmra.mxu0 %v405
      %v568 = vpop.f32.mrf.mxu0
      %v569 = vadd.f32 0.0, %v568
      %v570 = vpop.f32.mrf.mxu0
      %v571 = vpop.f32.mrf.mxu0
      %v572 = vadd.f32 0.0, %v571
      %v573 = vpop.f32.mrf.mxu0
      %574 = vmatprep.mubr.bf16.mxu0 0
      %575 = vmatmul.mubr.bf16.gmra.mxu0 %v406
      %v576 = vpop.f32.mrf.mxu0
      %v577 = vadd.f32 0.0, %v576
      %v578 = vpop.f32.mrf.mxu0
      %v579 = vpop.f32.mrf.mxu0
      %v580 = vadd.f32 0.0, %v579
      %v581 = vpop.f32.mrf.mxu0
      %582 = vmatprep.mubr.bf16.mxu0 0
      %583 = vmatmul.mubr.bf16.gmra.mxu0 %v407
      %v584 = vpop.f32.mrf.mxu0
      %v585 = vadd.f32 0.0, %v584
      %v586 = vpop.f32.mrf.mxu0
      %v587 = vpop.f32.mrf.mxu0
      %v588 = vadd.f32 0.0, %v587
      %v589 = vpop.f32.mrf.mxu0
      %590 = vmatprep.mubr.bf16.mxu0 0
      %591 = vmatmul.mubr.bf16.gmra.mxu0 %v408
      %v592 = vpop.f32.mrf.mxu0
      %v593 = vadd.f32 0.0, %v592
      %v594 = vpop.f32.mrf.mxu0
      %v595 = vpop.f32.mrf.mxu0
      %v596 = vadd.f32 0.0, %v595
      %v597 = vpop.f32.mrf.mxu0
      %598 = vmatprep.mubr.bf16.mxu0 0
      %599 = vmatmul.mubr.bf16.gmra.mxu0 %v409
      %v600 = vpop.f32.mrf.mxu0
      %v601 = vadd.f32 0.0, %v600
      %v602 = vpop.f32.mrf.mxu0
      %v603 = vpop.f32.mrf.mxu0
      %v604 = vadd.f32 0.0, %v603
      %v605 = vpop.f32.mrf.mxu0
      %606 = vmatprep.mubr.bf16.mxu0 0
      %607 = vmatmul.mubr.bf16.gmra.mxu0 %v410
      %v608 = vpop.f32.mrf.mxu0
      %v609 = vadd.f32 0.0, %v608
      %v610 = vpop.f32.mrf.mxu0
      %v611 = vpop.f32.mrf.mxu0
      %v612 = vadd.f32 0.0, %v611
      %v613 = vpop.f32.mrf.mxu0
      %614 = vmatprep.mubr.bf16.mxu0 0
      %615 = vmatmul.mubr.bf16.gmra.mxu0 %v411
      %v616 = vpop.f32.mrf.mxu0
      %v617 = vadd.f32 0.0, %v616
      %v618 = vpop.f32.mrf.mxu0
      %v619 = vpop.f32.mrf.mxu0
      %v620 = vadd.f32 0.0, %v619
      %v621 = vpop.f32.mrf.mxu0
      %622 = vmatprep.mubr.bf16.mxu0 0
      %623 = vmatmul.mubr.bf16.gmra.mxu0 %v412
      %v624 = vpop.f32.mrf.mxu0
      %v625 = vadd.f32 0.0, %v624
      %v626 = vpop.f32.mrf.mxu0
      %v627 = vpop.f32.mrf.mxu0
      %v628 = vadd.f32 0.0, %v627
      %v629 = vpop.f32.mrf.mxu0
      %630 = vmatprep.mubr.bf16.mxu0 0
      %631 = vmatmul.mubr.bf16.gmra.mxu0 %v413
      %v632 = vpop.f32.mrf.mxu0
      %v633 = vadd.f32 0.0, %v632
      %v634 = vpop.f32.mrf.mxu0
      %v635 = vpop.f32.mrf.mxu0
      %v636 = vadd.f32 0.0, %v635
      %v637 = vpop.f32.mrf.mxu0
      %638 = vdwg.mxu0
      %v639 = vpack.c.bf16 %v516, %v513
      %v640 = vpack.c.bf16 %v524, %v521
      %v641 = vpack.c.bf16 %v532, %v529
      %v642 = vpack.c.bf16 %v540, %v537
      %v643 = vpack.c.bf16 %v548, %v545
      %v644 = vpack.c.bf16 %v556, %v553
      %v645 = vpack.c.bf16 %v564, %v561
      %v646 = vpack.c.bf16 %v572, %v569
      %v647 = vpack.c.bf16 %v580, %v577
      %v648 = vpack.c.bf16 %v588, %v585
      %v649 = vpack.c.bf16 %v596, %v593
      %v650 = vpack.c.bf16 %v604, %v601
      %v651 = vpack.c.bf16 %v612, %v609
      %v652 = vpack.c.bf16 %v620, %v617
      %v653 = vpack.c.bf16 %v628, %v625
      %v654 = vpack.c.bf16 %v636, %v633
      %v671 = vunpack.c.l.b16 %v639
      %v672 = vunpack.c.h.b16 %v639
      %v673 = vunpack.c.l.b16 %v640
      %v674 = vunpack.c.h.b16 %v640
      %v675 = vunpack.c.l.b16 %v641
      %v676 = vunpack.c.h.b16 %v641
      %v677 = vunpack.c.l.b16 %v642
      %v678 = vunpack.c.h.b16 %v642
      %v679 = vunpack.c.l.b16 %v643
      %v680 = vunpack.c.h.b16 %v643
      %v681 = vunpack.c.l.b16 %v644
      %v682 = vunpack.c.h.b16 %v644
      %v683 = vunpack.c.l.b16 %v645
      %v684 = vunpack.c.h.b16 %v645
      %v685 = vunpack.c.l.b16 %v646
      %v686 = vunpack.c.h.b16 %v646
      %v687 = vunpack.c.l.b16 %v647
      %v688 = vunpack.c.h.b16 %v647
      %v689 = vunpack.c.l.b16 %v648
      %v690 = vunpack.c.h.b16 %v648
      %v691 = vunpack.c.l.b16 %v649
      %v692 = vunpack.c.h.b16 %v649
      %v693 = vunpack.c.l.b16 %v650
      %v694 = vunpack.c.h.b16 %v650
      %v695 = vunpack.c.l.b16 %v651
      %v696 = vunpack.c.h.b16 %v651
      %v697 = vunpack.c.l.b16 %v652
      %v698 = vunpack.c.h.b16 %v652
      %v699 = vunpack.c.l.b16 %v653
      %v700 = vunpack.c.h.b16 %v653
      %v701 = vunpack.c.l.b16 %v654
      %v702 = vunpack.c.h.b16 %v654
      %v703 = vpack.c.b16 %v671, %v671
      %v704 = vpack.c.b16 %v672, %v672
      %v705 = vpack.c.b16 %v673, %v673
      %v706 = vpack.c.b16 %v674, %v674
      %v707 = vpack.c.b16 %v675, %v675
      %v708 = vpack.c.b16 %v676, %v676
      %v709 = vpack.c.b16 %v677, %v677
      %v710 = vpack.c.b16 %v678, %v678
      %v711 = vpack.c.b16 %v679, %v679
      %v712 = vpack.c.b16 %v680, %v680
      %v713 = vpack.c.b16 %v681, %v681
      %v714 = vpack.c.b16 %v682, %v682
      %v715 = vpack.c.b16 %v683, %v683
      %v716 = vpack.c.b16 %v684, %v684
      %v717 = vpack.c.b16 %v685, %v685
      %v718 = vpack.c.b16 %v686, %v686
      %v719 = vpack.c.b16 %v687, %v687
      %v720 = vpack.c.b16 %v688, %v688
      %v721 = vpack.c.b16 %v689, %v689
      %v722 = vpack.c.b16 %v690, %v690
      %v723 = vpack.c.b16 %v691, %v691
      %v724 = vpack.c.b16 %v692, %v692
      %v725 = vpack.c.b16 %v693, %v693
      %v726 = vpack.c.b16 %v694, %v694
      %v727 = vpack.c.b16 %v695, %v695
      %v728 = vpack.c.b16 %v696, %v696
      %v729 = vpack.c.b16 %v697, %v697
      %v730 = vpack.c.b16 %v698, %v698
      %v731 = vpack.c.b16 %v699, %v699
      %v732 = vpack.c.b16 %v700, %v700
      %v733 = vpack.c.b16 %v701, %v701
      %v734 = vpack.c.b16 %v702, %v702
      %767 = vst [vmem:[%s271] sm:$0xf] %v703
      %768 = vst [vmem:[%s271 + $0x4] sm:$0xf] %v704
      %769 = vst [vmem:[%s271 + $0x8] sm:$0xf] %v705
      %770 = vst [vmem:[%s271 + $0xc] sm:$0xf] %v706
      %771 = vst [vmem:[%s271 + $0x10] sm:$0xf] %v707
      %772 = vst [vmem:[%s271 + $0x14] sm:$0xf] %v708
      %773 = vst [vmem:[%s271 + $0x18] sm:$0xf] %v709
      %774 = vst [vmem:[%s271 + $0x1c] sm:$0xf] %v710
      %775 = vst [vmem:[%s271 + $0x20] sm:$0xf] %v711
      %776 = vst [vmem:[%s271 + $0x24] sm:$0xf] %v712
      %777 = vst [vmem:[%s271 + $0x28] sm:$0xf] %v713
      %778 = vst [vmem:[%s271 + $0x2c] sm:$0xf] %v714
      %779 = vst [vmem:[%s271 + $0x30] sm:$0xf] %v715
      %780 = vst [vmem:[%s271 + $0x34] sm:$0xf] %v716
      %781 = vst [vmem:[%s271 + $0x38] sm:$0xf] %v717
      %782 = vst [vmem:[%s271 + $0x3c] sm:$0xf] %v718
      %783 = vst [vmem:[%s271 + $0x40] sm:$0xf] %v719
      %784 = vst [vmem:[%s271 + $0x44] sm:$0xf] %v720
      %785 = vst [vmem:[%s271 + $0x48] sm:$0xf] %v721
      %786 = vst [vmem:[%s271 + $0x4c] sm:$0xf] %v722
      %787 = vst [vmem:[%s271 + $0x50] sm:$0xf] %v723
      %788 = vst [vmem:[%s271 + $0x54] sm:$0xf] %v724
      %789 = vst [vmem:[%s271 + $0x58] sm:$0xf] %v725
      %790 = vst [vmem:[%s271 + $0x5c] sm:$0xf] %v726
      %791 = vst [vmem:[%s271 + $0x60] sm:$0xf] %v727
      %792 = vst [vmem:[%s271 + $0x64] sm:$0xf] %v728
      %793 = vst [vmem:[%s271 + $0x68] sm:$0xf] %v729
      %794 = vst [vmem:[%s271 + $0x6c] sm:$0xf] %v730
      %795 = vst [vmem:[%s271 + $0x70] sm:$0xf] %v731
      %796 = vst [vmem:[%s271 + $0x74] sm:$0xf] %v732
      %797 = vst [vmem:[%s271 + $0x78] sm:$0xf] %v733
      %798 = vst [vmem:[%s271 + $0x7c] sm:$0xf] %v734
      %v799 = vadd.f32 %v513, %v516
      %v800 = vadd.f32 %v799, %v521
      %v801 = vadd.f32 %v800, %v524
      %v802 = vadd.f32 %v801, %v529
      %v803 = vadd.f32 %v802, %v532
      %v804 = vadd.f32 %v803, %v537
      %v805 = vadd.f32 %v804, %v540
      %v806 = vadd.f32 %v805, %v545
      %v807 = vadd.f32 %v806, %v548
      %v808 = vadd.f32 %v807, %v553
      %v809 = vadd.f32 %v808, %v556
      %v810 = vadd.f32 %v809, %v561
      %v811 = vadd.f32 %v810, %v564
      %v812 = vadd.f32 %v811, %v569
      %v813 = vadd.f32 %v812, %v572
      %v814 = vadd.f32 %v813, %v577
      %v815 = vadd.f32 %v814, %v580
      %v816 = vadd.f32 %v815, %v585
      %v817 = vadd.f32 %v816, %v588
      %v818 = vadd.f32 %v817, %v593
      %v819 = vadd.f32 %v818, %v596
      %v820 = vadd.f32 %v819, %v601
      %v821 = vadd.f32 %v820, %v604
      %v822 = vadd.f32 %v821, %v609
      %v823 = vadd.f32 %v822, %v612
      %v824 = vadd.f32 %v823, %v617
      %v825 = vadd.f32 %v824, %v620
      %v826 = vadd.f32 %v825, %v625
      %v827 = vadd.f32 %v826, %v628
      %v828 = vadd.f32 %v827, %v633
      %v829 = vadd.f32 %v828, %v636
      %v830 = vrot.slane %v829, 4
      %v831 = vadd.f32 %v829, %v830
      %v832 = vrot.slane %v831, 2
      %v833 = vadd.f32 %v831, %v832
      %v834 = vrot.slane %v833, 1
      %v835 = vadd.f32 %v833, %v834
      %v836 = vrcp.pop 256.0
      %v837 = vmul.f32 %v835, %v836
      %v838 = vsub.f32 %v513, %v837
      %v839 = vsub.f32 %v516, %v837
      %v840 = vsub.f32 %v521, %v837
      %v841 = vsub.f32 %v524, %v837
      %v842 = vsub.f32 %v529, %v837
      %v843 = vsub.f32 %v532, %v837
      %v844 = vsub.f32 %v537, %v837
      %v845 = vsub.f32 %v540, %v837
      %v846 = vsub.f32 %v545, %v837
      %v847 = vsub.f32 %v548, %v837
      %v848 = vsub.f32 %v553, %v837
      %v849 = vsub.f32 %v556, %v837
      %v850 = vsub.f32 %v561, %v837
      %v851 = vsub.f32 %v564, %v837
      %v852 = vsub.f32 %v569, %v837
      %v853 = vsub.f32 %v572, %v837
      %v854 = vsub.f32 %v577, %v837
      %v855 = vsub.f32 %v580, %v837
      %v856 = vsub.f32 %v585, %v837
      %v857 = vsub.f32 %v588, %v837
      %v858 = vsub.f32 %v593, %v837
      %v859 = vsub.f32 %v596, %v837
      %v860 = vsub.f32 %v601, %v837
      %v861 = vsub.f32 %v604, %v837
      %v862 = vsub.f32 %v609, %v837
      %v863 = vsub.f32 %v612, %v837
      %v864 = vsub.f32 %v617, %v837
      %v865 = vsub.f32 %v620, %v837
      %v866 = vsub.f32 %v625, %v837
      %v867 = vsub.f32 %v628, %v837
      %v868 = vsub.f32 %v633, %v837
      %v869 = vsub.f32 %v636, %v837
      %v870 = vmul.f32 %v838, %v838
      %v871 = vmul.f32 %v839, %v839
      %v872 = vmul.f32 %v840, %v840
      %v873 = vmul.f32 %v841, %v841
      %v874 = vmul.f32 %v842, %v842
      %v875 = vmul.f32 %v843, %v843
      %v876 = vmul.f32 %v844, %v844
      %v877 = vmul.f32 %v845, %v845
      %v878 = vmul.f32 %v846, %v846
      %v879 = vmul.f32 %v847, %v847
      %v880 = vmul.f32 %v848, %v848
      %v881 = vmul.f32 %v849, %v849
      %v882 = vmul.f32 %v850, %v850
      %v883 = vmul.f32 %v851, %v851
      %v884 = vmul.f32 %v852, %v852
      %v885 = vmul.f32 %v853, %v853
      %v886 = vmul.f32 %v854, %v854
      %v887 = vmul.f32 %v855, %v855
      %v888 = vmul.f32 %v856, %v856
      %v889 = vmul.f32 %v857, %v857
      %v890 = vmul.f32 %v858, %v858
      %v891 = vmul.f32 %v859, %v859
      %v892 = vmul.f32 %v860, %v860
      %v893 = vmul.f32 %v861, %v861
      %v894 = vmul.f32 %v862, %v862
      %v895 = vmul.f32 %v863, %v863
      %v896 = vmul.f32 %v864, %v864
      %v897 = vmul.f32 %v865, %v865
      %v898 = vmul.f32 %v866, %v866
      %v899 = vmul.f32 %v867, %v867
      %v900 = vmul.f32 %v868, %v868
      %v901 = vmul.f32 %v869, %v869
      %v902 = vadd.f32 %v870, %v871
      %v903 = vadd.f32 %v902, %v872
      %v904 = vadd.f32 %v903, %v873
      %v905 = vadd.f32 %v904, %v874
      %v906 = vadd.f32 %v905, %v875
      %v907 = vadd.f32 %v906, %v876
      %v908 = vadd.f32 %v907, %v877
      %v909 = vadd.f32 %v908, %v878
      %v910 = vadd.f32 %v909, %v879
      %v911 = vadd.f32 %v910, %v880
      %v912 = vadd.f32 %v911, %v881
      %v913 = vadd.f32 %v912, %v882
      %v914 = vadd.f32 %v913, %v883
      %v915 = vadd.f32 %v914, %v884
      %v916 = vadd.f32 %v915, %v885
      %v917 = vadd.f32 %v916, %v886
      %v918 = vadd.f32 %v917, %v887
      %v919 = vadd.f32 %v918, %v888
      %v920 = vadd.f32 %v919, %v889
      %v921 = vadd.f32 %v920, %v890
      %v922 = vadd.f32 %v921, %v891
      %v923 = vadd.f32 %v922, %v892
      %v924 = vadd.f32 %v923, %v893
      %v925 = vadd.f32 %v924, %v894
      %v926 = vadd.f32 %v925, %v895
      %v927 = vadd.f32 %v926, %v896
      %v928 = vadd.f32 %v927, %v897
      %v929 = vadd.f32 %v928, %v898
      %v930 = vadd.f32 %v929, %v899
      %v931 = vadd.f32 %v930, %v900
      %v932 = vadd.f32 %v931, %v901
      %v933 = vrot.slane %v932, 4
      %v934 = vadd.f32 %v932, %v933
      %v935 = vrot.slane %v934, 2
      %v936 = vadd.f32 %v934, %v935
      %v937 = vrot.slane %v936, 1
      %v938 = vadd.f32 %v936, %v937
      %939 = vst [vmem:[%s275] sm:$0x1] %v837
      %940 = vst [vmem:[%s275 + $0x1] sm:$0x1] %v938
      %v941 = vld [vmem:[%s2] sm:$0xf]
      %v942 = vld [vmem:[%s2 + $0x4] sm:$0xf]
      %v943 = vld [vmem:[%s2 + $0x8] sm:$0xf]
      %v944 = vld [vmem:[%s2 + $0xc] sm:$0xf]
      %v945 = vld [vmem:[%s2 + $0x10] sm:$0xf]
      %v946 = vld [vmem:[%s2 + $0x14] sm:$0xf]
      %v947 = vld [vmem:[%s2 + $0x18] sm:$0xf]
      %v948 = vld [vmem:[%s2 + $0x1c] sm:$0xf]
      %v949 = vld [vmem:[%s2 + $0x20] sm:$0xf]
      %v950 = vld [vmem:[%s2 + $0x24] sm:$0xf]
      %v951 = vld [vmem:[%s2 + $0x28] sm:$0xf]
      %v952 = vld [vmem:[%s2 + $0x2c] sm:$0xf]
      %v953 = vld [vmem:[%s2 + $0x30] sm:$0xf]
      %v954 = vld [vmem:[%s2 + $0x34] sm:$0xf]
      %v955 = vld [vmem:[%s2 + $0x38] sm:$0xf]
      %v956 = vld [vmem:[%s2 + $0x3c] sm:$0xf]
      %v973 = vunpack.c.l.b16 %v941
      %v974 = vunpack.c.l.b16 %v942
      %v975 = vunpack.c.l.b16 %v943
      %v976 = vunpack.c.l.b16 %v944
      %v977 = vunpack.c.l.b16 %v945
      %v978 = vunpack.c.l.b16 %v946
      %v979 = vunpack.c.l.b16 %v947
      %v980 = vunpack.c.l.b16 %v948
      %v981 = vunpack.c.l.b16 %v949
      %v982 = vunpack.c.l.b16 %v950
      %v983 = vunpack.c.l.b16 %v951
      %v984 = vunpack.c.l.b16 %v952
      %v985 = vunpack.c.l.b16 %v953
      %v986 = vunpack.c.l.b16 %v954
      %v987 = vunpack.c.l.b16 %v955
      %v988 = vunpack.c.l.b16 %v956
      %v989 = vpack.c.b16 %v974, %v973
      %v990 = vpack.c.b16 %v976, %v975
      %v991 = vpack.c.b16 %v978, %v977
      %v992 = vpack.c.b16 %v980, %v979
      %v993 = vpack.c.b16 %v982, %v981
      %v994 = vpack.c.b16 %v984, %v983
      %v995 = vpack.c.b16 %v986, %v985
      %v996 = vpack.c.b16 %v988, %v987
      %1005 = vmatprep.subr.bf16.mxu0 0
      %1006 = vmatpush1.bf16.msra.mxu0 %v996
      %1007 = vmatprep.subr.bf16.mxu0 0
      %1008 = vmatpush1.bf16.msra.mxu0 %v995
      %1009 = vmatprep.subr.bf16.mxu0 0
      %1010 = vmatpush1.bf16.msra.mxu0 %v994
      %1011 = vmatprep.subr.bf16.mxu0 0
      %1012 = vmatpush1.bf16.msra.mxu0 %v993
      %1013 = vmatprep.subr.bf16.mxu0 0
      %1014 = vmatpush1.bf16.msra.mxu0 %v992
      %1015 = vmatprep.subr.bf16.mxu0 0
      %1016 = vmatpush1.bf16.msra.mxu0 %v991
      %1017 = vmatprep.subr.bf16.mxu0 0
      %1018 = vmatpush1.bf16.msra.mxu0 %v990
      %1019 = vmatprep.subr.bf16.mxu0 0
      %1020 = vmatpush1.bf16.msra.mxu0 %v989
      %1021 = vmatprep.subr.bf16.mxu0 0
      %1022 = vmatpush2.bf16.msra.mxu0 0
      %1023 = vmatprep.subr.bf16.mxu0 0
      %1024 = vmatpush2.bf16.msra.mxu0 0
      %1025 = vmatprep.subr.bf16.mxu0 0
      %1026 = vmatpush2.bf16.msra.mxu0 0
      %1027 = vmatprep.subr.bf16.mxu0 0
      %1028 = vmatpush2.bf16.msra.mxu0 0
      %1029 = vmatprep.subr.bf16.mxu0 0
      %1030 = vmatpush2.bf16.msra.mxu0 0
      %1031 = vmatprep.subr.bf16.mxu0 0
      %1032 = vmatpush2.bf16.msra.mxu0 0
      %1033 = vmatprep.subr.bf16.mxu0 0
      %1034 = vmatpush2.bf16.msra.mxu0 0
      %1035 = vmatprep.subr.bf16.mxu0 0
      %1036 = vmatpush2.bf16.msra.mxu0 0
      %1037 = vmatprep.mubr.bf16.mxu0 0
      %1038 = vmatmul.mubr.bf16.gmra.mxu0 %v398
      %v1039 = vpop.f32.mrf.mxu0
      %v1040 = vadd.f32 0.0, %v1039
      %v1041 = vpop.f32.mrf.mxu0
      %v1042 = vpop.f32.mrf.mxu0
      %v1043 = vadd.f32 0.0, %v1042
      %v1044 = vpop.f32.mrf.mxu0
      %1045 = vmatprep.mubr.bf16.mxu0 0
      %1046 = vmatmul.mubr.bf16.gmra.mxu0 %v399
      %v1047 = vpop.f32.mrf.mxu0
      %v1048 = vadd.f32 0.0, %v1047
      %v1049 = vpop.f32.mrf.mxu0
      %v1050 = vpop.f32.mrf.mxu0
      %v1051 = vadd.f32 0.0, %v1050
      %v1052 = vpop.f32.mrf.mxu0
      %1053 = vmatprep.mubr.bf16.mxu0 0
      %1054 = vmatmul.mubr.bf16.gmra.mxu0 %v400
      %v1055 = vpop.f32.mrf.mxu0
      %v1056 = vadd.f32 0.0, %v1055
      %v1057 = vpop.f32.mrf.mxu0
      %v1058 = vpop.f32.mrf.mxu0
      %v1059 = vadd.f32 0.0, %v1058
      %v1060 = vpop.f32.mrf.mxu0
      %1061 = vmatprep.mubr.bf16.mxu0 0
      %1062 = vmatmul.mubr.bf16.gmra.mxu0 %v401
      %v1063 = vpop.f32.mrf.mxu0
      %v1064 = vadd.f32 0.0, %v1063
      %v1065 = vpop.f32.mrf.mxu0
      %v1066 = vpop.f32.mrf.mxu0
      %v1067 = vadd.f32 0.0, %v1066
      %v1068 = vpop.f32.mrf.mxu0
      %1069 = vdwg.mxu0
      %v1070 = vpack.c.bf16 %v1043, %v1040
      %v1071 = vpack.c.bf16 %v1051, %v1048
      %v1072 = vpack.c.bf16 %v1059, %v1056
      %v1073 = vpack.c.bf16 %v1067, %v1064
      %v1078 = vunpack.c.l.b16 %v1070
      %v1079 = vunpack.c.h.b16 %v1070
      %v1080 = vunpack.c.l.b16 %v1071
      %v1081 = vunpack.c.h.b16 %v1071
      %v1082 = vunpack.c.l.b16 %v1072
      %v1083 = vunpack.c.h.b16 %v1072
      %v1084 = vunpack.c.l.b16 %v1073
      %v1085 = vunpack.c.h.b16 %v1073
      %v1086 = vpack.c.b16 %v1078, %v1078
      %v1087 = vpack.c.b16 %v1079, %v1079
      %v1088 = vpack.c.b16 %v1080, %v1080
      %v1089 = vpack.c.b16 %v1081, %v1081
      %v1090 = vpack.c.b16 %v1082, %v1082
      %v1091 = vpack.c.b16 %v1083, %v1083
      %v1092 = vpack.c.b16 %v1084, %v1084
      %v1093 = vpack.c.b16 %v1085, %v1085
      %1102 = vst [vmem:[%s280] sm:$0xf] %v1086
      %1103 = vst [vmem:[%s280 + $0x4] sm:$0xf] %v1087
      %1104 = vst [vmem:[%s280 + $0x8] sm:$0xf] %v1088
      %1105 = vst [vmem:[%s280 + $0xc] sm:$0xf] %v1089
      %1106 = vst [vmem:[%s280 + $0x10] sm:$0xf] %v1090
      %1107 = vst [vmem:[%s280 + $0x14] sm:$0xf] %v1091
      %1108 = vst [vmem:[%s280 + $0x18] sm:$0xf] %v1092
      %1109 = vst [vmem:[%s280 + $0x1c] sm:$0xf] %v1093
      %v1110 = vadd.f32 %v1040, %v1043
      %v1111 = vadd.f32 %v1110, %v1048
      %v1112 = vadd.f32 %v1111, %v1051
      %v1113 = vadd.f32 %v1112, %v1056
      %v1114 = vadd.f32 %v1113, %v1059
      %v1115 = vadd.f32 %v1114, %v1064
      %v1116 = vadd.f32 %v1115, %v1067
      %v1117 = vrot.slane %v1116, 4
      %v1118 = vadd.f32 %v1116, %v1117
      %v1119 = vrot.slane %v1118, 2
      %v1120 = vadd.f32 %v1118, %v1119
      %v1121 = vrot.slane %v1120, 1
      %v1122 = vadd.f32 %v1120, %v1121
      %v1123 = vrcp.pop 64.0
      %v1124 = vmul.f32 %v1122, %v1123
      %v1125 = vsub.f32 %v1040, %v1124
      %v1126 = vsub.f32 %v1043, %v1124
      %v1127 = vsub.f32 %v1048, %v1124
      %v1128 = vsub.f32 %v1051, %v1124
      %v1129 = vsub.f32 %v1056, %v1124
      %v1130 = vsub.f32 %v1059, %v1124
      %v1131 = vsub.f32 %v1064, %v1124
      %v1132 = vsub.f32 %v1067, %v1124
      %v1133 = vmul.f32 %v1125, %v1125
      %v1134 = vmul.f32 %v1126, %v1126
      %v1135 = vmul.f32 %v1127, %v1127
      %v1136 = vmul.f32 %v1128, %v1128
      %v1137 = vmul.f32 %v1129, %v1129
      %v1138 = vmul.f32 %v1130, %v1130
      %v1139 = vmul.f32 %v1131, %v1131
      %v1140 = vmul.f32 %v1132, %v1132
      %v1141 = vadd.f32 %v1133, %v1134
      %v1142 = vadd.f32 %v1141, %v1135
      %v1143 = vadd.f32 %v1142, %v1136
      %v1144 = vadd.f32 %v1143, %v1137
      %v1145 = vadd.f32 %v1144, %v1138
      %v1146 = vadd.f32 %v1145, %v1139
      %v1147 = vadd.f32 %v1146, %v1140
      %v1148 = vrot.slane %v1147, 4
      %v1149 = vadd.f32 %v1147, %v1148
      %v1150 = vrot.slane %v1149, 2
      %v1151 = vadd.f32 %v1149, %v1150
      %v1152 = vrot.slane %v1151, 1
      %v1153 = vadd.f32 %v1151, %v1152
      %1154 = vst [vmem:[%s284] sm:$0x1] %v1124
      %1155 = vst [vmem:[%s284 + $0x1] sm:$0x1] %v1153
      %p1156 = scmp.lt.s32.totalorder %s18, 1
      %s1157 = scalar_select %p1156, %s18, 1
      %s1158 = smul.addr %s1157, 32
      %s1159 = smul.addr %s1158, 4
      %s1160 = scalar_lea.vmem %s3, %s1159
      %p1161 = scmp.lt.s32.totalorder %s18, 1
      %s1162 = scalar_select %p1161, %s18, 1
      %s1163 = smul.addr %s1162, 2
      %s1164 = scalar_lea.vmem %s4, %s1163
      %p1165 = scmp.lt.s32.totalorder %s18, 1
      %s1166 = scalar_select %p1165, %s18, 1
      %s1167 = smul.addr %s1166, 8
      %s1168 = smul.addr %s1167, 4
      %s1169 = scalar_lea.vmem %s5, %s1168
      %p1170 = scmp.lt.s32.totalorder %s18, 1
      %s1171 = scalar_select %p1170, %s18, 1
      %s1172 = smul.addr %s1171, 2
      %s1173 = scalar_lea.vmem %s6, %s1172
      // Predicated region
      $region33: #{bottleneck_forward.4} parent=31 // pred_check
        %p1174 = pneg %p104
      $region34: #{bottleneck_forward.4} parent=31 // pred_check_branch
        %1176 = sbr.rel (%p1174) target = $region36
      $region35: #{bottleneck_forward.4} parent=31 // pred_region
        _
      $region36: #{bottleneck_forward.4} parent=31 // pred_fallthru
        _
      // Predicated region
      $region37: #{bottleneck_forward.4} parent=31 // pred_check
        %p1177 = pneg %p130
      $region38: #{bottleneck_forward.4} parent=31 // pred_check_branch
        %1179 = sbr.rel (%p1177) target = $region40
      $region39: #{bottleneck_forward.4} parent=31 // pred_region
        _
      $region40: #{bottleneck_forward.4} parent=31 // pred_fallthru
        _
      // Predicated region
      $region41: #{bottleneck_forward.4} parent=31 // pred_check
        %p1180 = pneg %p156
      $region42: #{bottleneck_forward.4} parent=31 // pred_check_branch
        %1182 = sbr.rel (%p1180) target = $region44
      $region43: #{bottleneck_forward.4} parent=31 // pred_region
        _
      $region44: #{bottleneck_forward.4} parent=31 // pred_fallthru
        _
      // Predicated region
      $region45: #{bottleneck_forward.4} parent=31 // pred_check
        %p1183 = pneg %p182
      $region46: #{bottleneck_forward.4} parent=31 // pred_check_branch
        %1185 = sbr.rel (%p1183) target = $region48
      $region47: #{bottleneck_forward.4} parent=31 // pred_region
        _
      $region48: #{bottleneck_forward.4} parent=31 // pred_fallthru
        _
    $region32: #{bottleneck_forward.4} parent=5 // pred_fallthru
      _
    %p1186 = scmp.le.s32.totalorder 2, %s13
    // Predicated region
    $region49: #{bottleneck_forward.4} parent=5 // pred_check
      %p1187 = pneg %p1186
    $region50: #{bottleneck_forward.4} parent=5 // pred_check_branch
      %1189 = sbr.rel (%p1187) target = $region52
    $region51: #{bottleneck_forward.4} parent=5 // pred_region
      %s1190 = ssub.s32 %s13, 2
      // Predicated region
      $region53: #{bottleneck_forward.4} parent=51 // pred_check
        %p1191 = pneg %p110
      $region54: #{bottleneck_forward.4} parent=51 // pred_check_branch
        %1193 = sbr.rel (%p1191) target = $region56
      $region55: #{bottleneck_forward.4} parent=51 // pred_region
        %p1194 = scmp.lt.s32.totalorder %s19, 1
        %s1195 = scalar_select %p1194, %s19, 1
        %s1196 = smul.addr %s1195, 32
        %s1197 = smul.addr %s1196, 4
        %s1198 = scalar_lea.vmem %s3, %s1197
      $region56: #{bottleneck_forward.4} parent=51 // pred_fallthru
        _
      // Predicated region
      $region57: #{bottleneck_forward.4} parent=51 // pred_check
        %p1199 = pneg %p136
      $region58: #{bottleneck_forward.4} parent=51 // pred_check_branch
        %1201 = sbr.rel (%p1199) target = $region60
      $region59: #{bottleneck_forward.4} parent=51 // pred_region
        %p1202 = scmp.lt.s32.totalorder %s19, 1
        %s1203 = scalar_select %p1202, %s19, 1
        %s1204 = smul.addr %s1203, 2
        %s1205 = scalar_lea.vmem %s4, %s1204
      $region60: #{bottleneck_forward.4} parent=51 // pred_fallthru
        _
      // Predicated region
      $region61: #{bottleneck_forward.4} parent=51 // pred_check
        %p1206 = pneg %p162
      $region62: #{bottleneck_forward.4} parent=51 // pred_check_branch
        %1208 = sbr.rel (%p1206) target = $region64
      $region63: #{bottleneck_forward.4} parent=51 // pred_region
        %p1209 = scmp.lt.s32.totalorder %s19, 1
        %s1210 = scalar_select %p1209, %s19, 1
        %s1211 = smul.addr %s1210, 8
        %s1212 = smul.addr %s1211, 4
        %s1213 = scalar_lea.vmem %s5, %s1212
      $region64: #{bottleneck_forward.4} parent=51 // pred_fallthru
        _
      // Predicated region
      $region65: #{bottleneck_forward.4} parent=51 // pred_check
        %p1214 = pneg %p188
      $region66: #{bottleneck_forward.4} parent=51 // pred_check_branch
        %1216 = sbr.rel (%p1214) target = $region68
      $region67: #{bottleneck_forward.4} parent=51 // pred_region
        %p1217 = scmp.lt.s32.totalorder %s19, 1
        %s1218 = scalar_select %p1217, %s19, 1
        %s1219 = smul.addr %s1218, 2
        %s1220 = scalar_lea.vmem %s6, %s1219
      $region68: #{bottleneck_forward.4} parent=51 // pred_fallthru
        _
    $region52: #{bottleneck_forward.4} parent=5 // pred_fallthru
      _
  $region6: #{bottleneck_forward.4} parent=0 // loop_footer
    %s17 = sadd.s32 1, %s13
  $region7: #{bottleneck_forward.4} parent=0 // loop_footer_branch
    %12 = sbr.rel target = $region3
  $region8: #{bottleneck_forward.4} parent=0 // loop_exit
    _

// kernel: bottleneck_forward.5
$region0: #{bottleneck_forward.5}
  #allocation0 [shape = 'u32[]', space=smem, size = 0x4, offset = 0x4, fixed_abs, tag = 'smem constant byte address 0x4 - core index']
  #allocation1 [shape = 'u32[144,128]{1,0:T(1,128)}', space=vmem, size = 0x12000, scoped, tag = 'internal scratch']
  #allocation2 [shape = 'bf16[4,10,10,128]{3,2,1,0:T(8,128)(2,1)}', space=vmem, size = 0x28000, scoped, tag = 'scratch operand']
  %s0 = inlined_call_operand.vmem [shape: bf16[2,256,128], index: 0, kind: input, shape index: {}]
  %s1 = inlined_call_operand.vmem [shape: f32[1,128], index: 1, kind: input, shape index: {}]
  %s2 = inlined_call_operand.vmem [shape: f32[1,128], index: 2, kind: input, shape index: {}]
  %s3 = inlined_call_operand.vmem [shape: bf16[3,384,128], index: 3, kind: input, shape index: {}]
  %s4 = inlined_call_operand.vmem [shape: bf16[2,64,128], index: 4, kind: output, shape index: {0}]
  %s5 = inlined_call_operand.vmem [shape: f32[2,2,128], index: 5, kind: output, shape index: {1}]
  %6 = xla_tuple %s4, %s5
  %s7 = sld [smem:[#allocation0]]
  $region57: #{bottleneck_forward.5} parent=0
    _
  %s9 = ssub.s32 1, %s7
  %s10 = scalar_select 0, %s9, %s7
  loop: start=0, step=1, limit=4
  $region2: #{bottleneck_forward.5} parent=0 // loop_pre_header
    _
  $region3: #{bottleneck_forward.5} parent=0 // loop_header
    %s12 = sphi 0, %s16
    %p13 = scmp.ge.s32.totalorder %s12, 4
    %s22 = sphi 0, %s24
    %s25 = sphi 0, %s22
    %s26 = sphi 0, %s25
    %s42 = sphi 0, %s26
    %s46 = sphi 0, %s46
    %s48 = sphi 0, %s46
    %s49 = sphi 0, %s48
    %s63 = sphi 0, %s49
    %s67 = sphi 0, %s67
    %s69 = sphi 0, %s67
    %s70 = sphi 0, %s69
    %s84 = sphi 0, %s70
    %s88 = sphi 0, %s88
    %s90 = sphi 0, %s88
    %s91 = sphi 0, %s90
    %s105 = sphi 0, %s91
    %s111 = sphi 0, %s113
    %s114 = sphi 0, %s111
    %s115 = sphi 0, %s114
    %s131 = sphi 0, %s115
    %s137 = sphi 0, %s139
    %s140 = sphi 0, %s137
    %s141 = sphi 0, %s140
    %s157 = sphi 0, %s141
  $region4: #{bottleneck_forward.5} parent=0 // loop_header_branch
    %15 = sbr.rel (%p13) target = $region8
  $region5: #{bottleneck_forward.5} parent=0 // loop_body
    %s17 = ssub.s32 %s12, 1
    %s18 = ssub.s32 %s12, 2
    %s19 = sadd.s32 %s12, 1
    %s20 = ssub.s32 %s12, %s19
    %p21 = scmp.eq.s32.totalorder %s20, 0
    %s23 = sadd.s32 %s22, 1
    %s24 = scalar_select %p21, %s22, %s23
    %p27 = pneg %p21
    %p28 = scmp.eq.s32.totalorder %s12, 1
    %p29 = por %p27, %p28
    %p30 = scmp.ne.s32.totalorder %s22, %s25
    %p31 = scmp.eq.s32.totalorder %s12, 0
    %p32 = por %p30, %p31
    %p33 = scmp.ne.s32.totalorder %s22, %s25
    %p34 = scmp.eq.s32.totalorder %s17, 1
    %p35 = por %p33, %p34
    %p36 = scmp.ne.s32.totalorder %s25, %s26
    %p37 = scmp.eq.s32.totalorder %s17, 0
    %p38 = por %p36, %p37
    %p39 = scmp.ne.s32.totalorder %s25, %s26
    %p40 = scmp.eq.s32.totalorder %s18, 1
    %p41 = por %p39, %p40
    %p43 = scmp.ne.s32.totalorder %s26, %s42
    %p44 = scmp.eq.s32.totalorder %s18, 0
    %p45 = por %p43, %p44
    %s47 = sadd.s32 %s46, 1
    %p50 = scmp.eq.s32.totalorder %s12, 1
    %p51 = scmp.ne.s32.totalorder %s46, %s48
    %p52 = scmp.eq.s32.totalorder %s12, 0
    %p53 = por %p51, %p52
    %p54 = scmp.ne.s32.totalorder %s46, %s48
    %p55 = scmp.eq.s32.totalorder %s17, 1
    %p56 = por %p54, %p55
    %p57 = scmp.ne.s32.totalorder %s48, %s49
    %p58 = scmp.eq.s32.totalorder %s17, 0
    %p59 = por %p57, %p58
    %p60 = scmp.ne.s32.totalorder %s48, %s49
    %p61 = scmp.eq.s32.totalorder %s18, 1
    %p62 = por %p60, %p61
    %p64 = scmp.ne.s32.totalorder %s49, %s63
    %p65 = scmp.eq.s32.totalorder %s18, 0
    %p66 = por %p64, %p65
    %s68 = sadd.s32 %s67, 1
    %p71 = scmp.eq.s32.totalorder %s12, 1
    %p72 = scmp.ne.s32.totalorder %s67, %s69
    %p73 = scmp.eq.s32.totalorder %s12, 0
    %p74 = por %p72, %p73
    %p75 = scmp.ne.s32.totalorder %s67, %s69
    %p76 = scmp.eq.s32.totalorder %s17, 1
    %p77 = por %p75, %p76
    %p78 = scmp.ne.s32.totalorder %s69, %s70
    %p79 = scmp.eq.s32.totalorder %s17, 0
    %p80 = por %p78, %p79
    %p81 = scmp.ne.s32.totalorder %s69, %s70
    %p82 = scmp.eq.s32.totalorder %s18, 1
    %p83 = por %p81, %p82
    %p85 = scmp.ne.s32.totalorder %s70, %s84
    %p86 = scmp.eq.s32.totalorder %s18, 0
    %p87 = por %p85, %p86
    %s89 = sadd.s32 %s88, 1
    %p92 = scmp.eq.s32.totalorder %s12, 1
    %p93 = scmp.ne.s32.totalorder %s88, %s90
    %p94 = scmp.eq.s32.totalorder %s12, 0
    %p95 = por %p93, %p94
    %p96 = scmp.ne.s32.totalorder %s88, %s90
    %p97 = scmp.eq.s32.totalorder %s17, 1
    %p98 = por %p96, %p97
    %p99 = scmp.ne.s32.totalorder %s90, %s91
    %p100 = scmp.eq.s32.totalorder %s17, 0
    %p101 = por %p99, %p100
    %p102 = scmp.ne.s32.totalorder %s90, %s91
    %p103 = scmp.eq.s32.totalorder %s18, 1
    %p104 = por %p102, %p103
    %p106 = scmp.ne.s32.totalorder %s91, %s105
    %p107 = scmp.eq.s32.totalorder %s18, 0
    %p108 = por %p106, %p107
    %s109 = ssub.s32 %s12, %s19
    %p110 = scmp.eq.s32.totalorder %s109, 0
    %s112 = sadd.s32 %s111, 1
    %s113 = scalar_select %p110, %s111, %s112
    %p116 = pneg %p110
    %p117 = scmp.eq.s32.totalorder %s12, 1
    %p118 = por %p116, %p117
    %p119 = scmp.ne.s32.totalorder %s111, %s114
    %p120 = scmp.eq.s32.totalorder %s12, 0
    %p121 = por %p119, %p120
    %p122 = scmp.ne.s32.totalorder %s111, %s114
    %p123 = scmp.eq.s32.totalorder %s17, 1
    %p124 = por %p122, %p123
    %p125 = scmp.ne.s32.totalorder %s114, %s115
    %p126 = scmp.eq.s32.totalorder %s17, 0
    %p127 = por %p125, %p126
    %p128 = scmp.ne.s32.totalorder %s114, %s115
    %p129 = scmp.eq.s32.totalorder %s18, 1
    %p130 = por %p128, %p129
    %p132 = scmp.ne.s32.totalorder %s115, %s131
    %p133 = scmp.eq.s32.totalorder %s18, 0
    %p134 = por %p132, %p133
    %s135 = ssub.s32 %s12, %s19
    %p136 = scmp.eq.s32.totalorder %s135, 0
    %s138 = sadd.s32 %s137, 1
    %s139 = scalar_select %p136, %s137, %s138
    %p142 = pneg %p136
    %p143 = scmp.eq.s32.totalorder %s12, 1
    %p144 = por %p142, %p143
    %p145 = scmp.ne.s32.totalorder %s137, %s140
    %p146 = scmp.eq.s32.totalorder %s12, 0
    %p147 = por %p145, %p146
    %p148 = scmp.ne.s32.totalorder %s137, %s140
    %p149 = scmp.eq.s32.totalorder %s17, 1
    %p150 = por %p148, %p149
    %p151 = scmp.ne.s32.totalorder %s140, %s141
    %p152 = scmp.eq.s32.totalorder %s17, 0
    %p153 = por %p151, %p152
    %p154 = scmp.ne.s32.totalorder %s140, %s141
    %p155 = scmp.eq.s32.totalorder %s18, 1
    %p156 = por %p154, %p155
    %p158 = scmp.ne.s32.totalorder %s141, %s157
    %p159 = scmp.eq.s32.totalorder %s18, 0
    %p160 = por %p158, %p159
    %p161 = scmp.le.s32.totalorder 1, %s12
    %p162 = scmp.lt.s32.totalorder %s12, 3
    %p163 = pnand %p161, %p162
    %p164 = pneg %p163
    // Predicated region
    $region9: #{bottleneck_forward.5} parent=5 // pred_check
      _
    $region10: #{bottleneck_forward.5} parent=5 // pred_check_branch
      %166 = sbr.rel (%p163) target = $region12
    $region11: #{bottleneck_forward.5} parent=5 // pred_region
      %s167 = ssub.s32 %s12, 1
      // Predicated region
      $region13: #{bottleneck_forward.5} parent=11 // pred_check
        %p168 = pneg %p59
      $region14: #{bottleneck_forward.5} parent=11 // pred_check_branch
        %170 = sbr.rel (%p168) target = $region16
      $region15: #{bottleneck_forward.5} parent=11 // pred_region
        _
      $region16: #{bottleneck_forward.5} parent=11 // pred_fallthru
        _
      // Predicated region
      $region17: #{bottleneck_forward.5} parent=11 // pred_check
        %p171 = pneg %p80
      $region18: #{bottleneck_forward.5} parent=11 // pred_check_branch
        %173 = sbr.rel (%p171) target = $region20
      $region19: #{bottleneck_forward.5} parent=11 // pred_region
        _
      $region20: #{bottleneck_forward.5} parent=11 // pred_fallthru
        _
      // Predicated region
      $region21: #{bottleneck_forward.5} parent=11 // pred_check
        %p174 = pneg %p101
      $region22: #{bottleneck_forward.5} parent=11 // pred_check_branch
        %176 = sbr.rel (%p174) target = $region24
      $region23: #{bottleneck_forward.5} parent=11 // pred_region
        _
      $region24: #{bottleneck_forward.5} parent=11 // pred_fallthru
        _
    $region12: #{bottleneck_forward.5} parent=5 // pred_fallthru
      _
    %p177 = scmp.lt.s32.totalorder %s12, 2
    // Predicated region
    $region25: #{bottleneck_forward.5} parent=5 // pred_check
      %p178 = pneg %p177
    $region26: #{bottleneck_forward.5} parent=5 // pred_check_branch
      %180 = sbr.rel (%p178) target = $region28
    $region27: #{bottleneck_forward.5} parent=5 // pred_region
      // Predicated region
      $region29: #{bottleneck_forward.5} parent=27 // pred_check
        %p181 = pneg %p32
      $region30: #{bottleneck_forward.5} parent=27 // pred_check_branch
        %183 = sbr.rel (%p181) target = $region32
      $region31: #{bottleneck_forward.5} parent=27 // pred_region
        %p184 = scmp.lt.s32.totalorder %s12, 1
        %s185 = scalar_select %p184, %s12, 1
        %s186 = smul.addr %s185, 32
        %s187 = smul.addr %s186, 4
        %s188 = scalar_lea.vmem %s0, %s187
      $region32: #{bottleneck_forward.5} parent=27 // pred_fallthru
        _
    $region28: #{bottleneck_forward.5} parent=5 // pred_fallthru
      _
    %p189 = scmp.le.s32.totalorder 1, %s12
    %p190 = scmp.lt.s32.totalorder %s12, 3
    %p191 = pnand %p189, %p190
    %p192 = pneg %p191
    // Predicated region
    $region33: #{bottleneck_forward.5} parent=5 // pred_check
      _
    $region34: #{bottleneck_forward.5} parent=5 // pred_check_branch
      %194 = sbr.rel (%p191) target = $region36
    $region35: #{bottleneck_forward.5} parent=5 // pred_region
      %s195 = ssub.s32 %s12, 1
      %p196 = scmp.lt.s32.totalorder %s17, 1
      %s197 = scalar_select %p196, %s17, 1
      %s198 = smul.addr %s197, 32
      %s199 = smul.addr %s198, 4
      %s200 = scalar_lea.vmem %s0, %s199
      %p201 = pneg %p38
      %p202 = pneg %p35
      %p203 = pneg %p59
      %p204 = pneg %p56
      %p205 = pneg %p80
      %p206 = pneg %p77
      %p207 = pneg %p101
      %p208 = pneg %p98
      %p209 = pneg %p127
      %p210 = pneg %p124
      %p211 = scmp.lt.s32.totalorder %s17, 1
      %s212 = scalar_select %p211, %s17, 1
      %s213 = smul.addr %s212, 8
      %s214 = smul.addr %s213, 4
      %s215 = scalar_lea.vmem %s4, %s214
      %p216 = pneg %p153
      %p217 = pneg %p150
      %p218 = scmp.lt.s32.totalorder %s17, 1
      %s219 = scalar_select %p218, %s17, 1
      %s220 = smul.addr %s219, 2
      %s221 = scalar_lea.vmem %s5, %s220
      %p222 = scmp.lt.s32.totalorder %s17, 1
      %s223 = scalar_select %p222, %s17, 1
      %s224 = smul.addr %s223, 32
      %s225 = smul.addr %s224, 4
      %s226 = scalar_lea.vmem %s0, %s225
      %p227 = scmp.lt.s32.totalorder %s17, 1
      %s228 = scalar_select %p227, %s17, 1
      %s229 = smul.addr %s228, 8
      %s230 = smul.addr %s229, 4
      %s231 = scalar_lea.vmem %s4, %s230
      %p232 = scmp.lt.s32.totalorder %s17, 1
      %s233 = scalar_select %p232, %s17, 1
      %s234 = smul.addr %s233, 2
      %s235 = scalar_lea.vmem %s5, %s234
      %v237 = vld [vmem:[%s1] sm:$0x1]
      %v238 = vld [vmem:[%s2] sm:$0x1]
      %v239 = vld [vmem:[%s226] sm:$0xf]
      %v240 = vld [vmem:[%s226 + $0x4] sm:$0xf]
      %v241 = vld [vmem:[%s226 + $0x8] sm:$0xf]
      %v242 = vld [vmem:[%s226 + $0xc] sm:$0xf]
      %v243 = vld [vmem:[%s226 + $0x10] sm:$0xf]
      %v244 = vld [vmem:[%s226 + $0x14] sm:$0xf]
      %v245 = vld [vmem:[%s226 + $0x18] sm:$0xf]
      %v246 = vld [vmem:[%s226 + $0x1c] sm:$0xf]
      %v247 = vunpack.c.l.bf16 %v239
      %v248 = vunpack.c.l.bf16 %v240
      %v249 = vunpack.c.l.bf16 %v241
      %v250 = vunpack.c.l.bf16 %v242
      %v251 = vunpack.c.l.bf16 %v243
      %v252 = vunpack.c.l.bf16 %v244
      %v253 = vunpack.c.l.bf16 %v245
      %v254 = vunpack.c.l.bf16 %v246
      %v256 = vlaneseq
      %v257 = vshrl.u32 %v256, 7
      %v258 = vsub.s32 0, %v257
      %v259 = vrot.slane %v237, %v258
      %v261 = vmul.f32 %v247, %v259
      %v262 = vmul.f32 %v248, %v259
      %v263 = vmul.f32 %v249, %v259
      %v264 = vmul.f32 %v250, %v259
      %v265 = vmul.f32 %v251, %v259
      %v266 = vmul.f32 %v252, %v259
      %v267 = vmul.f32 %v253, %v259
      %v268 = vmul.f32 %v254, %v259
      %v270 = vlaneseq
      %v271 = vshrl.u32 %v270, 7
      %v272 = vsub.s32 0, %v271
      %v273 = vrot.slane %v238, %v272
      %v275 = vadd.f32 %v261, %v273
      %v276 = vadd.f32 %v262, %v273
      %v277 = vadd.f32 %v263, %v273
      %v278 = vadd.f32 %v264, %v273
      %v279 = vadd.f32 %v265, %v273
      %v280 = vadd.f32 %v266, %v273
      %v281 = vadd.f32 %v267, %v273
      %v282 = vadd.f32 %v268, %v273
      %v283 = vmax.f32 %v275, 0.0
      %v284 = vmax.f32 %v276, 0.0
      %v285 = vmax.f32 %v277, 0.0
      %v286 = vmax.f32 %v278, 0.0
      %v287 = vmax.f32 %v279, 0.0
      %v288 = vmax.f32 %v280, 0.0
      %v289 = vmax.f32 %v281, 0.0
      %v290 = vmax.f32 %v282, 0.0
      %v291 = vpack.c.bf16 %v284, %v283
      %v292 = vpack.c.bf16 %v286, %v285
      %v293 = vpack.c.bf16 %v288, %v287
      %v294 = vpack.c.bf16 %v290, %v289
      %v299 = vunpack.c.l.b16 %v291
      %v300 = vunpack.c.h.b16 %v291
      %v301 = vunpack.c.l.b16 %v292
      %v302 = vunpack.c.h.b16 %v292
      %v303 = vunpack.c.l.b16 %v293
      %v304 = vunpack.c.h.b16 %v293
      %v305 = vunpack.c.l.b16 %v294
      %v306 = vunpack.c.h.b16 %v294
      %v307 = vpack.c.b16 %v299, %v299
      %v308 = vpack.c.b16 %v300, %v300
      %v309 = vpack.c.b16 %v301, %v301
      %v310 = vpack.c.b16 %v302, %v302
      %v311 = vpack.c.b16 %v303, %v303
      %v312 = vpack.c.b16 %v304, %v304
      %v313 = vpack.c.b16 %v305, %v305
      %v314 = vpack.c.b16 %v306, %v306
      %s323 = scalar_lea.vmem [#allocation2], 240
      %324 = vst [vmem:[%s323] sm:$0xf] %v307
      %325 = vst [vmem:[%s323 + $0x8] sm:$0xf] %v308
      %326 = vst [vmem:[%s323 + $0x10] sm:$0xf] %v309
      %327 = vst [vmem:[%s323 + $0x18] sm:$0xf] %v310
      %328 = vst [vmem:[%s323 + $0x20] sm:$0xf] %v311
      %329 = vst [vmem:[%s323 + $0x28] sm:$0xf] %v312
      %330 = vst [vmem:[%s323 + $0x30] sm:$0xf] %v313
      %331 = vst [vmem:[%s323 + $0x38] sm:$0xf] %v314
      %s332 = scalar_lea.vmem [#allocation2], 304
      %333 = vst [vmem:[%s332] sm:$0xf] 0
      %334 = vst [vmem:[%s332 + $0x4] sm:$0x1] 0
      %335 = vst [vmem:[%s332 + $0x8] sm:$0xf] 0
      %336 = vst [vmem:[%s332 + $0xc] sm:$0x1] 0
      %337 = vst [vmem:[%s323 + $0x4] sm:$0x1] 0
      %338 = vst [vmem:[%s323 + $0xc] sm:$0x1] 0
      %339 = vst [vmem:[%s323 + $0x14] sm:$0x1] 0
      %340 = vst [vmem:[%s323 + $0x1c] sm:$0x1] 0
      %341 = vst [vmem:[%s323 + $0x24] sm:$0x1] 0
      %342 = vst [vmem:[%s323 + $0x2c] sm:$0x1] 0
      %343 = vst [vmem:[%s323 + $0x34] sm:$0x1] 0
      %344 = vst [vmem:[%s323 + $0x3c] sm:$0x1] 0
      %345 = vst [vmem:[%s323 + $0x44] sm:$0x1] 0
      %346 = vst [vmem:[%s323 + $0x4c] sm:$0x1] 0
      %v347 = vld [vmem:[%s226 + $0x20] sm:$0xf]
      %v348 = vld [vmem:[%s226 + $0x24] sm:$0xf]
      %v349 = vld [vmem:[%s226 + $0x28] sm:$0xf]
      %v350 = vld [vmem:[%s226 + $0x2c] sm:$0xf]
      %v351 = vld [vmem:[%s226 + $0x30] sm:$0xf]
      %v352 = vld [vmem:[%s226 + $0x34] sm:$0xf]
      %v353 = vld [vmem:[%s226 + $0x38] sm:$0xf]
      %v354 = vld [vmem:[%s226 + $0x3c] sm:$0xf]
      %v355 = vunpack.c.l.bf16 %v347
      %v356 = vunpack.c.l.bf16 %v348
      %v357 = vunpack.c.l.bf16 %v349
      %v358 = vunpack.c.l.bf16 %v350
      %v359 = vunpack.c.l.bf16 %v351
      %v360 = vunpack.c.l.bf16 %v352
      %v361 = vunpack.c.l.bf16 %v353
      %v362 = vunpack.c.l.bf16 %v354
      %v363 = vmul.f32 %v355, %v259
      %v364 = vmul.f32 %v356, %v259
      %v365 = vmul.f32 %v357, %v259
      %v366 = vmul.f32 %v358, %v259
      %v367 = vmul.f32 %v359, %v259
      %v368 = vmul.f32 %v360, %v259
      %v369 = vmul.f32 %v361, %v259
      %v370 = vmul.f32 %v362, %v259
      %v371 = vadd.f32 %v363, %v273
      %v372 = vadd.f32 %v364, %v273
      %v373 = vadd.f32 %v365, %v273
      %v374 = vadd.f32 %v366, %v273
      %v375 = vadd.f32 %v367, %v273
      %v376 = vadd.f32 %v368, %v273
      %v377 = vadd.f32 %v369, %v273
      %v378 = vadd.f32 %v370, %v273
      %v379 = vmax.f32 %v371, 0.0
      %v380 = vmax.f32 %v372, 0.0
      %v381 = vmax.f32 %v373, 0.0
      %v382 = vmax.f32 %v374, 0.0
      %v383 = vmax.f32 %v375, 0.0
      %v384 = vmax.f32 %v376, 0.0
      %v385 = vmax.f32 %v377, 0.0
      %v386 = vmax.f32 %v378, 0.0
      %v387 = vpack.c.bf16 %v380, %v379
      %v388 = vpack.c.bf16 %v382, %v381
      %v389 = vpack.c.bf16 %v384, %v383
      %v390 = vpack.c.bf16 %v386, %v385
      %v395 = vunpack.c.l.b16 %v387
      %v396 = vunpack.c.h.b16 %v387
      %v397 = vunpack.c.l.b16 %v388
      %v398 = vunpack.c.h.b16 %v388
      %v399 = vunpack.c.l.b16 %v389
      %v400 = vunpack.c.h.b16 %v389
      %v401 = vunpack.c.l.b16 %v390
      %v402 = vunpack.c.h.b16 %v390
      %v403 = vpack.c.b16 %v395, %v395
      %v404 = vpack.c.b16 %v396, %v396
      %v405 = vpack.c.b16 %v397, %v397
      %v406 = vpack.c.b16 %v398, %v398
      %v407 = vpack.c.b16 %v399, %v399
      %v408 = vpack.c.b16 %v400, %v400
      %v409 = vpack.c.b16 %v401, %v401
      %v410 = vpack.c.b16 %v402, %v402
      %v412 = vshrl.u32 %v403, 16
      %v414 = vrot.slane %v412, 7
      %v415 = vshll.u32 %v403, 16
      %v417 = vor.u32 %v414, %v415
      %v418 = vrot.slane %v414, 4
      %v420 = vshrl.u32 %v404, 16
      %v422 = vrot.slane %v420, 7
      %v423 = vshll.u32 %v404, 16
      %v425 = vor.u32 %v422, %v423
      %v426 = vrot.slane %v422, 4
      %v428 = vshrl.u32 %v405, 16
      %v430 = vrot.slane %v428, 7
      %v431 = vshll.u32 %v405, 16
      %v433 = vor.u32 %v430, %v431
      %v434 = vrot.slane %v430, 4
      %v436 = vshrl.u32 %v406, 16
      %v438 = vrot.slane %v436, 7
      %v439 = vshll.u32 %v406, 16
      %v441 = vor.u32 %v438, %v439
      %v442 = vrot.slane %v438, 4
      %v444 = vshrl.u32 %v407, 16
      %v446 = vrot.slane %v444, 7
      %v447 = vshll.u32 %v407, 16
      %v449 = vor.u32 %v446, %v447
      %v450 = vrot.slane %v446, 4
      %v452 = vshrl.u32 %v408, 16
      %v454 = vrot.slane %v452, 7
      %v455 = vshll.u32 %v408, 16
      %v457 = vor.u32 %v454, %v455
      %v458 = vrot.slane %v454, 4
      %v460 = vshrl.u32 %v409, 16
      %v462 = vrot.slane %v460, 7
      %v463 = vshll.u32 %v409, 16
      %v465 = vor.u32 %v462, %v463
      %v466 = vrot.slane %v462, 4
      %v468 = vshrl.u32 %v410, 16
      %v470 = vrot.slane %v468, 7
      %v471 = vshll.u32 %v410, 16
      %v473 = vor.u32 %v470, %v471
      %v474 = vrot.slane %v470, 4
      %s491 = scalar_lea.vmem [#allocation2], 160
      %vm492 = vcmask 1043456
      %vm493 = vsmask.f32 7938
      %vm494 = vmand %vm492, %vm493
      %v495 = vld [vmem:[%s491] sm:$0xf]
      %v496 = vsel %vm494, %v417, %v495
      %497 = vst [vmem:[%s491] sm:$0xf] %v496
      %vm498 = vcmask 1040384
      %vm499 = vsmask.f32 256
      %vm500 = vmand %vm498, %vm499
      %v501 = vld [vmem:[%s491 + $0x4] sm:$0x1]
      %v502 = vsel %vm500, %v418, %v501
      %503 = vst [vmem:[%s491 + $0x4] sm:$0x1] %v502
      %v504 = vld [vmem:[%s491 + $0x8] sm:$0xf]
      %v505 = vsel %vm494, %v425, %v504
      %506 = vst [vmem:[%s491 + $0x8] sm:$0xf] %v505
      %v507 = vld [vmem:[%s491 + $0xc] sm:$0x1]
      %v508 = vsel %vm500, %v426, %v507
      %509 = vst [vmem:[%s491 + $0xc] sm:$0x1] %v508
      %v510 = vld [vmem:[%s491 + $0x10] sm:$0xf]
      %v511 = vsel %vm494, %v433, %v510
      %512 = vst [vmem:[%s491 + $0x10] sm:$0xf] %v511
      %v513 = vld [vmem:[%s491 + $0x14] sm:$0x1]
      %v514 = vsel %vm500, %v434, %v513
      %515 = vst [vmem:[%s491 + $0x14] sm:$0x1] %v514
      %v516 = vld [vmem:[%s491 + $0x18] sm:$0xf]
      %v517 = vsel %vm494, %v441, %v516
      %518 = vst [vmem:[%s491 + $0x18] sm:$0xf] %v517
      %v519 = vld [vmem:[%s491 + $0x1c] sm:$0x1]
      %v520 = vsel %vm500, %v442, %v519
      %521 = vst [vmem:[%s491 + $0x1c] sm:$0x1] %v520
      %v522 = vld [vmem:[%s491 + $0x20] sm:$0xf]
      %v523 = vsel %vm494, %v449, %v522
      %524 = vst [vmem:[%s491 + $0x20] sm:$0xf] %v523
      %v525 = vld [vmem:[%s491 + $0x24] sm:$0x1]
      %v526 = vsel %vm500, %v450, %v525
      %527 = vst [vmem:[%s491 + $0x24] sm:$0x1] %v526
      %v528 = vld [vmem:[%s491 + $0x28] sm:$0xf]
      %v529 = vsel %vm494, %v457, %v528
      %530 = vst [vmem:[%s491 + $0x28] sm:$0xf] %v529
      %v531 = vld [vmem:[%s491 + $0x2c] sm:$0x1]
      %v532 = vsel %vm500, %v458, %v531
      %533 = vst [vmem:[%s491 + $0x2c] sm:$0x1] %v532
      %v534 = vld [vmem:[%s491 + $0x30] sm:$0xf]
      %v535 = vsel %vm494, %v465, %v534
      %536 = vst [vmem:[%s491 + $0x30] sm:$0xf] %v535
      %v537 = vld [vmem:[%s491 + $0x34] sm:$0x1]
      %v538 = vsel %vm500, %v466, %v537
      %539 = vst [vmem:[%s491 + $0x34] sm:$0x1] %v538
      %v540 = vld [vmem:[%s491 + $0x38] sm:$0xf]
      %v541 = vsel %vm494, %v473, %v540
      %542 = vst [vmem:[%s491 + $0x38] sm:$0xf] %v541
      %v543 = vld [vmem:[%s491 + $0x3c] sm:$0x1]
      %v544 = vsel %vm500, %v474, %v543
      %545 = vst [vmem:[%s491 + $0x3c] sm:$0x1] %v544
      %s546 = scalar_lea.vmem [#allocation2], 224
      %547 = vst [vmem:[%s546] sm:$0xf] 0
      %548 = vst [vmem:[%s546 + $0x4] sm:$0x1] 0
      %549 = vst [vmem:[%s546 + $0x8] sm:$0xf] 0
      %550 = vst [vmem:[%s546 + $0xc] sm:$0x1] 0
      %v551 = vld [vmem:[%s491] sm:$0x1]
      %v552 = vsel %vm500, 0, %v551
      %553 = vst [vmem:[%s491] sm:$0x1] %v552
      %v554 = vld [vmem:[%s491 + $0x8] sm:$0x1]
      %v555 = vsel %vm500, 0, %v554
      %556 = vst [vmem:[%s491 + $0x8] sm:$0x1] %v555
      %v557 = vld [vmem:[%s491 + $0x10] sm:$0x1]
      %v558 = vsel %vm500, 0, %v557
      %559 = vst [vmem:[%s491 + $0x10] sm:$0x1] %v558
      %v560 = vld [vmem:[%s491 + $0x18] sm:$0x1]
      %v561 = vsel %vm500, 0, %v560
      %562 = vst [vmem:[%s491 + $0x18] sm:$0x1] %v561
      %v563 = vld [vmem:[%s491 + $0x20] sm:$0x1]
      %v564 = vsel %vm500, 0, %v563
      %565 = vst [vmem:[%s491 + $0x20] sm:$0x1] %v564
      %v566 = vld [vmem:[%s491 + $0x28] sm:$0x1]
      %v567 = vsel %vm500, 0, %v566
      %568 = vst [vmem:[%s491 + $0x28] sm:$0x1] %v567
      %v569 = vld [vmem:[%s491 + $0x30] sm:$0x1]
      %v570 = vsel %vm500, 0, %v569
      %571 = vst [vmem:[%s491 + $0x30] sm:$0x1] %v570
      %v572 = vld [vmem:[%s491 + $0x38] sm:$0x1]
      %v573 = vsel %vm500, 0, %v572
      %574 = vst [vmem:[%s491 + $0x38] sm:$0x1] %v573
      %v575 = vld [vmem:[%s491 + $0x40] sm:$0x1]
      %v576 = vsel %vm500, 0, %v575
      %577 = vst [vmem:[%s491 + $0x40] sm:$0x1] %v576
      %v578 = vld [vmem:[%s491 + $0x48] sm:$0x1]
      %v579 = vsel %vm500, 0, %v578
      %580 = vst [vmem:[%s491 + $0x48] sm:$0x1] %v579
      %vm581 = vmand %vm498, %vm493
      %v582 = vld [vmem:[%s491 + $0x4] sm:$0x1]
      %v583 = vsel %vm581, 0, %v582
      %584 = vst [vmem:[%s491 + $0x4] sm:$0x1] %v583
      %v585 = vld [vmem:[%s491 + $0xc] sm:$0x1]
      %v586 = vsel %vm581, 0, %v585
      %587 = vst [vmem:[%s491 + $0xc] sm:$0x1] %v586
      %v588 = vld [vmem:[%s491 + $0x14] sm:$0x1]
      %v589 = vsel %vm581, 0, %v588
      %590 = vst [vmem:[%s491 + $0x14] sm:$0x1] %v589
      %v591 = vld [vmem:[%s491 + $0x1c] sm:$0x1]
      %v592 = vsel %vm581, 0, %v591
      %593 = vst [vmem:[%s491 + $0x1c] sm:$0x1] %v592
      %v594 = vld [vmem:[%s491 + $0x24] sm:$0x1]
      %v595 = vsel %vm581, 0, %v594
      %596 = vst [vmem:[%s491 + $0x24] sm:$0x1] %v595
      %v597 = vld [vmem:[%s491 + $0x2c] sm:$0x1]
      %v598 = vsel %vm581, 0, %v597
      %599 = vst [vmem:[%s491 + $0x2c] sm:$0x1] %v598
      %v600 = vld [vmem:[%s491 + $0x34] sm:$0x1]
      %v601 = vsel %vm581, 0, %v600
      %602 = vst [vmem:[%s491 + $0x34] sm:$0x1] %v601
      %v603 = vld [vmem:[%s491 + $0x3c] sm:$0x1]
      %v604 = vsel %vm581, 0, %v603
      %605 = vst [vmem:[%s491 + $0x3c] sm:$0x1] %v604
      %v606 = vld [vmem:[%s491 + $0x44] sm:$0x1]
      %v607 = vsel %vm581, 0, %v606
      %608 = vst [vmem:[%s491 + $0x44] sm:$0x1] %v607
      %v609 = vld [vmem:[%s491 + $0x4c] sm:$0x1]
      %v610 = vsel %vm581, 0, %v609
      %611 = vst [vmem:[%s491 + $0x4c] sm:$0x1] %v610
      %v612 = vld [vmem:[%s226 + $0x40] sm:$0xf]
      %v613 = vld [vmem:[%s226 + $0x44] sm:$0xf]
      %v614 = vld [vmem:[%s226 + $0x48] sm:$0xf]
      %v615 = vld [vmem:[%s226 + $0x4c] sm:$0xf]
      %v616 = vld [vmem:[%s226 + $0x50] sm:$0xf]
      %v617 = vld [vmem:[%s226 + $0x54] sm:$0xf]
      %v618 = vld [vmem:[%s226 + $0x58] sm:$0xf]
      %v619 = vld [vmem:[%s226 + $0x5c] sm:$0xf]
      %v620 = vunpack.c.l.bf16 %v612
      %v621 = vunpack.c.l.bf16 %v613
      %v622 = vunpack.c.l.bf16 %v614
      %v623 = vunpack.c.l.bf16 %v615
      %v624 = vunpack.c.l.bf16 %v616
      %v625 = vunpack.c.l.bf16 %v617
      %v626 = vunpack.c.l.bf16 %v618
      %v627 = vunpack.c.l.bf16 %v619
      %v628 = vmul.f32 %v620, %v259
      %v629 = vmul.f32 %v621, %v259
      %v630 = vmul.f32 %v622, %v259
      %v631 = vmul.f32 %v623, %v259
      %v632 = vmul.f32 %v624, %v259
      %v633 = vmul.f32 %v625, %v259
      %v634 = vmul.f32 %v626, %v259
      %v635 = vmul.f32 %v627, %v259
      %v636 = vadd.f32 %v628, %v273
      %v637 = vadd.f32 %v629, %v273
      %v638 = vadd.f32 %v630, %v273
      %v639 = vadd.f32 %v631, %v273
      %v640 = vadd.f32 %v632, %v273
      %v641 = vadd.f32 %v633, %v273
      %v642 = vadd.f32 %v634, %v273
      %v643 = vadd.f32 %v635, %v273
      %v644 = vmax.f32 %v636, 0.0
      %v645 = vmax.f32 %v637, 0.0
      %v646 = vmax.f32 %v638, 0.0
      %v647 = vmax.f32 %v639, 0.0
      %v648 = vmax.f32 %v640, 0.0
      %v649 = vmax.f32 %v641, 0.0
      %v650 = vmax.f32 %v642, 0.0
      %v651 = vmax.f32 %v643, 0.0
      %v652 = vpack.c.bf16 %v645, %v644
      %v653 = vpack.c.bf16 %v647, %v646
      %v654 = vpack.c.bf16 %v649, %v648
      %v655 = vpack.c.bf16 %v651, %v650
      %v660 = vunpack.c.l.b16 %v652
      %v661 = vunpack.c.h.b16 %v652
      %v662 = vunpack.c.l.b16 %v653
      %v663 = vunpack.c.h.b16 %v653
      %v664 = vunpack.c.l.b16 %v654
      %v665 = vunpack.c.h.b16 %v654
      %v666 = vunpack.c.l.b16 %v655
      %v667 = vunpack.c.h.b16 %v655
      %v668 = vpack.c.b16 %v660, %v660
      %v669 = vpack.c.b16 %v661, %v661
      %v670 = vpack.c.b16 %v662, %v662
      %v671 = vpack.c.b16 %v663, %v663
      %v672 = vpack.c.b16 %v664, %v664
      %v673 = vpack.c.b16 %v665, %v665
      %v674 = vpack.c.b16 %v666, %v666
      %v675 = vpack.c.b16 %v667, %v667
      %s684 = scalar_lea.vmem [#allocation2], 88
      %685 = vst [vmem:[%s684] sm:$0xf] %v668
      %686 = vst [vmem:[%s684 + $0x8] sm:$0xf] %v669
      %687 = vst [vmem:[%s684 + $0x10] sm:$0xf] %v670
      %688 = vst [vmem:[%s684 + $0x18] sm:$0xf] %v671
      %689 = vst [vmem:[%s684 + $0x20] sm:$0xf] %v672
      %690 = vst [vmem:[%s684 + $0x28] sm:$0xf] %v673
      %691 = vst [vmem:[%s684 + $0x30] sm:$0xf] %v674
      %692 = vst [vmem:[%s684 + $0x38] sm:$0xf] %v675
      %s693 = scalar_lea.vmem [#allocation2], 80
      %694 = vst [vmem:[%s693] sm:$0xf] 0
      %695 = vst [vmem:[%s693 + $0x4] sm:$0x1] 0
      %s696 = scalar_lea.vmem [#allocation2], 152
      %697 = vst [vmem:[%s696] sm:$0xf] 0
      %698 = vst [vmem:[%s696 + $0x4] sm:$0x1] 0
      %699 = vst [vmem:[%s693 + $0x4] sm:$0x1] 0
      %700 = vst [vmem:[%s693 + $0xc] sm:$0x1] 0
      %701 = vst [vmem:[%s693 + $0x14] sm:$0x1] 0
      %702 = vst [vmem:[%s693 + $0x1c] sm:$0x1] 0
      %703 = vst [vmem:[%s693 + $0x24] sm:$0x1] 0
      %704 = vst [vmem:[%s693 + $0x2c] sm:$0x1] 0
      %705 = vst [vmem:[%s693 + $0x34] sm:$0x1] 0
      %706 = vst [vmem:[%s693 + $0x3c] sm:$0x1] 0
      %707 = vst [vmem:[%s693 + $0x44] sm:$0x1] 0
      %708 = vst [vmem:[%s693 + $0x4c] sm:$0x1] 0
      %v709 = vld [vmem:[%s226 + $0x60] sm:$0xf]
      %v710 = vld [vmem:[%s226 + $0x64] sm:$0xf]
      %v711 = vld [vmem:[%s226 + $0x68] sm:$0xf]
      %v712 = vld [vmem:[%s226 + $0x6c] sm:$0xf]
      %v713 = vld [vmem:[%s226 + $0x70] sm:$0xf]
      %v714 = vld [vmem:[%s226 + $0x74] sm:$0xf]
      %v715 = vld [vmem:[%s226 + $0x78] sm:$0xf]
      %v716 = vld [vmem:[%s226 + $0x7c] sm:$0xf]
      %v717 = vunpack.c.l.bf16 %v709
      %v718 = vunpack.c.l.bf16 %v710
      %v719 = vunpack.c.l.bf16 %v711
      %v720 = vunpack.c.l.bf16 %v712
      %v721 = vunpack.c.l.bf16 %v713
      %v722 = vunpack.c.l.bf16 %v714
      %v723 = vunpack.c.l.bf16 %v715
      %v724 = vunpack.c.l.bf16 %v716
      %v725 = vmul.f32 %v717, %v259
      %v726 = vmul.f32 %v718, %v259
      %v727 = vmul.f32 %v719, %v259
      %v728 = vmul.f32 %v720, %v259
      %v729 = vmul.f32 %v721, %v259
      %v730 = vmul.f32 %v722, %v259
      %v731 = vmul.f32 %v723, %v259
      %v732 = vmul.f32 %v724, %v259
      %v733 = vadd.f32 %v725, %v273
      %v734 = vadd.f32 %v726, %v273
      %v735 = vadd.f32 %v727, %v273
      %v736 = vadd.f32 %v728, %v273
      %v737 = vadd.f32 %v729, %v273
      %v738 = vadd.f32 %v730, %v273
      %v739 = vadd.f32 %v731, %v273
      %v740 = vadd.f32 %v732, %v273
      %v741 = vmax.f32 %v733, 0.0
      %v742 = vmax.f32 %v734, 0.0
      %v743 = vmax.f32 %v735, 0.0
      %v744 = vmax.f32 %v736, 0.0
      %v745 = vmax.f32 %v737, 0.0
      %v746 = vmax.f32 %v738, 0.0
      %v747 = vmax.f32 %v739, 0.0
      %v748 = vmax.f32 %v740, 0.0
      %v749 = vpack.c.bf16 %v742, %v741
      %v750 = vpack.c.bf16 %v744, %v743
      %v751 = vpack.c.bf16 %v746, %v745
      %v752 = vpack.c.bf16 %v748, %v747
      %v757 = vunpack.c.l.b16 %v749
      %v758 = vunpack.c.h.b16 %v749
      %v759 = vunpack.c.l.b16 %v750
      %v760 = vunpack.c.h.b16 %v750
      %v761 = vunpack.c.l.b16 %v751
      %v762 = vunpack.c.h.b16 %v751
      %v763 = vunpack.c.l.b16 %v752
      %v764 = vunpack.c.h.b16 %v752
      %v765 = vpack.c.b16 %v757, %v757
      %v766 = vpack.c.b16 %v758, %v758
      %v767 = vpack.c.b16 %v759, %v759
      %v768 = vpack.c.b16 %v760, %v760
      %v769 = vpack.c.b16 %v761, %v761
      %v770 = vpack.c.b16 %v762, %v762
      %v771 = vpack.c.b16 %v763, %v763
      %v772 = vpack.c.b16 %v764, %v764
      %v774 = vshrl.u32 %v765, 16
      %v776 = vrot.slane %v774, 7
      %v777 = vshll.u32 %v765, 16
      %v779 = vor.u32 %v776, %v777
      %v780 = vrot.slane %v776, 4
      %v782 = vshrl.u32 %v766, 16
      %v784 = vrot.slane %v782, 7
      %v785 = vshll.u32 %v766, 16
      %v787 = vor.u32 %v784, %v785
      %v788 = vrot.slane %v784, 4
      %v790 = vshrl.u32 %v767, 16
      %v792 = vrot.slane %v790, 7
      %v793 = vshll.u32 %v767, 16
      %v795 = vor.u32 %v792, %v793
      %v796 = vrot.slane %v792, 4
      %v798 = vshrl.u32 %v768, 16
      %v800 = vrot.slane %v798, 7
      %v801 = vshll.u32 %v768, 16
      %v803 = vor.u32 %v800, %v801
      %v804 = vrot.slane %v800, 4
      %v806 = vshrl.u32 %v769, 16
      %v808 = vrot.slane %v806, 7
      %v809 = vshll.u32 %v769, 16
      %v811 = vor.u32 %v808, %v809
      %v812 = vrot.slane %v808, 4
      %v814 = vshrl.u32 %v770, 16
      %v816 = vrot.slane %v814, 7
      %v817 = vshll.u32 %v770, 16
      %v819 = vor.u32 %v816, %v817
      %v820 = vrot.slane %v816, 4
      %v822 = vshrl.u32 %v771, 16
      %v824 = vrot.slane %v822, 7
      %v825 = vshll.u32 %v771, 16
      %v827 = vor.u32 %v824, %v825
      %v828 = vrot.slane %v824, 4
      %v830 = vshrl.u32 %v772, 16
      %v832 = vrot.slane %v830, 7
      %v833 = vshll.u32 %v772, 16
      %v835 = vor.u32 %v832, %v833
      %v836 = vrot.slane %v832, 4
      %s853 = scalar_lea.vmem [#allocation2], 8
      %v854 = vld [vmem:[%s853] sm:$0xf]
      %v855 = vsel %vm494, %v779, %v854
      %856 = vst [vmem:[%s853] sm:$0xf] %v855
      %v857 = vld [vmem:[%s853 + $0x4] sm:$0x1]
      %v858 = vsel %vm500, %v780, %v857
      %859 = vst [vmem:[%s853 + $0x4] sm:$0x1] %v858
      %v860 = vld [vmem:[%s853 + $0x8] sm:$0xf]
      %v861 = vsel %vm494, %v787, %v860
      %862 = vst [vmem:[%s853 + $0x8] sm:$0xf] %v861
      %v863 = vld [vmem:[%s853 + $0xc] sm:$0x1]
      %v864 = vsel %vm500, %v788, %v863
      %865 = vst [vmem:[%s853 + $0xc] sm:$0x1] %v864
      %v866 = vld [vmem:[%s853 + $0x10] sm:$0xf]
      %v867 = vsel %vm494, %v795, %v866
      %868 = vst [vmem:[%s853 + $0x10] sm:$0xf] %v867
      %v869 = vld [vmem:[%s853 + $0x14] sm:$0x1]
      %v870 = vsel %vm500, %v796, %v869
      %871 = vst [vmem:[%s853 + $0x14] sm:$0x1] %v870
      %v872 = vld [vmem:[%s853 + $0x18] sm:$0xf]
      %v873 = vsel %vm494, %v803, %v872
      %874 = vst [vmem:[%s853 + $0x18] sm:$0xf] %v873
      %v875 = vld [vmem:[%s853 + $0x1c] sm:$0x1]
      %v876 = vsel %vm500, %v804, %v875
      %877 = vst [vmem:[%s853 + $0x1c] sm:$0x1] %v876
      %v878 = vld [vmem:[%s853 + $0x20] sm:$0xf]
      %v879 = vsel %vm494, %v811, %v878
      %880 = vst [vmem:[%s853 + $0x20] sm:$0xf] %v879
      %v881 = vld [vmem:[%s853 + $0x24] sm:$0x1]
      %v882 = vsel %vm500, %v812, %v881
      %883 = vst [vmem:[%s853 + $0x24] sm:$0x1] %v882
      %v884 = vld [vmem:[%s853 + $0x28] sm:$0xf]
      %v885 = vsel %vm494, %v819, %v884
      %886 = vst [vmem:[%s853 + $0x28] sm:$0xf] %v885
      %v887 = vld [vmem:[%s853 + $0x2c] sm:$0x1]
      %v888 = vsel %vm500, %v820, %v887
      %889 = vst [vmem:[%s853 + $0x2c] sm:$0x1] %v888
      %v890 = vld [vmem:[%s853 + $0x30] sm:$0xf]
      %v891 = vsel %vm494, %v827, %v890
      %892 = vst [vmem:[%s853 + $0x30] sm:$0xf] %v891
      %v893 = vld [vmem:[%s853 + $0x34] sm:$0x1]
      %v894 = vsel %vm500, %v828, %v893
      %895 = vst [vmem:[%s853 + $0x34] sm:$0x1] %v894
      %v896 = vld [vmem:[%s853 + $0x38] sm:$0xf]
      %v897 = vsel %vm494, %v835, %v896
      %898 = vst [vmem:[%s853 + $0x38] sm:$0xf] %v897
      %v899 = vld [vmem:[%s853 + $0x3c] sm:$0x1]
      %v900 = vsel %vm500, %v836, %v899
      %901 = vst [vmem:[%s853 + $0x3c] sm:$0x1] %v900
      %902 = vst [vmem:[#allocation2] sm:$0xf] 0
      %903 = vst [vmem:[#allocation2 + $0x4] sm:$0x1] 0
      %s904 = scalar_lea.vmem [#allocation2], 72
      %905 = vst [vmem:[%s904] sm:$0xf] 0
      %906 = vst [vmem:[%s904 + $0x4] sm:$0x1] 0
      %v907 = vld [vmem:[#allocation2] sm:$0x1]
      %v908 = vsel %vm500, 0, %v907
      %909 = vst [vmem:[#allocation2] sm:$0x1] %v908
      %v910 = vld [vmem:[#allocation2 + $0x8] sm:$0x1]
      %v911 = vsel %vm500, 0, %v910
      %912 = vst [vmem:[#allocation2 + $0x8] sm:$0x1] %v911
      %v913 = vld [vmem:[#allocation2 + $0x10] sm:$0x1]
      %v914 = vsel %vm500, 0, %v913
      %915 = vst [vmem:[#allocation2 + $0x10] sm:$0x1] %v914
      %v916 = vld [vmem:[#allocation2 + $0x18] sm:$0x1]
      %v917 = vsel %vm500, 0, %v916
      %918 = vst [vmem:[#allocation2 + $0x18] sm:$0x1] %v917
      %v919 = vld [vmem:[#allocation2 + $0x20] sm:$0x1]
      %v920 = vsel %vm500, 0, %v919
      %921 = vst [vmem:[#allocation2 + $0x20] sm:$0x1] %v920
      %v922 = vld [vmem:[#allocation2 + $0x28] sm:$0x1]
      %v923 = vsel %vm500, 0, %v922
      %924 = vst [vmem:[#allocation2 + $0x28] sm:$0x1] %v923
      %v925 = vld [vmem:[#allocation2 + $0x30] sm:$0x1]
      %v926 = vsel %vm500, 0, %v925
      %927 = vst [vmem:[#allocation2 + $0x30] sm:$0x1] %v926
      %v928 = vld [vmem:[#allocation2 + $0x38] sm:$0x1]
      %v929 = vsel %vm500, 0, %v928
      %930 = vst [vmem:[#allocation2 + $0x38] sm:$0x1] %v929
      %v931 = vld [vmem:[#allocation2 + $0x40] sm:$0x1]
      %v932 = vsel %vm500, 0, %v931
      %933 = vst [vmem:[#allocation2 + $0x40] sm:$0x1] %v932
      %v934 = vld [vmem:[#allocation2 + $0x48] sm:$0x1]
      %v935 = vsel %vm500, 0, %v934
      %936 = vst [vmem:[#allocation2 + $0x48] sm:$0x1] %v935
      %v937 = vld [vmem:[#allocation2 + $0x4] sm:$0x1]
      %v938 = vsel %vm581, 0, %v937
      %939 = vst [vmem:[#allocation2 + $0x4] sm:$0x1] %v938
      %v940 = vld [vmem:[#allocation2 + $0xc] sm:$0x1]
      %v941 = vsel %vm581, 0, %v940
      %942 = vst [vmem:[#allocation2 + $0xc] sm:$0x1] %v941
      %v943 = vld [vmem:[#allocation2 + $0x14] sm:$0x1]
      %v944 = vsel %vm581, 0, %v943
      %945 = vst [vmem:[#allocation2 + $0x14] sm:$0x1] %v944
      %v946 = vld [vmem:[#allocation2 + $0x1c] sm:$0x1]
      %v947 = vsel %vm581, 0, %v946
      %948 = vst [vmem:[#allocation2 + $0x1c] sm:$0x1] %v947
      %v949 = vld [vmem:[#allocation2 + $0x24] sm:$0x1]
      %v950 = vsel %vm581, 0, %v949
      %951 = vst [vmem:[#allocation2 + $0x24] sm:$0x1] %v950
      %v952 = vld [vmem:[#allocation2 + $0x2c] sm:$0x1]
      %v953 = vsel %vm581, 0, %v952
      %954 = vst [vmem:[#allocation2 + $0x2c] sm:$0x1] %v953
      %v955 = vld [vmem:[#allocation2 + $0x34] sm:$0x1]
      %v956 = vsel %vm581, 0, %v955
      %957 = vst [vmem:[#allocation2 + $0x34] sm:$0x1] %v956
      %v958 = vld [vmem:[#allocation2 + $0x3c] sm:$0x1]
      %v959 = vsel %vm581, 0, %v958
      %960 = vst [vmem:[#allocation2 + $0x3c] sm:$0x1] %v959
      %v961 = vld [vmem:[#allocation2 + $0x44] sm:$0x1]
      %v962 = vsel %vm581, 0, %v961
      %963 = vst [vmem:[#allocation2 + $0x44] sm:$0x1] %v962
      %v964 = vld [vmem:[#allocation2 + $0x4c] sm:$0x1]
      %v965 = vsel %vm581, 0, %v964
      %966 = vst [vmem:[#allocation2 + $0x4c] sm:$0x1] %v965
      %v967 = vld [vmem:[#allocation2] sm:$0xf]
      %v968 = vld [vmem:[#allocation2 + $0x8] sm:$0xf]
      %v969 = vld [vmem:[#allocation2 + $0x10] sm:$0xf]
      %v970 = vld [vmem:[#allocation2 + $0x18] sm:$0xf]
      %v971 = vld [vmem:[#allocation2 + $0x20] sm:$0xf]
      %v972 = vld [vmem:[#allocation2 + $0x28] sm:$0xf]
      %v973 = vld [vmem:[#allocation2 + $0x30] sm:$0xf]
      %v974 = vld [vmem:[#allocation2 + $0x38] sm:$0xf]
      %v975 = vld [vmem:[%s693] sm:$0xf]
      %v976 = vld [vmem:[%s693 + $0x8] sm:$0xf]
      %v977 = vld [vmem:[%s693 + $0x10] sm:$0xf]
      %v978 = vld [vmem:[%s693 + $0x18] sm:$0xf]
      %v979 = vld [vmem:[%s693 + $0x20] sm:$0xf]
      %v980 = vld [vmem:[%s693 + $0x28] sm:$0xf]
      %v981 = vld [vmem:[%s693 + $0x30] sm:$0xf]
      %v982 = vld [vmem:[%s693 + $0x38] sm:$0xf]
      %v983 = vld [vmem:[#allocation2 + $0x4] sm:$0x1]
      %v984 = vld [vmem:[#allocation2 + $0xc] sm:$0x1]
      %v985 = vld [vmem:[#allocation2 + $0x14] sm:$0x1]
      %v986 = vld [vmem:[#allocation2 + $0x1c] sm:$0x1]
      %v987 = vld [vmem:[#allocation2 + $0x24] sm:$0x1]
      %v988 = vld [vmem:[#allocation2 + $0x2c] sm:$0x1]
      %v989 = vld [vmem:[#allocation2 + $0x34] sm:$0x1]
      %v990 = vld [vmem:[#allocation2 + $0x3c] sm:$0x1]
      %vm991 = vsmask.f32 3328
      %vm992 = vsmask.f32 7440
      %vm993 = vmor %vm991, %vm992
      %v995 = vshrl.u32 %v967, 16
      %v997 = vrot.slane %v995, 4
      %v998 = vshll.u32 %v967, 16
      %v1000 = vrot.slane %v998, 5
      %v1001 = vor.u32 %v997, %v1000
      %v1002 = vrot.slane %v1001, 4
      %v1004 = vshll.u32 %v983, 16
      %v1006 = vrot.slane %v1004, 5
      %v1007 = vsel %vm993, %v1002, %v1006
      %v1009 = vshrl.u32 %v968, 16
      %v1011 = vrot.slane %v1009, 4
      %v1012 = vshll.u32 %v968, 16
      %v1014 = vrot.slane %v1012, 5
      %v1015 = vor.u32 %v1011, %v1014
      %v1016 = vrot.slane %v1015, 4
      %v1018 = vshll.u32 %v984, 16
      %v1020 = vrot.slane %v1018, 5
      %v1021 = vsel %vm993, %v1016, %v1020
      %v1023 = vshrl.u32 %v969, 16
      %v1025 = vrot.slane %v1023, 4
      %v1026 = vshll.u32 %v969, 16
      %v1028 = vrot.slane %v1026, 5
      %v1029 = vor.u32 %v1025, %v1028
      %v1030 = vrot.slane %v1029, 4
      %v1032 = vshll.u32 %v985, 16
      %v1034 = vrot.slane %v1032, 5
      %v1035 = vsel %vm993, %v1030, %v1034
      %v1037 = vshrl.u32 %v970, 16
      %v1039 = vrot.slane %v1037, 4
      %v1040 = vshll.u32 %v970, 16
      %v1042 = vrot.slane %v1040, 5
      %v1043 = vor.u32 %v1039, %v1042
      %v1044 = vrot.slane %v1043, 4
      %v1046 = vshll.u32 %v986, 16
      %v1048 = vrot.slane %v1046, 5
      %v1049 = vsel %vm993, %v1044, %v1048
      %v1051 = vshrl.u32 %v971, 16
      %v1053 = vrot.slane %v1051, 4
      %v1054 = vshll.u32 %v971, 16
      %v1056 = vrot.slane %v1054, 5
      %v1057 = vor.u32 %v1053, %v1056
      %v1058 = vrot.slane %v1057, 4
      %v1060 = vshll.u32 %v987, 16
      %v1062 = vrot.slane %v1060, 5
      %v1063 = vsel %vm993, %v1058, %v1062
      %v1065 = vshrl.u32 %v972, 16
      %v1067 = vrot.slane %v1065, 4
      %v1068 = vshll.u32 %v972, 16
      %v1070 = vrot.slane %v1068, 5
      %v1071 = vor.u32 %v1067, %v1070
      %v1072 = vrot.slane %v1071, 4
      %v1074 = vshll.u32 %v988, 16
      %v1076 = vrot.slane %v1074, 5
      %v1077 = vsel %vm993, %v1072, %v1076
      %v1079 = vshrl.u32 %v973, 16
      %v1081 = vrot.slane %v1079, 4
      %v1082 = vshll.u32 %v973, 16
      %v1084 = vrot.slane %v1082, 5
      %v1085 = vor.u32 %v1081, %v1084
      %v1086 = vrot.slane %v1085, 4
      %v1088 = vshll.u32 %v989, 16
      %v1090 = vrot.slane %v1088, 5
      %v1091 = vsel %vm993, %v1086, %v1090
      %v1093 = vshrl.u32 %v974, 16
      %v1095 = vrot.slane %v1093, 4
      %v1096 = vshll.u32 %v974, 16
      %v1098 = vrot.slane %v1096, 5
      %v1099 = vor.u32 %v1095, %v1098
      %v1100 = vrot.slane %v1099, 4
      %v1102 = vshll.u32 %v990, 16
      %v1104 = vrot.slane %v1102, 5
      %v1105 = vsel %vm993, %v1100, %v1104
      %v1114 = vunpack.c.l.b16 %v967
      %v1115 = vunpack.c.l.b16 %v968
      %v1116 = vunpack.c.l.b16 %v969
      %v1117 = vunpack.c.l.b16 %v970
      %v1118 = vunpack.c.l.b16 %v971
      %v1119 = vunpack.c.l.b16 %v972
      %v1120 = vunpack.c.l.b16 %v973
      %v1121 = vunpack.c.l.b16 %v974
      %v1122 = vpack.c.b16 %v1115, %v1114
      %v1123 = vpack.c.b16 %v1117, %v1116
      %v1124 = vpack.c.b16 %v1119, %v1118
      %v1125 = vpack.c.b16 %v1121, %v1120
      %v1138 = vunpack.c.l.b16 %v975
      %v1139 = vunpack.c.l.b16 %v976
      %v1140 = vunpack.c.l.b16 %v977
      %v1141 = vunpack.c.l.b16 %v978
      %v1142 = vunpack.c.l.b16 %v979
      %v1143 = vunpack.c.l.b16 %v980
      %v1144 = vunpack.c.l.b16 %v981
      %v1145 = vunpack.c.l.b16 %v982
      %v1146 = vpack.c.b16 %v1139, %v1138
      %v1147 = vpack.c.b16 %v1141, %v1140
      %v1148 = vpack.c.b16 %v1143, %v1142
      %v1149 = vpack.c.b16 %v1145, %v1144
      %v1154 = vunpack.c.l.b16 %v1007
      %v1155 = vunpack.c.l.b16 %v1021
      %v1156 = vunpack.c.l.b16 %v1035
      %v1157 = vunpack.c.l.b16 %v1049
      %v1158 = vunpack.c.l.b16 %v1063
      %v1159 = vunpack.c.l.b16 %v1077
      %v1160 = vunpack.c.l.b16 %v1091
      %v1161 = vunpack.c.l.b16 %v1105
      %v1162 = vpack.c.b16 %v1155, %v1154
      %v1163 = vpack.c.b16 %v1157, %v1156
      %v1164 = vpack.c.b16 %v1159, %v1158
      %v1165 = vpack.c.b16 %v1161, %v1160
      %v1170 = vld [vmem:[%s3] sm:$0xf]
      %v1171 = vld [vmem:[%s3 + $0x4] sm:$0xf]
      %v1172 = vld [vmem:[%s3 + $0x8] sm:$0xf]
      %v1173 = vld [vmem:[%s3 + $0xc] sm:$0xf]
      %v1174 = vld [vmem:[%s3 + $0x10] sm:$0xf]
      %v1175 = vld [vmem:[%s3 + $0x14] sm:$0xf]
      %v1176 = vld [vmem:[%s3 + $0x18] sm:$0xf]
      %v1177 = vld [vmem:[%s3 + $0x1c] sm:$0xf]
      %v1178 = vld [vmem:[%s3 + $0x20] sm:$0xf]
      %v1179 = vld [vmem:[%s3 + $0x24] sm:$0xf]
      %v1180 = vld [vmem:[%s3 + $0x28] sm:$0xf]
      %v1181 = vld [vmem:[%s3 + $0x2c] sm:$0xf]
      %v1182 = vld [vmem:[%s3 + $0x30] sm:$0xf]
      %v1183 = vld [vmem:[%s3 + $0x34] sm:$0xf]
      %v1184 = vld [vmem:[%s3 + $0x38] sm:$0xf]
      %v1185 = vld [vmem:[%s3 + $0x3c] sm:$0xf]
      %v1186 = vld [vmem:[%s3 + $0x40] sm:$0xf]
      %v1187 = vld [vmem:[%s3 + $0x44] sm:$0xf]
      %v1188 = vld [vmem:[%s3 + $0x48] sm:$0xf]
      %v1189 = vld [vmem:[%s3 + $0x4c] sm:$0xf]
      %v1190 = vld [vmem:[%s3 + $0x50] sm:$0xf]
      %v1191 = vld [vmem:[%s3 + $0x54] sm:$0xf]
      %v1192 = vld [vmem:[%s3 + $0x58] sm:$0xf]
      %v1193 = vld [vmem:[%s3 + $0x5c] sm:$0xf]
      %v1194 = vld [vmem:[%s3 + $0x60] sm:$0xf]
      %v1195 = vld [vmem:[%s3 + $0x64] sm:$0xf]
      %v1196 = vld [vmem:[%s3 + $0x68] sm:$0xf]
      %v1197 = vld [vmem:[%s3 + $0x6c] sm:$0xf]
      %v1198 = vld [vmem:[%s3 + $0x70] sm:$0xf]
      %v1199 = vld [vmem:[%s3 + $0x74] sm:$0xf]
      %v1200 = vld [vmem:[%s3 + $0x78] sm:$0xf]
      %v1201 = vld [vmem:[%s3 + $0x7c] sm:$0xf]
      %v1202 = vld [vmem:[%s3 + $0x80] sm:$0xf]
      %v1203 = vld [vmem:[%s3 + $0x84] sm:$0xf]
      %v1204 = vld [vmem:[%s3 + $0x88] sm:$0xf]
      %v1205 = vld [vmem:[%s3 + $0x8c] sm:$0xf]
      %v1206 = vld [vmem:[%s3 + $0x90] sm:$0xf]
      %v1207 = vld [vmem:[%s3 + $0x94] sm:$0xf]
      %v1208 = vld [vmem:[%s3 + $0x98] sm:$0xf]
      %v1209 = vld [vmem:[%s3 + $0x9c] sm:$0xf]
      %v1210 = vld [vmem:[%s3 + $0xa0] sm:$0xf]
      %v1211 = vld [vmem:[%s3 + $0xa4] sm:$0xf]
      %v1212 = vld [vmem:[%s3 + $0xa8] sm:$0xf]
      %v1213 = vld [vmem:[%s3 + $0xac] sm:$0xf]
      %v1214 = vld [vmem:[%s3 + $0xb0] sm:$0xf]
      %v1215 = vld [vmem:[%s3 + $0xb4] sm:$0xf]
      %v1216 = vld [vmem:[%s3 + $0xb8] sm:$0xf]
      %v1217 = vld [vmem:[%s3 + $0xbc] sm:$0xf]
      %v1218 = vld [vmem:[%s491] sm:$0xf]
      %v1219 = vld [vmem:[%s491 + $0x8] sm:$0xf]
      %v1220 = vld [vmem:[%s491 + $0x10] sm:$0xf]
      %v1221 = vld [vmem:[%s491 + $0x18] sm:$0xf]
      %v1222 = vld [vmem:[%s491 + $0x20] sm:$0xf]
      %v1223 = vld [vmem:[%s491 + $0x28] sm:$0xf]
      %v1224 = vld [vmem:[%s491 + $0x30] sm:$0xf]
      %v1225 = vld [vmem:[%s491 + $0x38] sm:$0xf]
      %v1226 = vld [vmem:[%s323] sm:$0xf]
      %v1227 = vld [vmem:[%s323 + $0x8] sm:$0xf]
      %v1228 = vld [vmem:[%s323 + $0x10] sm:$0xf]
      %v1229 = vld [vmem:[%s323 + $0x18] sm:$0xf]
      %v1230 = vld [vmem:[%s323 + $0x20] sm:$0xf]
      %v1231 = vld [vmem:[%s323 + $0x28] sm:$0xf]
      %v1232 = vld [vmem:[%s323 + $0x30] sm:$0xf]
      %v1233 = vld [vmem:[%s323 + $0x38] sm:$0xf]
      %v1234 = vld [vmem:[%s491 + $0x4] sm:$0x1]
      %v1235 = vld [vmem:[%s491 + $0xc] sm:$0x1]
      %v1236 = vld [vmem:[%s491 + $0x14] sm:$0x1]
      %v1237 = vld [vmem:[%s491 + $0x1c] sm:$0x1]
      %v1238 = vld [vmem:[%s491 + $0x24] sm:$0x1]
      %v1239 = vld [vmem:[%s491 + $0x2c] sm:$0x1]
      %v1240 = vld [vmem:[%s491 + $0x34] sm:$0x1]
      %v1241 = vld [vmem:[%s491 + $0x3c] sm:$0x1]
      %v1243 = vshrl.u32 %v1218, 16
      %v1245 = vrot.slane %v1243, 4
      %v1246 = vshll.u32 %v1218, 16
      %v1248 = vrot.slane %v1246, 5
      %v1249 = vor.u32 %v1245, %v1248
      %v1250 = vrot.slane %v1249, 4
      %v1252 = vshll.u32 %v1234, 16
      %v1254 = vrot.slane %v1252, 5
      %v1255 = vsel %vm993, %v1250, %v1254
      %v1257 = vshrl.u32 %v1219, 16
      %v1259 = vrot.slane %v1257, 4
      %v1260 = vshll.u32 %v1219, 16
      %v1262 = vrot.slane %v1260, 5
      %v1263 = vor.u32 %v1259, %v1262
      %v1264 = vrot.slane %v1263, 4
      %v1266 = vshll.u32 %v1235, 16
      %v1268 = vrot.slane %v1266, 5
      %v1269 = vsel %vm993, %v1264, %v1268
      %v1271 = vshrl.u32 %v1220, 16
      %v1273 = vrot.slane %v1271, 4
      %v1274 = vshll.u32 %v1220, 16
      %v1276 = vrot.slane %v1274, 5
      %v1277 = vor.u32 %v1273, %v1276
      %v1278 = vrot.slane %v1277, 4
      %v1280 = vshll.u32 %v1236, 16
      %v1282 = vrot.slane %v1280, 5
      %v1283 = vsel %vm993, %v1278, %v1282
      %v1285 = vshrl.u32 %v1221, 16
      %v1287 = vrot.slane %v1285, 4
      %v1288 = vshll.u32 %v1221, 16
      %v1290 = vrot.slane %v1288, 5
      %v1291 = vor.u32 %v1287, %v1290
      %v1292 = vrot.slane %v1291, 4
      %v1294 = vshll.u32 %v1237, 16
      %v1296 = vrot.slane %v1294, 5
      %v1297 = vsel %vm993, %v1292, %v1296
      %v1299 = vshrl.u32 %v1222, 16
      %v1301 = vrot.slane %v1299, 4
      %v1302 = vshll.u32 %v1222, 16
      %v1304 = vrot.slane %v1302, 5
      %v1305 = vor.u32 %v1301, %v1304
      %v1306 = vrot.slane %v1305, 4
      %v1308 = vshll.u32 %v1238, 16
      %v1310 = vrot.slane %v1308, 5
      %v1311 = vsel %vm993, %v1306, %v1310
      %v1313 = vshrl.u32 %v1223, 16
      %v1315 = vrot.slane %v1313, 4
      %v1316 = vshll.u32 %v1223, 16
      %v1318 = vrot.slane %v1316, 5
      %v1319 = vor.u32 %v1315, %v1318
      %v1320 = vrot.slane %v1319, 4
      %v1322 = vshll.u32 %v1239, 16
      %v1324 = vrot.slane %v1322, 5
      %v1325 = vsel %vm993, %v1320, %v1324
      %v1327 = vshrl.u32 %v1224, 16
      %v1329 = vrot.slane %v1327, 4
      %v1330 = vshll.u32 %v1224, 16
      %v1332 = vrot.slane %v1330, 5
      %v1333 = vor.u32 %v1329, %v1332
      %v1334 = vrot.slane %v1333, 4
      %v1336 = vshll.u32 %v1240, 16
      %v1338 = vrot.slane %v1336, 5
      %v1339 = vsel %vm993, %v1334, %v1338
      %v1341 = vshrl.u32 %v1225, 16
      %v1343 = vrot.slane %v1341, 4
      %v1344 = vshll.u32 %v1225, 16
      %v1346 = vrot.slane %v1344, 5
      %v1347 = vor.u32 %v1343, %v1346
      %v1348 = vrot.slane %v1347, 4
      %v1350 = vshll.u32 %v1241, 16
      %v1352 = vrot.slane %v1350, 5
      %v1353 = vsel %vm993, %v1348, %v1352
      %v1362 = vunpack.c.l.b16 %v1218
      %v1363 = vunpack.c.l.b16 %v1219
      %v1364 = vunpack.c.l.b16 %v1220
      %v1365 = vunpack.c.l.b16 %v1221
      %v1366 = vunpack.c.l.b16 %v1222
      %v1367 = vunpack.c.l.b16 %v1223
      %v1368 = vunpack.c.l.b16 %v1224
      %v1369 = vunpack.c.l.b16 %v1225
      %v1370 = vpack.c.b16 %v1363, %v1362
      %v1371 = vpack.c.b16 %v1365, %v1364
      %v1372 = vpack.c.b16 %v1367, %v1366
      %v1373 = vpack.c.b16 %v1369, %v1368
      %v1386 = vunpack.c.l.b16 %v1226
      %v1387 = vunpack.c.l.b16 %v1227
      %v1388 = vunpack.c.l.b16 %v1228
      %v1389 = vunpack.c.l.b16 %v1229
      %v1390 = vunpack.c.l.b16 %v1230
      %v1391 = vunpack.c.l.b16 %v1231
      %v1392 = vunpack.c.l.b16 %v1232
      %v1393 = vunpack.c.l.b16 %v1233
      %v1394 = vpack.c.b16 %v1387, %v1386
      %v1395 = vpack.c.b16 %v1389, %v1388
      %v1396 = vpack.c.b16 %v1391, %v1390
      %v1397 = vpack.c.b16 %v1393, %v1392
      %v1402 = vunpack.c.l.b16 %v1255
      %v1403 = vunpack.c.l.b16 %v1269
      %v1404 = vunpack.c.l.b16 %v1283
      %v1405 = vunpack.c.l.b16 %v1297
      %v1406 = vunpack.c.l.b16 %v1311
      %v1407 = vunpack.c.l.b16 %v1325
      %v1408 = vunpack.c.l.b16 %v1339
      %v1409 = vunpack.c.l.b16 %v1353
      %v1410 = vpack.c.b16 %v1403, %v1402
      %v1411 = vpack.c.b16 %v1405, %v1404
      %v1412 = vpack.c.b16 %v1407, %v1406
      %v1413 = vpack.c.b16 %v1409, %v1408
      %s1418 = scalar_lea.vmem %s3, 192
      %v1419 = vld [vmem:[%s1418] sm:$0xf]
      %v1420 = vld [vmem:[%s1418 + $0x4] sm:$0xf]
      %v1421 = vld [vmem:[%s1418 + $0x8] sm:$0xf]
      %v1422 = vld [vmem:[%s1418 + $0xc] sm:$0xf]
      %v1423 = vld [vmem:[%s1418 + $0x10] sm:$0xf]
      %v1424 = vld [vmem:[%s1418 + $0x14] sm:$0xf]
      %v1425 = vld [vmem:[%s1418 + $0x18] sm:$0xf]
      %v1426 = vld [vmem:[%s1418 + $0x1c] sm:$0xf]
      %v1427 = vld [vmem:[%s1418 + $0x20] sm:$0xf]
      %v1428 = vld [vmem:[%s1418 + $0x24] sm:$0xf]
      %v1429 = vld [vmem:[%s1418 + $0x28] sm:$0xf]
      %v1430 = vld [vmem:[%s1418 + $0x2c] sm:$0xf]
      %v1431 = vld [vmem:[%s1418 + $0x30] sm:$0xf]
      %v1432 = vld [vmem:[%s1418 + $0x34] sm:$0xf]
      %v1433 = vld [vmem:[%s1418 + $0x38] sm:$0xf]
      %v1434 = vld [vmem:[%s1418 + $0x3c] sm:$0xf]
      %v1435 = vld [vmem:[%s1418 + $0x40] sm:$0xf]
      %v1436 = vld [vmem:[%s1418 + $0x44] sm:$0xf]
      %v1437 = vld [vmem:[%s1418 + $0x48] sm:$0xf]
      %v1438 = vld [vmem:[%s1418 + $0x4c] sm:$0xf]
      %v1439 = vld [vmem:[%s1418 + $0x50] sm:$0xf]
      %v1440 = vld [vmem:[%s1418 + $0x54] sm:$0xf]
      %v1441 = vld [vmem:[%s1418 + $0x58] sm:$0xf]
      %v1442 = vld [vmem:[%s1418 + $0x5c] sm:$0xf]
      %v1443 = vld [vmem:[%s1418 + $0x60] sm:$0xf]
      %v1444 = vld [vmem:[%s1418 + $0x64] sm:$0xf]
      %v1445 = vld [vmem:[%s1418 + $0x68] sm:$0xf]
      %v1446 = vld [vmem:[%s1418 + $0x6c] sm:$0xf]
      %v1447 = vld [vmem:[%s1418 + $0x70] sm:$0xf]
      %v1448 = vld [vmem:[%s1418 + $0x74] sm:$0xf]
      %v1449 = vld [vmem:[%s1418 + $0x78] sm:$0xf]
      %v1450 = vld [vmem:[%s1418 + $0x7c] sm:$0xf]
      %v1451 = vld [vmem:[%s1418 + $0x80] sm:$0xf]
      %v1452 = vld [vmem:[%s1418 + $0x84] sm:$0xf]
      %v1453 = vld [vmem:[%s1418 + $0x88] sm:$0xf]
      %v1454 = vld [vmem:[%s1418 + $0x8c] sm:$0xf]
      %v1455 = vld [vmem:[%s1418 + $0x90] sm:$0xf]
      %v1456 = vld [vmem:[%s1418 + $0x94] sm:$0xf]
      %v1457 = vld [vmem:[%s1418 + $0x98] sm:$0xf]
      %v1458 = vld [vmem:[%s1418 + $0x9c] sm:$0xf]
      %v1459 = vld [vmem:[%s1418 + $0xa0] sm:$0xf]
      %v1460 = vld [vmem:[%s1418 + $0xa4] sm:$0xf]
      %v1461 = vld [vmem:[%s1418 + $0xa8] sm:$0xf]
      %v1462 = vld [vmem:[%s1418 + $0xac] sm:$0xf]
      %v1463 = vld [vmem:[%s1418 + $0xb0] sm:$0xf]
      %v1464 = vld [vmem:[%s1418 + $0xb4] sm:$0xf]
      %v1465 = vld [vmem:[%s1418 + $0xb8] sm:$0xf]
      %v1466 = vld [vmem:[%s1418 + $0xbc] sm:$0xf]
      %v1515 = vunpack.c.l.b16 %v1419
      %v1516 = vunpack.c.l.b16 %v1420
      %v1517 = vunpack.c.l.b16 %v1421
      %v1518 = vunpack.c.l.b16 %v1422
      %v1519 = vunpack.c.l.b16 %v1423
      %v1520 = vunpack.c.l.b16 %v1424
      %v1521 = vunpack.c.l.b16 %v1425
      %v1522 = vunpack.c.l.b16 %v1426
      %v1523 = vunpack.c.l.b16 %v1427
      %v1524 = vunpack.c.l.b16 %v1428
      %v1525 = vunpack.c.l.b16 %v1429
      %v1526 = vunpack.c.l.b16 %v1430
      %v1527 = vunpack.c.l.b16 %v1431
      %v1528 = vunpack.c.l.b16 %v1432
      %v1529 = vunpack.c.l.b16 %v1433
      %v1530 = vunpack.c.l.b16 %v1434
      %v1531 = vunpack.c.l.b16 %v1435
      %v1532 = vunpack.c.l.b16 %v1436
      %v1533 = vunpack.c.l.b16 %v1437
      %v1534 = vunpack.c.l.b16 %v1438
      %v1535 = vunpack.c.l.b16 %v1439
      %v1536 = vunpack.c.l.b16 %v1440
      %v1537 = vunpack.c.l.b16 %v1441
      %v1538 = vunpack.c.l.b16 %v1442
      %v1539 = vunpack.c.l.b16 %v1443
      %v1540 = vunpack.c.l.b16 %v1444
      %v1541 = vunpack.c.l.b16 %v1445
      %v1542 = vunpack.c.l.b16 %v1446
      %v1543 = vunpack.c.l.b16 %v1447
      %v1544 = vunpack.c.l.b16 %v1448
      %v1545 = vunpack.c.l.b16 %v1449
      %v1546 = vunpack.c.l.b16 %v1450
      %v1547 = vunpack.c.l.b16 %v1451
      %v1548 = vunpack.c.l.b16 %v1452
      %v1549 = vunpack.c.l.b16 %v1453
      %v1550 = vunpack.c.l.b16 %v1454
      %v1551 = vunpack.c.l.b16 %v1455
      %v1552 = vunpack.c.l.b16 %v1456
      %v1553 = vunpack.c.l.b16 %v1457
      %v1554 = vunpack.c.l.b16 %v1458
      %v1555 = vunpack.c.l.b16 %v1459
      %v1556 = vunpack.c.l.b16 %v1460
      %v1557 = vunpack.c.l.b16 %v1461
      %v1558 = vunpack.c.l.b16 %v1462
      %v1559 = vunpack.c.l.b16 %v1463
      %v1560 = vunpack.c.l.b16 %v1464
      %v1561 = vunpack.c.l.b16 %v1465
      %v1562 = vunpack.c.l.b16 %v1466
      %v1563 = vpack.c.b16 %v1516, %v1515
      %v1564 = vpack.c.b16 %v1518, %v1517
      %v1565 = vpack.c.b16 %v1520, %v1519
      %v1566 = vpack.c.b16 %v1522, %v1521
      %v1567 = vpack.c.b16 %v1524, %v1523
      %v1568 = vpack.c.b16 %v1526, %v1525
      %v1569 = vpack.c.b16 %v1528, %v1527
      %v1570 = vpack.c.b16 %v1530, %v1529
      %v1571 = vpack.c.b16 %v1532, %v1531
      %v1572 = vpack.c.b16 %v1534, %v1533
      %v1573 = vpack.c.b16 %v1536, %v1535
      %v1574 = vpack.c.b16 %v1538, %v1537
      %v1575 = vpack.c.b16 %v1540, %v1539
      %v1576 = vpack.c.b16 %v1542, %v1541
      %v1577 = vpack.c.b16 %v1544, %v1543
      %v1578 = vpack.c.b16 %v1546, %v1545
      %v1579 = vpack.c.b16 %v1548, %v1547
      %v1580 = vpack.c.b16 %v1550, %v1549
      %v1581 = vpack.c.b16 %v1552, %v1551
      %v1582 = vpack.c.b16 %v1554, %v1553
      %v1583 = vpack.c.b16 %v1556, %v1555
      %v1584 = vpack.c.b16 %v1558, %v1557
      %v1585 = vpack.c.b16 %v1560, %v1559
      %v1586 = vpack.c.b16 %v1562, %v1561
      %1611 = vmatprep.subr.bf16.mxu0 0
      %1612 = vmatpush1.bf16.msra.mxu0 %v1570
      %1613 = vmatprep.subr.bf16.mxu0 0
      %1614 = vmatpush1.bf16.msra.mxu0 %v1569
      %1615 = vmatprep.subr.bf16.mxu0 0
      %1616 = vmatpush1.bf16.msra.mxu0 %v1568
      %1617 = vmatprep.subr.bf16.mxu0 0
      %1618 = vmatpush1.bf16.msra.mxu0 %v1567
      %1619 = vmatprep.subr.bf16.mxu0 0
      %1620 = vmatpush1.bf16.msra.mxu0 %v1566
      %1621 = vmatprep.subr.bf16.mxu0 0
      %1622 = vmatpush1.bf16.msra.mxu0 %v1565
      %1623 = vmatprep.subr.bf16.mxu0 0
      %1624 = vmatpush1.bf16.msra.mxu0 %v1564
      %1625 = vmatprep.subr.bf16.mxu0 0
      %1626 = vmatpush1.bf16.msra.mxu0 %v1563
      %1627 = vmatprep.subr.bf16.mxu0 0
      %1628 = vmatpush2.bf16.msra.mxu0 %v1578
      %1629 = vmatprep.subr.bf16.mxu0 0
      %1630 = vmatpush2.bf16.msra.mxu0 %v1577
      %1631 = vmatprep.subr.bf16.mxu0 0
      %1632 = vmatpush2.bf16.msra.mxu0 %v1576
      %1633 = vmatprep.subr.bf16.mxu0 0
      %1634 = vmatpush2.bf16.msra.mxu0 %v1575
      %1635 = vmatprep.subr.bf16.mxu0 0
      %1636 = vmatpush2.bf16.msra.mxu0 %v1574
      %1637 = vmatprep.subr.bf16.mxu0 0
      %1638 = vmatpush2.bf16.msra.mxu0 %v1573
      %1639 = vmatprep.subr.bf16.mxu0 0
      %1640 = vmatpush2.bf16.msra.mxu0 %v1572
      %1641 = vmatprep.subr.bf16.mxu0 0
      %1642 = vmatpush2.bf16.msra.mxu0 %v1571
      %1643 = vmatprep.mubr.bf16.mxu0 %v1394
      %1644 = vmatmul.mubr.bf16.gmra.mxu0 %v1370
      %v1645 = vpop.f32.mrf.mxu0
      %v1646 = vadd.f32 0.0, %v1645
      %v1647 = vpop.f32.mrf.mxu0
      %v1648 = vpop.f32.mrf.mxu0
      %v1649 = vadd.f32 0.0, %v1648
      %v1650 = vpop.f32.mrf.mxu0
      %1651 = vmatprep.mubr.bf16.mxu0 %v1395
      %1652 = vmatmul.mubr.bf16.gmra.mxu0 %v1371
      %v1653 = vpop.f32.mrf.mxu0
      %v1654 = vadd.f32 0.0, %v1653
      %v1655 = vpop.f32.mrf.mxu0
      %v1656 = vpop.f32.mrf.mxu0
      %v1657 = vadd.f32 0.0, %v1656
      %v1658 = vpop.f32.mrf.mxu0
      %1659 = vmatprep.mubr.bf16.mxu0 %v1396
      %1660 = vmatmul.mubr.bf16.gmra.mxu0 %v1372
      %v1661 = vpop.f32.mrf.mxu0
      %v1662 = vadd.f32 0.0, %v1661
      %v1663 = vpop.f32.mrf.mxu0
      %v1664 = vpop.f32.mrf.mxu0
      %v1665 = vadd.f32 0.0, %v1664
      %v1666 = vpop.f32.mrf.mxu0
      %1667 = vmatprep.mubr.bf16.mxu0 %v1397
      %1668 = vmatmul.mubr.bf16.gmra.mxu0 %v1373
      %v1669 = vpop.f32.mrf.mxu0
      %v1670 = vadd.f32 0.0, %v1669
      %v1671 = vpop.f32.mrf.mxu0
      %v1672 = vpop.f32.mrf.mxu0
      %v1673 = vadd.f32 0.0, %v1672
      %v1674 = vpop.f32.mrf.mxu0
      %1675 = vdwg.mxu0
      %1676 = vmatprep.subr.bf16.mxu0 0
      %1677 = vmatpush1.bf16.msra.mxu0 %v1586
      %1678 = vmatprep.subr.bf16.mxu0 0
      %1679 = vmatpush1.bf16.msra.mxu0 %v1585
      %1680 = vmatprep.subr.bf16.mxu0 0
      %1681 = vmatpush1.bf16.msra.mxu0 %v1584
      %1682 = vmatprep.subr.bf16.mxu0 0
      %1683 = vmatpush1.bf16.msra.mxu0 %v1583
      %1684 = vmatprep.subr.bf16.mxu0 0
      %1685 = vmatpush1.bf16.msra.mxu0 %v1582
      %1686 = vmatprep.subr.bf16.mxu0 0
      %1687 = vmatpush1.bf16.msra.mxu0 %v1581
      %1688 = vmatprep.subr.bf16.mxu0 0
      %1689 = vmatpush1.bf16.msra.mxu0 %v1580
      %1690 = vmatprep.subr.bf16.mxu0 0
      %1691 = vmatpush1.bf16.msra.mxu0 %v1579
      %1692 = vmatprep.subr.bf16.mxu0 0
      %1693 = vmatpush2.bf16.msra.mxu0 0
      %1694 = vmatprep.subr.bf16.mxu0 0
      %1695 = vmatpush2.bf16.msra.mxu0 0
      %1696 = vmatprep.subr.bf16.mxu0 0
      %1697 = vmatpush2.bf16.msra.mxu0 0
      %1698 = vmatprep.subr.bf16.mxu0 0
      %1699 = vmatpush2.bf16.msra.mxu0 0
      %1700 = vmatprep.subr.bf16.mxu0 0
      %1701 = vmatpush2.bf16.msra.mxu0 0
      %1702 = vmatprep.subr.bf16.mxu0 0
      %1703 = vmatpush2.bf16.msra.mxu0 0
      %1704 = vmatprep.subr.bf16.mxu0 0
      %1705 = vmatpush2.bf16.msra.mxu0 0
      %1706 = vmatprep.subr.bf16.mxu0 0
      %1707 = vmatpush2.bf16.msra.mxu0 0
      %1708 = vmatprep.mubr.bf16.mxu0 0
      %1709 = vmatmul.mubr.bf16.gmra.mxu0 %v1410
      %v1710 = vpop.f32.mrf.mxu0
      %v1711 = vadd.f32 %v1646, %v1710
      %v1712 = vpop.f32.mrf.mxu0
      %v1713 = vpop.f32.mrf.mxu0
      %v1714 = vadd.f32 %v1649, %v1713
      %v1715 = vpop.f32.mrf.mxu0
      %1716 = vmatprep.mubr.bf16.mxu0 0
      %1717 = vmatmul.mubr.bf16.gmra.mxu0 %v1411
      %v1718 = vpop.f32.mrf.mxu0
      %v1719 = vadd.f32 %v1654, %v1718
      %v1720 = vpop.f32.mrf.mxu0
      %v1721 = vpop.f32.mrf.mxu0
      %v1722 = vadd.f32 %v1657, %v1721
      %v1723 = vpop.f32.mrf.mxu0
      %1724 = vmatprep.mubr.bf16.mxu0 0
      %1725 = vmatmul.mubr.bf16.gmra.mxu0 %v1412
      %v1726 = vpop.f32.mrf.mxu0
      %v1727 = vadd.f32 %v1662, %v1726
      %v1728 = vpop.f32.mrf.mxu0
      %v1729 = vpop.f32.mrf.mxu0
      %v1730 = vadd.f32 %v1665, %v1729
      %v1731 = vpop.f32.mrf.mxu0
      %1732 = vmatprep.mubr.bf16.mxu0 0
      %1733 = vmatmul.mubr.bf16.gmra.mxu0 %v1413
      %v1734 = vpop.f32.mrf.mxu0
      %v1735 = vadd.f32 %v1670, %v1734
      %v1736 = vpop.f32.mrf.mxu0
      %v1737 = vpop.f32.mrf.mxu0
      %v1738 = vadd.f32 %v1673, %v1737
      %v1739 = vpop.f32.mrf.mxu0
      %1740 = vdwg.mxu0
      %v1789 = vunpack.c.l.b16 %v1170
      %v1790 = vunpack.c.l.b16 %v1171
      %v1791 = vunpack.c.l.b16 %v1172
      %v1792 = vunpack.c.l.b16 %v1173
      %v1793 = vunpack.c.l.b16 %v1174
      %v1794 = vunpack.c.l.b16 %v1175
      %v1795 = vunpack.c.l.b16 %v1176
      %v1796 = vunpack.c.l.b16 %v1177
      %v1797 = vunpack.c.l.b16 %v1178
      %v1798 = vunpack.c.l.b16 %v1179
      %v1799 = vunpack.c.l.b16 %v1180
      %v1800 = vunpack.c.l.b16 %v1181
      %v1801 = vunpack.c.l.b16 %v1182
      %v1802 = vunpack.c.l.b16 %v1183
      %v1803 = vunpack.c.l.b16 %v1184
      %v1804 = vunpack.c.l.b16 %v1185
      %v1805 = vunpack.c.l.b16 %v1186
      %v1806 = vunpack.c.l.b16 %v1187
      %v1807 = vunpack.c.l.b16 %v1188
      %v1808 = vunpack.c.l.b16 %v1189
      %v1809 = vunpack.c.l.b16 %v1190
      %v1810 = vunpack.c.l.b16 %v1191
      %v1811 = vunpack.c.l.b16 %v1192
      %v1812 = vunpack.c.l.b16 %v1193
      %v1813 = vunpack.c.l.b16 %v1194
      %v1814 = vunpack.c.l.b16 %v1195
      %v1815 = vunpack.c.l.b16 %v1196
      %v1816 = vunpack.c.l.b16 %v1197
      %v1817 = vunpack.c.l.b16 %v1198
      %v1818 = vunpack.c.l.b16 %v1199
      %v1819 = vunpack.c.l.b16 %v1200
      %v1820 = vunpack.c.l.b16 %v1201
      %v1821 = vunpack.c.l.b16 %v1202
      %v1822 = vunpack.c.l.b16 %v1203
      %v1823 = vunpack.c.l.b16 %v1204
      %v1824 = vunpack.c.l.b16 %v1205
      %v1825 = vunpack.c.l.b16 %v1206
      %v1826 = vunpack.c.l.b16 %v1207
      %v1827 = vunpack.c.l.b16 %v1208
      %v1828 = vunpack.c.l.b16 %v1209
      %v1829 = vunpack.c.l.b16 %v1210
      %v1830 = vunpack.c.l.b16 %v1211
      %v1831 = vunpack.c.l.b16 %v1212
      %v1832 = vunpack.c.l.b16 %v1213
      %v1833 = vunpack.c.l.b16 %v1214
      %v1834 = vunpack.c.l.b16 %v1215
      %v1835 = vunpack.c.l.b16 %v1216
      %v1836 = vunpack.c.l.b16 %v1217
      %v1837 = vpack.c.b16 %v1790, %v1789
      %v1838 = vpack.c.b16 %v1792, %v1791
      %v1839 = vpack.c.b16 %v1794, %v1793
      %v1840 = vpack.c.b16 %v1796, %v1795
      %v1841 = vpack.c.b16 %v1798, %v1797
      %v1842 = vpack.c.b16 %v1800, %v1799
      %v1843 = vpack.c.b16 %v1802, %v1801
      %v1844 = vpack.c.b16 %v1804, %v1803
      %v1845 = vpack.c.b16 %v1806, %v1805
      %v1846 = vpack.c.b16 %v1808, %v1807
      %v1847 = vpack.c.b16 %v1810, %v1809
      %v1848 = vpack.c.b16 %v1812, %v1811
      %v1849 = vpack.c.b16 %v1814, %v1813
      %v1850 = vpack.c.b16 %v1816, %v1815
      %v1851 = vpack.c.b16 %v1818, %v1817
      %v1852 = vpack.c.b16 %v1820, %v1819
      %v1853 = vpack.c.b16 %v1822, %v1821
      %v1854 = vpack.c.b16 %v1824, %v1823
      %v1855 = vpack.c.b16 %v1826, %v1825
      %v1856 = vpack.c.b16 %v1828, %v1827
      %v1857 = vpack.c.b16 %v1830, %v1829
      %v1858 = vpack.c.b16 %v1832, %v1831
      %v1859 = vpack.c.b16 %v1834, %v1833
      %v1860 = vpack.c.b16 %v1836, %v1835
      %1885 = vmatprep.subr.bf16.mxu0 0
      %1886 = vmatpush1.bf16.msra.mxu0 %v1844
      %1887 = vmatprep.subr.bf16.mxu0 0
      %1888 = vmatpush1.bf16.msra.mxu0 %v1843
      %1889 = vmatprep.subr.bf16.mxu0 0
      %1890 = vmatpush1.bf16.msra.mxu0 %v1842
      %1891 = vmatprep.subr.bf16.mxu0 0
      %1892 = vmatpush1.bf16.msra.mxu0 %v1841
      %1893 = vmatprep.subr.bf16.mxu0 0
      %1894 = vmatpush1.bf16.msra.mxu0 %v1840
      %1895 = vmatprep.subr.bf16.mxu0 0
      %1896 = vmatpush1.bf16.msra.mxu0 %v1839
      %1897 = vmatprep.subr.bf16.mxu0 0
      %1898 = vmatpush1.bf16.msra.mxu0 %v1838
      %1899 = vmatprep.subr.bf16.mxu0 0
      %1900 = vmatpush1.bf16.msra.mxu0 %v1837
      %1901 = vmatprep.subr.bf16.mxu0 0
      %1902 = vmatpush2.bf16.msra.mxu0 %v1852
      %1903 = vmatprep.subr.bf16.mxu0 0
      %1904 = vmatpush2.bf16.msra.mxu0 %v1851
      %1905 = vmatprep.subr.bf16.mxu0 0
      %1906 = vmatpush2.bf16.msra.mxu0 %v1850
      %1907 = vmatprep.subr.bf16.mxu0 0
      %1908 = vmatpush2.bf16.msra.mxu0 %v1849
      %1909 = vmatprep.subr.bf16.mxu0 0
      %1910 = vmatpush2.bf16.msra.mxu0 %v1848
      %1911 = vmatprep.subr.bf16.mxu0 0
      %1912 = vmatpush2.bf16.msra.mxu0 %v1847
      %1913 = vmatprep.subr.bf16.mxu0 0
      %1914 = vmatpush2.bf16.msra.mxu0 %v1846
      %1915 = vmatprep.subr.bf16.mxu0 0
      %1916 = vmatpush2.bf16.msra.mxu0 %v1845
      %1917 = vmatprep.mubr.bf16.mxu0 %v1146
      %1918 = vmatmul.mubr.bf16.gmra.mxu0 %v1122
      %v1919 = vpop.f32.mrf.mxu0
      %v1920 = vadd.f32 %v1711, %v1919
      %v1921 = vpop.f32.mrf.mxu0
      %v1922 = vpop.f32.mrf.mxu0
      %v1923 = vadd.f32 %v1714, %v1922
      %v1924 = vpop.f32.mrf.mxu0
      %1925 = vmatprep.mubr.bf16.mxu0 %v1147
      %1926 = vmatmul.mubr.bf16.gmra.mxu0 %v1123
      %v1927 = vpop.f32.mrf.mxu0
      %v1928 = vadd.f32 %v1719, %v1927
      %v1929 = vpop.f32.mrf.mxu0
      %v1930 = vpop.f32.mrf.mxu0
      %v1931 = vadd.f32 %v1722, %v1930
      %v1932 = vpop.f32.mrf.mxu0
      %1933 = vmatprep.mubr.bf16.mxu0 %v1148
      %1934 = vmatmul.mubr.bf16.gmra.mxu0 %v1124
      %v1935 = vpop.f32.mrf.mxu0
      %v1936 = vadd.f32 %v1727, %v1935
      %v1937 = vpop.f32.mrf.mxu0
      %v1938 = vpop.f32.mrf.mxu0
      %v1939 = vadd.f32 %v1730, %v1938
      %v1940 = vpop.f32.mrf.mxu0
      %1941 = vmatprep.mubr.bf16.mxu0 %v1149
      %1942 = vmatmul.mubr.bf16.gmra.mxu0 %v1125
      %v1943 = vpop.f32.mrf.mxu0
      %v1944 = vadd.f32 %v1735, %v1943
      %v1945 = vpop.f32.mrf.mxu0
      %v1946 = vpop.f32.mrf.mxu0
      %v1947 = vadd.f32 %v1738, %v1946
      %v1948 = vpop.f32.mrf.mxu0
      %1949 = vdwg.mxu0
      %1950 = vmatprep.subr.bf16.mxu0 0
      %1951 = vmatpush1.bf16.msra.mxu0 %v1860
      %1952 = vmatprep.subr.bf16.mxu0 0
      %1953 = vmatpush1.bf16.msra.mxu0 %v1859
      %1954 = vmatprep.subr.bf16.mxu0 0
      %1955 = vmatpush1.bf16.msra.mxu0 %v1858
      %1956 = vmatprep.subr.bf16.mxu0 0
      %1957 = vmatpush1.bf16.msra.mxu0 %v1857
      %1958 = vmatprep.subr.bf16.mxu0 0
      %1959 = vmatpush1.bf16.msra.mxu0 %v1856
      %1960 = vmatprep.subr.bf16.mxu0 0
      %1961 = vmatpush1.bf16.msra.mxu0 %v1855
      %1962 = vmatprep.subr.bf16.mxu0 0
      %1963 = vmatpush1.bf16.msra.mxu0 %v1854
      %1964 = vmatprep.subr.bf16.mxu0 0
      %1965 = vmatpush1.bf16.msra.mxu0 %v1853
      %1966 = vmatprep.subr.bf16.mxu0 0
      %1967 = vmatpush2.bf16.msra.mxu0 0
      %1968 = vmatprep.subr.bf16.mxu0 0
      %1969 = vmatpush2.bf16.msra.mxu0 0
      %1970 = vmatprep.subr.bf16.mxu0 0
      %1971 = vmatpush2.bf16.msra.mxu0 0
      %1972 = vmatprep.subr.bf16.mxu0 0
      %1973 = vmatpush2.bf16.msra.mxu0 0
      %1974 = vmatprep.subr.bf16.mxu0 0
      %1975 = vmatpush2.bf16.msra.mxu0 0
      %1976 = vmatprep.subr.bf16.mxu0 0
      %1977 = vmatpush2.bf16.msra.mxu0 0
      %1978 = vmatprep.subr.bf16.mxu0 0
      %1979 = vmatpush2.bf16.msra.mxu0 0
      %1980 = vmatprep.subr.bf16.mxu0 0
      %1981 = vmatpush2.bf16.msra.mxu0 0
      %1982 = vmatprep.mubr.bf16.mxu0 0
      %1983 = vmatmul.mubr.bf16.gmra.mxu0 %v1162
      %v1984 = vpop.f32.mrf.mxu0
      %v1985 = vadd.f32 %v1920, %v1984
      %v1986 = vpop.f32.mrf.mxu0
      %v1987 = vpop.f32.mrf.mxu0
      %v1988 = vadd.f32 %v1923, %v1987
      %v1989 = vpop.f32.mrf.mxu0
      %1990 = vmatprep.mubr.bf16.mxu0 0
      %1991 = vmatmul.mubr.bf16.gmra.mxu0 %v1163
      %v1992 = vpop.f32.mrf.mxu0
      %v1993 = vadd.f32 %v1928, %v1992
      %v1994 = vpop.f32.mrf.mxu0
      %v1995 = vpop.f32.mrf.mxu0
      %v1996 = vadd.f32 %v1931, %v1995
      %v1997 = vpop.f32.mrf.mxu0
      %1998 = vmatprep.mubr.bf16.mxu0 0
      %1999 = vmatmul.mubr.bf16.gmra.mxu0 %v1164
      %v2000 = vpop.f32.mrf.mxu0
      %v2001 = vadd.f32 %v1936, %v2000
      %v2002 = vpop.f32.mrf.mxu0
      %v2003 = vpop.f32.mrf.mxu0
      %v2004 = vadd.f32 %v1939, %v2003
      %v2005 = vpop.f32.mrf.mxu0
      %2006 = vmatprep.mubr.bf16.mxu0 0
      %2007 = vmatmul.mubr.bf16.gmra.mxu0 %v1165
      %v2008 = vpop.f32.mrf.mxu0
      %v2009 = vadd.f32 %v1944, %v2008
      %v2010 = vpop.f32.mrf.mxu0
      %v2011 = vpop.f32.mrf.mxu0
      %v2012 = vadd.f32 %v1947, %v2011
      %v2013 = vpop.f32.mrf.mxu0
      %2014 = vdwg.mxu0
      %v2015 = vld [vmem:[%s853] sm:$0xf]
      %v2016 = vld [vmem:[%s853 + $0x8] sm:$0xf]
      %v2017 = vld [vmem:[%s853 + $0x10] sm:$0xf]
      %v2018 = vld [vmem:[%s853 + $0x18] sm:$0xf]
      %v2019 = vld [vmem:[%s853 + $0x20] sm:$0xf]
      %v2020 = vld [vmem:[%s853 + $0x28] sm:$0xf]
      %v2021 = vld [vmem:[%s853 + $0x30] sm:$0xf]
      %v2022 = vld [vmem:[%s853 + $0x38] sm:$0xf]
      %v2023 = vld [vmem:[%s684] sm:$0xf]
      %v2024 = vld [vmem:[%s684 + $0x8] sm:$0xf]
      %v2025 = vld [vmem:[%s684 + $0x10] sm:$0xf]
      %v2026 = vld [vmem:[%s684 + $0x18] sm:$0xf]
      %v2027 = vld [vmem:[%s684 + $0x20] sm:$0xf]
      %v2028 = vld [vmem:[%s684 + $0x28] sm:$0xf]
      %v2029 = vld [vmem:[%s684 + $0x30] sm:$0xf]
      %v2030 = vld [vmem:[%s684 + $0x38] sm:$0xf]
      %v2031 = vld [vmem:[%s853 + $0x4] sm:$0x1]
      %v2032 = vld [vmem:[%s853 + $0xc] sm:$0x1]
      %v2033 = vld [vmem:[%s853 + $0x14] sm:$0x1]
      %v2034 = vld [vmem:[%s853 + $0x1c] sm:$0x1]
      %v2035 = vld [vmem:[%s853 + $0x24] sm:$0x1]
      %v2036 = vld [vmem:[%s853 + $0x2c] sm:$0x1]
      %v2037 = vld [vmem:[%s853 + $0x34] sm:$0x1]
      %v2038 = vld [vmem:[%s853 + $0x3c] sm:$0x1]
      %v2040 = vshrl.u32 %v2015, 16
      %v2042 = vrot.slane %v2040, 4
      %v2043 = vshll.u32 %v2015, 16
      %v2045 = vrot.slane %v2043, 5
      %v2046 = vor.u32 %v2042, %v2045
      %v2047 = vrot.slane %v2046, 4
      %v2049 = vshll.u32 %v2031, 16
      %v2051 = vrot.slane %v2049, 5
      %v2052 = vsel %vm993, %v2047, %v2051
      %v2054 = vshrl.u32 %v2016, 16
      %v2056 = vrot.slane %v2054, 4
      %v2057 = vshll.u32 %v2016, 16
      %v2059 = vrot.slane %v2057, 5
      %v2060 = vor.u32 %v2056, %v2059
      %v2061 = vrot.slane %v2060, 4
      %v2063 = vshll.u32 %v2032, 16
      %v2065 = vrot.slane %v2063, 5
      %v2066 = vsel %vm993, %v2061, %v2065
      %v2068 = vshrl.u32 %v2017, 16
      %v2070 = vrot.slane %v2068, 4
      %v2071 = vshll.u32 %v2017, 16
      %v2073 = vrot.slane %v2071, 5
      %v2074 = vor.u32 %v2070, %v2073
      %v2075 = vrot.slane %v2074, 4
      %v2077 = vshll.u32 %v2033, 16
      %v2079 = vrot.slane %v2077, 5
      %v2080 = vsel %vm993, %v2075, %v2079
      %v2082 = vshrl.u32 %v2018, 16
      %v2084 = vrot.slane %v2082, 4
      %v2085 = vshll.u32 %v2018, 16
      %v2087 = vrot.slane %v2085, 5
      %v2088 = vor.u32 %v2084, %v2087
      %v2089 = vrot.slane %v2088, 4
      %v2091 = vshll.u32 %v2034, 16
      %v2093 = vrot.slane %v2091, 5
      %v2094 = vsel %vm993, %v2089, %v2093
      %v2096 = vshrl.u32 %v2019, 16
      %v2098 = vrot.slane %v2096, 4
      %v2099 = vshll.u32 %v2019, 16
      %v2101 = vrot.slane %v2099, 5
      %v2102 = vor.u32 %v2098, %v2101
      %v2103 = vrot.slane %v2102, 4
      %v2105 = vshll.u32 %v2035, 16
      %v2107 = vrot.slane %v2105, 5
      %v2108 = vsel %vm993, %v2103, %v2107
      %v2110 = vshrl.u32 %v2020, 16
      %v2112 = vrot.slane %v2110, 4
      %v2113 = vshll.u32 %v2020, 16
      %v2115 = vrot.slane %v2113, 5
      %v2116 = vor.u32 %v2112, %v2115
      %v2117 = vrot.slane %v2116, 4
      %v2119 = vshll.u32 %v2036, 16
      %v2121 = vrot.slane %v2119, 5
      %v2122 = vsel %vm993, %v2117, %v2121
      %v2124 = vshrl.u32 %v2021, 16
      %v2126 = vrot.slane %v2124, 4
      %v2127 = vshll.u32 %v2021, 16
      %v2129 = vrot.slane %v2127, 5
      %v2130 = vor.u32 %v2126, %v2129
      %v2131 = vrot.slane %v2130, 4
      %v2133 = vshll.u32 %v2037, 16
      %v2135 = vrot.slane %v2133, 5
      %v2136 = vsel %vm993, %v2131, %v2135
      %v2138 = vshrl.u32 %v2022, 16
      %v2140 = vrot.slane %v2138, 4
      %v2141 = vshll.u32 %v2022, 16
      %v2143 = vrot.slane %v2141, 5
      %v2144 = vor.u32 %v2140, %v2143
      %v2145 = vrot.slane %v2144, 4
      %v2147 = vshll.u32 %v2038, 16
      %v2149 = vrot.slane %v2147, 5
      %v2150 = vsel %vm993, %v2145, %v2149
      %v2159 = vunpack.c.l.b16 %v2015
      %v2160 = vunpack.c.l.b16 %v2016
      %v2161 = vunpack.c.l.b16 %v2017
      %v2162 = vunpack.c.l.b16 %v2018
      %v2163 = vunpack.c.l.b16 %v2019
      %v2164 = vunpack.c.l.b16 %v2020
      %v2165 = vunpack.c.l.b16 %v2021
      %v2166 = vunpack.c.l.b16 %v2022
      %v2167 = vpack.c.b16 %v2160, %v2159
      %v2168 = vpack.c.b16 %v2162, %v2161
      %v2169 = vpack.c.b16 %v2164, %v2163
      %v2170 = vpack.c.b16 %v2166, %v2165
      %v2183 = vunpack.c.l.b16 %v2023
      %v2184 = vunpack.c.l.b16 %v2024
      %v2185 = vunpack.c.l.b16 %v2025
      %v2186 = vunpack.c.l.b16 %v2026
      %v2187 = vunpack.c.l.b16 %v2027
      %v2188 = vunpack.c.l.b16 %v2028
      %v2189 = vunpack.c.l.b16 %v2029
      %v2190 = vunpack.c.l.b16 %v2030
      %v2191 = vpack.c.b16 %v2184, %v2183
      %v2192 = vpack.c.b16 %v2186, %v2185
      %v2193 = vpack.c.b16 %v2188, %v2187
      %v2194 = vpack.c.b16 %v2190, %v2189
      %v2199 = vunpack.c.l.b16 %v2052
      %v2200 = vunpack.c.l.b16 %v2066
      %v2201 = vunpack.c.l.b16 %v2080
      %v2202 = vunpack.c.l.b16 %v2094
      %v2203 = vunpack.c.l.b16 %v2108
      %v2204 = vunpack.c.l.b16 %v2122
      %v2205 = vunpack.c.l.b16 %v2136
      %v2206 = vunpack.c.l.b16 %v2150
      %v2207 = vpack.c.b16 %v2200, %v2199
      %v2208 = vpack.c.b16 %v2202, %v2201
      %v2209 = vpack.c.b16 %v2204, %v2203
      %v2210 = vpack.c.b16 %v2206, %v2205
      %s2215 = scalar_lea.vmem %s3, 384
      %v2216 = vld [vmem:[%s2215] sm:$0xf]
      %v2217 = vld [vmem:[%s2215 + $0x4] sm:$0xf]
      %v2218 = vld [vmem:[%s2215 + $0x8] sm:$0xf]
      %v2219 = vld [vmem:[%s2215 + $0xc] sm:$0xf]
      %v2220 = vld [vmem:[%s2215 + $0x10] sm:$0xf]
      %v2221 = vld [vmem:[%s2215 + $0x14] sm:$0xf]
      %v2222 = vld [vmem:[%s2215 + $0x18] sm:$0xf]
      %v2223 = vld [vmem:[%s2215 + $0x1c] sm:$0xf]
      %v2224 = vld [vmem:[%s2215 + $0x20] sm:$0xf]
      %v2225 = vld [vmem:[%s2215 + $0x24] sm:$0xf]
      %v2226 = vld [vmem:[%s2215 + $0x28] sm:$0xf]
      %v2227 = vld [vmem:[%s2215 + $0x2c] sm:$0xf]
      %v2228 = vld [vmem:[%s2215 + $0x30] sm:$0xf]
      %v2229 = vld [vmem:[%s2215 + $0x34] sm:$0xf]
      %v2230 = vld [vmem:[%s2215 + $0x38] sm:$0xf]
      %v2231 = vld [vmem:[%s2215 + $0x3c] sm:$0xf]
      %v2232 = vld [vmem:[%s2215 + $0x40] sm:$0xf]
      %v2233 = vld [vmem:[%s2215 + $0x44] sm:$0xf]
      %v2234 = vld [vmem:[%s2215 + $0x48] sm:$0xf]
      %v2235 = vld [vmem:[%s2215 + $0x4c] sm:$0xf]
      %v2236 = vld [vmem:[%s2215 + $0x50] sm:$0xf]
      %v2237 = vld [vmem:[%s2215 + $0x54] sm:$0xf]
      %v2238 = vld [vmem:[%s2215 + $0x58] sm:$0xf]
      %v2239 = vld [vmem:[%s2215 + $0x5c] sm:$0xf]
      %v2240 = vld [vmem:[%s2215 + $0x60] sm:$0xf]
      %v2241 = vld [vmem:[%s2215 + $0x64] sm:$0xf]
      %v2242 = vld [vmem:[%s2215 + $0x68] sm:$0xf]
      %v2243 = vld [vmem:[%s2215 + $0x6c] sm:$0xf]
      %v2244 = vld [vmem:[%s2215 + $0x70] sm:$0xf]
      %v2245 = vld [vmem:[%s2215 + $0x74] sm:$0xf]
      %v2246 = vld [vmem:[%s2215 + $0x78] sm:$0xf]
      %v2247 = vld [vmem:[%s2215 + $0x7c] sm:$0xf]
      %v2248 = vld [vmem:[%s2215 + $0x80] sm:$0xf]
      %v2249 = vld [vmem:[%s2215 + $0x84] sm:$0xf]
      %v2250 = vld [vmem:[%s2215 + $0x88] sm:$0xf]
      %v2251 = vld [vmem:[%s2215 + $0x8c] sm:$0xf]
      %v2252 = vld [vmem:[%s2215 + $0x90] sm:$0xf]
      %v2253 = vld [vmem:[%s2215 + $0x94] sm:$0xf]
      %v2254 = vld [vmem:[%s2215 + $0x98] sm:$0xf]
      %v2255 = vld [vmem:[%s2215 + $0x9c] sm:$0xf]
      %v2256 = vld [vmem:[%s2215 + $0xa0] sm:$0xf]
      %v2257 = vld [vmem:[%s2215 + $0xa4] sm:$0xf]
      %v2258 = vld [vmem:[%s2215 + $0xa8] sm:$0xf]
      %v2259 = vld [vmem:[%s2215 + $0xac] sm:$0xf]
      %v2260 = vld [vmem:[%s2215 + $0xb0] sm:$0xf]
      %v2261 = vld [vmem:[%s2215 + $0xb4] sm:$0xf]
      %v2262 = vld [vmem:[%s2215 + $0xb8] sm:$0xf]
      %v2263 = vld [vmem:[%s2215 + $0xbc] sm:$0xf]
      %v2312 = vunpack.c.l.b16 %v2216
      %v2313 = vunpack.c.l.b16 %v2217
      %v2314 = vunpack.c.l.b16 %v2218
      %v2315 = vunpack.c.l.b16 %v2219
      %v2316 = vunpack.c.l.b16 %v2220
      %v2317 = vunpack.c.l.b16 %v2221
      %v2318 = vunpack.c.l.b16 %v2222
      %v2319 = vunpack.c.l.b16 %v2223
      %v2320 = vunpack.c.l.b16 %v2224
      %v2321 = vunpack.c.l.b16 %v2225
      %v2322 = vunpack.c.l.b16 %v2226
      %v2323 = vunpack.c.l.b16 %v2227
      %v2324 = vunpack.c.l.b16 %v2228
      %v2325 = vunpack.c.l.b16 %v2229
      %v2326 = vunpack.c.l.b16 %v2230
      %v2327 = vunpack.c.l.b16 %v2231
      %v2328 = vunpack.c.l.b16 %v2232
      %v2329 = vunpack.c.l.b16 %v2233
      %v2330 = vunpack.c.l.b16 %v2234
      %v2331 = vunpack.c.l.b16 %v2235
      %v2332 = vunpack.c.l.b16 %v2236
      %v2333 = vunpack.c.l.b16 %v2237
      %v2334 = vunpack.c.l.b16 %v2238
      %v2335 = vunpack.c.l.b16 %v2239
      %v2336 = vunpack.c.l.b16 %v2240
      %v2337 = vunpack.c.l.b16 %v2241
      %v2338 = vunpack.c.l.b16 %v2242
      %v2339 = vunpack.c.l.b16 %v2243
      %v2340 = vunpack.c.l.b16 %v2244
      %v2341 = vunpack.c.l.b16 %v2245
      %v2342 = vunpack.c.l.b16 %v2246
      %v2343 = vunpack.c.l.b16 %v2247
      %v2344 = vunpack.c.l.b16 %v2248
      %v2345 = vunpack.c.l.b16 %v2249
      %v2346 = vunpack.c.l.b16 %v2250
      %v2347 = vunpack.c.l.b16 %v2251
      %v2348 = vunpack.c.l.b16 %v2252
      %v2349 = vunpack.c.l.b16 %v2253
      %v2350 = vunpack.c.l.b16 %v2254
      %v2351 = vunpack.c.l.b16 %v2255
      %v2352 = vunpack.c.l.b16 %v2256
      %v2353 = vunpack.c.l.b16 %v2257
      %v2354 = vunpack.c.l.b16 %v2258
      %v2355 = vunpack.c.l.b16 %v2259
      %v2356 = vunpack.c.l.b16 %v2260
      %v2357 = vunpack.c.l.b16 %v2261
      %v2358 = vunpack.c.l.b16 %v2262
      %v2359 = vunpack.c.l.b16 %v2263
      %v2360 = vpack.c.b16 %v2313, %v2312
      %v2361 = vpack.c.b16 %v2315, %v2314
      %v2362 = vpack.c.b16 %v2317, %v2316
      %v2363 = vpack.c.b16 %v2319, %v2318
      %v2364 = vpack.c.b16 %v2321, %v2320
      %v2365 = vpack.c.b16 %v2323, %v2322
      %v2366 = vpack.c.b16 %v2325, %v2324
      %v2367 = vpack.c.b16 %v2327, %v2326
      %v2368 = vpack.c.b16 %v2329, %v2328
      %v2369 = vpack.c.b16 %v2331, %v2330
      %v2370 = vpack.c.b16 %v2333, %v2332
      %v2371 = vpack.c.b16 %v2335, %v2334
      %v2372 = vpack.c.b16 %v2337, %v2336
      %v2373 = vpack.c.b16 %v2339, %v2338
      %v2374 = vpack.c.b16 %v2341, %v2340
      %v2375 = vpack.c.b16 %v2343, %v2342
      %v2376 = vpack.c.b16 %v2345, %v2344
      %v2377 = vpack.c.b16 %v2347, %v2346
      %v2378 = vpack.c.b16 %v2349, %v2348
      %v2379 = vpack.c.b16 %v2351, %v2350
      %v2380 = vpack.c.b16 %v2353, %v2352
      %v2381 = vpack.c.b16 %v2355, %v2354
      %v2382 = vpack.c.b16 %v2357, %v2356
      %v2383 = vpack.c.b16 %v2359, %v2358
      %2408 = vmatprep.subr.bf16.mxu0 0
      %2409 = vmatpush1.bf16.msra.mxu0 %v2367
      %2410 = vmatprep.subr.bf16.mxu0 0
      %2411 = vmatpush1.bf16.msra.mxu0 %v2366
      %2412 = vmatprep.subr.bf16.mxu0 0
      %2413 = vmatpush1.bf16.msra.mxu0 %v2365
      %2414 = vmatprep.subr.bf16.mxu0 0
      %2415 = vmatpush1.bf16.msra.mxu0 %v2364
      %2416 = vmatprep.subr.bf16.mxu0 0
      %2417 = vmatpush1.bf16.msra.mxu0 %v2363
      %2418 = vmatprep.subr.bf16.mxu0 0
      %2419 = vmatpush1.bf16.msra.mxu0 %v2362
      %2420 = vmatprep.subr.bf16.mxu0 0
      %2421 = vmatpush1.bf16.msra.mxu0 %v2361
      %2422 = vmatprep.subr.bf16.mxu0 0
      %2423 = vmatpush1.bf16.msra.mxu0 %v2360
      %2424 = vmatprep.subr.bf16.mxu0 0
      %2425 = vmatpush2.bf16.msra.mxu0 %v2375
      %2426 = vmatprep.subr.bf16.mxu0 0
      %2427 = vmatpush2.bf16.msra.mxu0 %v2374
      %2428 = vmatprep.subr.bf16.mxu0 0
      %2429 = vmatpush2.bf16.msra.mxu0 %v2373
      %2430 = vmatprep.subr.bf16.mxu0 0
      %2431 = vmatpush2.bf16.msra.mxu0 %v2372
      %2432 = vmatprep.subr.bf16.mxu0 0
      %2433 = vmatpush2.bf16.msra.mxu0 %v2371
      %2434 = vmatprep.subr.bf16.mxu0 0
      %2435 = vmatpush2.bf16.msra.mxu0 %v2370
      %2436 = vmatprep.subr.bf16.mxu0 0
      %2437 = vmatpush2.bf16.msra.mxu0 %v2369
      %2438 = vmatprep.subr.bf16.mxu0 0
      %2439 = vmatpush2.bf16.msra.mxu0 %v2368
      %2440 = vmatprep.mubr.bf16.mxu0 %v2191
      %2441 = vmatmul.mubr.bf16.gmra.mxu0 %v2167
      %v2442 = vpop.f32.mrf.mxu0
      %v2443 = vadd.f32 0.0, %v2442
      %v2444 = vpop.f32.mrf.mxu0
      %v2445 = vpop.f32.mrf.mxu0
      %v2446 = vadd.f32 0.0, %v2445
      %v2447 = vpop.f32.mrf.mxu0
      %2448 = vmatprep.mubr.bf16.mxu0 %v2192
      %2449 = vmatmul.mubr.bf16.gmra.mxu0 %v2168
      %v2450 = vpop.f32.mrf.mxu0
      %v2451 = vadd.f32 0.0, %v2450
      %v2452 = vpop.f32.mrf.mxu0
      %v2453 = vpop.f32.mrf.mxu0
      %v2454 = vadd.f32 0.0, %v2453
      %v2455 = vpop.f32.mrf.mxu0
      %2456 = vmatprep.mubr.bf16.mxu0 %v2193
      %2457 = vmatmul.mubr.bf16.gmra.mxu0 %v2169
      %v2458 = vpop.f32.mrf.mxu0
      %v2459 = vadd.f32 0.0, %v2458
      %v2460 = vpop.f32.mrf.mxu0
      %v2461 = vpop.f32.mrf.mxu0
      %v2462 = vadd.f32 0.0, %v2461
      %v2463 = vpop.f32.mrf.mxu0
      %2464 = vmatprep.mubr.bf16.mxu0 %v2194
      %2465 = vmatmul.mubr.bf16.gmra.mxu0 %v2170
      %v2466 = vpop.f32.mrf.mxu0
      %v2467 = vadd.f32 0.0, %v2466
      %v2468 = vpop.f32.mrf.mxu0
      %v2469 = vpop.f32.mrf.mxu0
      %v2470 = vadd.f32 0.0, %v2469
      %v2471 = vpop.f32.mrf.mxu0
      %2472 = vdwg.mxu0
      %2473 = vmatprep.subr.bf16.mxu0 0
      %2474 = vmatpush1.bf16.msra.mxu0 %v2383
      %2475 = vmatprep.subr.bf16.mxu0 0
      %2476 = vmatpush1.bf16.msra.mxu0 %v2382
      %2477 = vmatprep.subr.bf16.mxu0 0
      %2478 = vmatpush1.bf16.msra.mxu0 %v2381
      %2479 = vmatprep.subr.bf16.mxu0 0
      %2480 = vmatpush1.bf16.msra.mxu0 %v2380
      %2481 = vmatprep.subr.bf16.mxu0 0
      %2482 = vmatpush1.bf16.msra.mxu0 %v2379
      %2483 = vmatprep.subr.bf16.mxu0 0
      %2484 = vmatpush1.bf16.msra.mxu0 %v2378
      %2485 = vmatprep.subr.bf16.mxu0 0
      %2486 = vmatpush1.bf16.msra.mxu0 %v2377
      %2487 = vmatprep.subr.bf16.mxu0 0
      %2488 = vmatpush1.bf16.msra.mxu0 %v2376
      %2489 = vmatprep.subr.bf16.mxu0 0
      %2490 = vmatpush2.bf16.msra.mxu0 0
      %2491 = vmatprep.subr.bf16.mxu0 0
      %2492 = vmatpush2.bf16.msra.mxu0 0
      %2493 = vmatprep.subr.bf16.mxu0 0
      %2494 = vmatpush2.bf16.msra.mxu0 0
      %2495 = vmatprep.subr.bf16.mxu0 0
      %2496 = vmatpush2.bf16.msra.mxu0 0
      %2497 = vmatprep.subr.bf16.mxu0 0
      %2498 = vmatpush2.bf16.msra.mxu0 0
      %2499 = vmatprep.subr.bf16.mxu0 0
      %2500 = vmatpush2.bf16.msra.mxu0 0
      %2501 = vmatprep.subr.bf16.mxu0 0
      %2502 = vmatpush2.bf16.msra.mxu0 0
      %2503 = vmatprep.subr.bf16.mxu0 0
      %2504 = vmatpush2.bf16.msra.mxu0 0
      %2505 = vmatprep.mubr.bf16.mxu0 0
      %2506 = vmatmul.mubr.bf16.gmra.mxu0 %v2207
      %v2507 = vpop.f32.mrf.mxu0
      %v2508 = vadd.f32 %v2443, %v2507
      %v2509 = vpop.f32.mrf.mxu0
      %v2510 = vpop.f32.mrf.mxu0
      %v2511 = vadd.f32 %v2446, %v2510
      %v2512 = vpop.f32.mrf.mxu0
      %2513 = vmatprep.mubr.bf16.mxu0 0
      %2514 = vmatmul.mubr.bf16.gmra.mxu0 %v2208
      %v2515 = vpop.f32.mrf.mxu0
      %v2516 = vadd.f32 %v2451, %v2515
      %v2517 = vpop.f32.mrf.mxu0
      %v2518 = vpop.f32.mrf.mxu0
      %v2519 = vadd.f32 %v2454, %v2518
      %v2520 = vpop.f32.mrf.mxu0
      %2521 = vmatprep.mubr.bf16.mxu0 0
      %2522 = vmatmul.mubr.bf16.gmra.mxu0 %v2209
      %v2523 = vpop.f32.mrf.mxu0
      %v2524 = vadd.f32 %v2459, %v2523
      %v2525 = vpop.f32.mrf.mxu0
      %v2526 = vpop.f32.mrf.mxu0
      %v2527 = vadd.f32 %v2462, %v2526
      %v2528 = vpop.f32.mrf.mxu0
      %2529 = vmatprep.mubr.bf16.mxu0 0
      %2530 = vmatmul.mubr.bf16.gmra.mxu0 %v2210
      %v2531 = vpop.f32.mrf.mxu0
      %v2532 = vadd.f32 %v2467, %v2531
      %v2533 = vpop.f32.mrf.mxu0
      %v2534 = vpop.f32.mrf.mxu0
      %v2535 = vadd.f32 %v2470, %v2534
      %v2536 = vpop.f32.mrf.mxu0
      %2537 = vdwg.mxu0
      %v2538 = vadd.f32 %v1985, %v2508
      %v2539 = vadd.f32 %v1988, %v2511
      %v2540 = vadd.f32 %v1993, %v2516
      %v2541 = vadd.f32 %v1996, %v2519
      %v2542 = vadd.f32 %v2001, %v2524
      %v2543 = vadd.f32 %v2004, %v2527
      %v2544 = vadd.f32 %v2009, %v2532
      %v2545 = vadd.f32 %v2012, %v2535
      %v2546 = vpack.c.bf16 %v2539, %v2538
      %v2547 = vpack.c.bf16 %v2541, %v2540
      %v2548 = vpack.c.bf16 %v2543, %v2542
      %v2549 = vpack.c.bf16 %v2545, %v2544
      %v2554 = vunpack.c.l.b16 %v2546
      %v2555 = vunpack.c.h.b16 %v2546
      %v2556 = vunpack.c.l.b16 %v2547
      %v2557 = vunpack.c.h.b16 %v2547
      %v2558 = vunpack.c.l.b16 %v2548
      %v2559 = vunpack.c.h.b16 %v2548
      %v2560 = vunpack.c.l.b16 %v2549
      %v2561 = vunpack.c.h.b16 %v2549
      %v2562 = vpack.c.b16 %v2554, %v2554
      %v2563 = vpack.c.b16 %v2555, %v2555
      %v2564 = vpack.c.b16 %v2556, %v2556
      %v2565 = vpack.c.b16 %v2557, %v2557
      %v2566 = vpack.c.b16 %v2558, %v2558
      %v2567 = vpack.c.b16 %v2559, %v2559
      %v2568 = vpack.c.b16 %v2560, %v2560
      %v2569 = vpack.c.b16 %v2561, %v2561
      %2578 = vst [vmem:[%s231] sm:$0xf] %v2562
      %2579 = vst [vmem:[%s231 + $0x4] sm:$0xf] %v2563
      %2580 = vst [vmem:[%s231 + $0x8] sm:$0xf] %v2564
      %2581 = vst [vmem:[%s231 + $0xc] sm:$0xf] %v2565
      %2582 = vst [vmem:[%s231 + $0x10] sm:$0xf] %v2566
      %2583 = vst [vmem:[%s231 + $0x14] sm:$0xf] %v2567
      %2584 = vst [vmem:[%s231 + $0x18] sm:$0xf] %v2568
      %2585 = vst [vmem:[%s231 + $0x1c] sm:$0xf] %v2569
      %v2586 = vadd.f32 %v2538, %v2539
      %v2587 = vadd.f32 %v2586, %v2540
      %v2588 = vadd.f32 %v2587, %v2541
      %v2589 = vadd.f32 %v2588, %v2542
      %v2590 = vadd.f32 %v2589, %v2543
      %v2591 = vadd.f32 %v2590, %v2544
      %v2592 = vadd.f32 %v2591, %v2545
      %v2593 = vrot.slane %v2592, 4
      %v2594 = vadd.f32 %v2592, %v2593
      %v2595 = vrot.slane %v2594, 2
      %v2596 = vadd.f32 %v2594, %v2595
      %v2597 = vrot.slane %v2596, 1
      %v2598 = vadd.f32 %v2596, %v2597
      %v2599 = vrcp.pop 64.0
      %v2600 = vmul.f32 %v2598, %v2599
      %v2601 = vsub.f32 %v2538, %v2600
      %v2602 = vsub.f32 %v2539, %v2600
      %v2603 = vsub.f32 %v2540, %v2600
      %v2604 = vsub.f32 %v2541, %v2600
      %v2605 = vsub.f32 %v2542, %v2600
      %v2606 = vsub.f32 %v2543, %v2600
      %v2607 = vsub.f32 %v2544, %v2600
      %v2608 = vsub.f32 %v2545, %v2600
      %v2609 = vmul.f32 %v2601, %v2601
      %v2610 = vmul.f32 %v2602, %v2602
      %v2611 = vmul.f32 %v2603, %v2603
      %v2612 = vmul.f32 %v2604, %v2604
      %v2613 = vmul.f32 %v2605, %v2605
      %v2614 = vmul.f32 %v2606, %v2606
      %v2615 = vmul.f32 %v2607, %v2607
      %v2616 = vmul.f32 %v2608, %v2608
      %v2617 = vadd.f32 %v2609, %v2610
      %v2618 = vadd.f32 %v2617, %v2611
      %v2619 = vadd.f32 %v2618, %v2612
      %v2620 = vadd.f32 %v2619, %v2613
      %v2621 = vadd.f32 %v2620, %v2614
      %v2622 = vadd.f32 %v2621, %v2615
      %v2623 = vadd.f32 %v2622, %v2616
      %v2624 = vrot.slane %v2623, 4
      %v2625 = vadd.f32 %v2623, %v2624
      %v2626 = vrot.slane %v2625, 2
      %v2627 = vadd.f32 %v2625, %v2626
      %v2628 = vrot.slane %v2627, 1
      %v2629 = vadd.f32 %v2627, %v2628
      %2630 = vst [vmem:[%s235] sm:$0x1] %v2600
      %2631 = vst [vmem:[%s235 + $0x1] sm:$0x1] %v2629
      %p2632 = scmp.lt.s32.totalorder %s17, 1
      %s2633 = scalar_select %p2632, %s17, 1
      %s2634 = smul.addr %s2633, 8
      %s2635 = smul.addr %s2634, 4
      %s2636 = scalar_lea.vmem %s4, %s2635
      %p2637 = scmp.lt.s32.totalorder %s17, 1
      %s2638 = scalar_select %p2637, %s17, 1
      %s2639 = smul.addr %s2638, 2
      %s2640 = scalar_lea.vmem %s5, %s2639
      // Predicated region
      $region37: #{bottleneck_forward.5} parent=35 // pred_check
        %p2641 = pneg %p124
      $region38: #{bottleneck_forward.5} parent=35 // pred_check_branch
        %2643 = sbr.rel (%p2641) target = $region40
      $region39: #{bottleneck_forward.5} parent=35 // pred_region
        _
      $region40: #{bottleneck_forward.5} parent=35 // pred_fallthru
        _
      // Predicated region
      $region41: #{bottleneck_forward.5} parent=35 // pred_check
        %p2644 = pneg %p150
      $region42: #{bottleneck_forward.5} parent=35 // pred_check_branch
        %2646 = sbr.rel (%p2644) target = $region44
      $region43: #{bottleneck_forward.5} parent=35 // pred_region
        _
      $region44: #{bottleneck_forward.5} parent=35 // pred_fallthru
        _
    $region36: #{bottleneck_forward.5} parent=5 // pred_fallthru
      _
    %p2647 = scmp.le.s32.totalorder 2, %s12
    // Predicated region
    $region45: #{bottleneck_forward.5} parent=5 // pred_check
      %p2648 = pneg %p2647
    $region46: #{bottleneck_forward.5} parent=5 // pred_check_branch
      %2650 = sbr.rel (%p2648) target = $region48
    $region47: #{bottleneck_forward.5} parent=5 // pred_region
      %s2651 = ssub.s32 %s12, 2
      // Predicated region
      $region49: #{bottleneck_forward.5} parent=47 // pred_check
        %p2652 = pneg %p130
      $region50: #{bottleneck_forward.5} parent=47 // pred_check_branch
        %2654 = sbr.rel (%p2652) target = $region52
      $region51: #{bottleneck_forward.5} parent=47 // pred_region
        %p2655 = scmp.lt.s32.totalorder %s18, 1
        %s2656 = scalar_select %p2655, %s18, 1
        %s2657 = smul.addr %s2656, 8
        %s2658 = smul.addr %s2657, 4
        %s2659 = scalar_lea.vmem %s4, %s2658
      $region52: #{bottleneck_forward.5} parent=47 // pred_fallthru
        _
      // Predicated region
      $region53: #{bottleneck_forward.5} parent=47 // pred_check
        %p2660 = pneg %p156
      $region54: #{bottleneck_forward.5} parent=47 // pred_check_branch
        %2662 = sbr.rel (%p2660) target = $region56
      $region55: #{bottleneck_forward.5} parent=47 // pred_region
        %p2663 = scmp.lt.s32.totalorder %s18, 1
        %s2664 = scalar_select %p2663, %s18, 1
        %s2665 = smul.addr %s2664, 2
        %s2666 = scalar_lea.vmem %s5, %s2665
      $region56: #{bottleneck_forward.5} parent=47 // pred_fallthru
        _
    $region48: #{bottleneck_forward.5} parent=5 // pred_fallthru
      _
  $region6: #{bottleneck_forward.5} parent=0 // loop_footer
    %s16 = sadd.s32 1, %s12
  $region7: #{bottleneck_forward.5} parent=0 // loop_footer_branch
    %11 = sbr.rel target = $region3
  $region8: #{bottleneck_forward.5} parent=0 // loop_exit
    _

</llo_original>
